<compile_context>
chip_gen: v7x
topology: tpu7x:2x2x1
jax: 0.10.0
libtpu: 0.0.40
codegen_flags: <defaults>
</compile_context>

<pallas_src>
import math
import functools

import jax
import jax.numpy as jnp
from jax.experimental import pallas as pl
from jax.experimental.pallas import tpu as pltpu

# ----------------------------- model config (small) -----------------------------
VOCAB = 50
D_MODEL = 32
NHEAD = 4
NUM_LAYERS = 2
DIM_FF = 64
NUM_CLASSES = 2
SEQ = 8              # token sequence length (without cls token)
PAD_IDX = 0
LN_EPS = 1e-5
NEG_INF = -1e30      # additive key-padding / cross-batch mask bias (stands in for -inf)


# ----------------------------- in-kernel helpers --------------------------------
def _layernorm(x, g, b):
    mu = jnp.mean(x, axis=-1, keepdims=True)
    var = jnp.mean(jnp.square(x - mu), axis=-1, keepdims=True)
    return (x - mu) * jax.lax.rsqrt(var + LN_EPS) * g + b


# ----------------------------- fused transformer kernel -------------------------
def transformer_kernel(ids_smem_ref,                      # SMEM [B, L] int32 (scalar reads)
                       src_ref,                           # VMEM [B, L] int32 (mask lanes)
                       emb_ref,                           # [VOCAB, D]
                       cls_ref,                           # [1, D]
                       pe_ref,                            # [S, D]
                       ln1g_ref, ln1b_ref,                # [NL, 1, D]
                       wq_ref, wk_ref, wv_ref,            # [NL, D, D]  ([in, out])
                       bq_ref, bk_ref, bv_ref,            # [NL, 1, D]
                       wo_ref, bo_ref,                    # [NL, D, D], [NL, 1, D]
                       ln2g_ref, ln2b_ref,                # [NL, 1, D]
                       w1_ref, b1_ref,                    # [NL, D, FF], [NL, 1, FF]
                       w2_ref, b2_ref,                    # [NL, FF, D], [NL, 1, D]
                       ng_ref, nb_ref,                    # [1, D]
                       wcls_ref, bcls_ref,                # [D, C], [1, C]
                       out_ref,                           # [B, C]
                       *, nhead):
    B, L = src_ref.shape
    S, D = pe_ref.shape                                   # S = L + 1 (cls token)
    V = emb_ref.shape[0]
    NL = wq_ref.shape[0]
    T = B * S
    hd = D // nhead
    scale = 1.0 / math.sqrt(hd)

    # ---- embedding gather as one-hot @ table (single MXU push, no dynamic copies) ----
    vocab_iota = jax.lax.broadcasted_iota(jnp.int32, (1, V), 1)
    onehot_rows = []
    for b in range(B):
        for t in range(L):
            tok = ids_smem_ref[b, t]                       # scalar from SMEM
            onehot_rows.append(jnp.where(vocab_iota == tok, 1.0, 0.0))
    onehot = jnp.concatenate(onehot_rows, axis=0)          # [B*L, V] float32
    tok_emb = jnp.dot(onehot, emb_ref[...],
                      preferred_element_type=jnp.float32)  # [B*L, D]

    # ---- [CLS ; tokens] per batch + sinusoidal PE (dropout = identity in eval) ----
    parts = []
    for b in range(B):
        parts.append(cls_ref[...])                         # [1, D]
        parts.append(tok_emb[b * L:(b + 1) * L, :])        # [L, D]
    pe = pe_ref[...]
    x = jnp.concatenate(parts, axis=0) + jnp.concatenate([pe] * B, axis=0)   # [T, D]

    # ---- additive attention bias: block-diagonal per batch + key padding; CLS never masked ----
    key_bias = jnp.where(src_ref[...] == PAD_IDX, NEG_INF, 0.0).astype(jnp.float32)   # [B, L]
    key_bias = jnp.concatenate([jnp.zeros((B, 1), jnp.float32), key_bias], axis=1)    # [B, S]
    key_flat = jnp.concatenate([key_bias[b:b + 1, :] for b in range(B)], axis=1)      # [1, T]
    row_blocks = []
    for b in range(B):
        blk = jnp.concatenate(
            [jnp.zeros((1, S), jnp.float32) if bb == b
             else jnp.full((1, S), NEG_INF, jnp.float32) for bb in range(B)], axis=1)  # [1, T]
        row_blocks.append(jnp.broadcast_to(blk, (S, T)))
    bias = jnp.concatenate(row_blocks, axis=0) + key_flat                              # [T, T]

    # ---- pre-LN encoder layers (static unroll, weights VMEM-resident) ----
    for l in range(NL):
        # self-attention block
        xn = _layernorm(x, ln1g_ref[l], ln1b_ref[l])
        q = (jnp.dot(xn, wq_ref[l], preferred_element_type=jnp.float32) + bq_ref[l]) * scale
        k = jnp.dot(xn, wk_ref[l], preferred_element_type=jnp.float32) + bk_ref[l]
        v = jnp.dot(xn, wv_ref[l], preferred_element_type=jnp.float32) + bv_ref[l]

        heads = []
        for h in range(nhead):                              # static unroll over heads
            lo, hi = h * hd, (h + 1) * hd
            scores = jax.lax.dot_general(
                q[:, lo:hi], k[:, lo:hi], (((1,), (1,)), ((), ())),
                preferred_element_type=jnp.float32) + bias                 # [T, T]
            p = jax.nn.softmax(scores, axis=-1)
            heads.append(jnp.dot(p, v[:, lo:hi],
                                 preferred_element_type=jnp.float32))      # [T, hd]
        o = jnp.concatenate(heads, axis=1)                                  # [T, D]
        # single full-width output projection (one K=D MXU push)
        x = x + jnp.dot(o, wo_ref[l], preferred_element_type=jnp.float32) + bo_ref[l]

        # feed-forward block
        xn2 = _layernorm(x, ln2g_ref[l], ln2b_ref[l])
        h1 = jnp.dot(xn2, w1_ref[l], preferred_element_type=jnp.float32) + b1_ref[l]
        # TODO(synk): PyTorch F.gelu default is the exact erf-based GELU; tanh approximation used here.
        h1 = jax.nn.gelu(h1, approximate=True)
        x = x + jnp.dot(h1, w2_ref[l], preferred_element_type=jnp.float32) + b2_ref[l]

    # ---- final LN + classifier on the CLS rows ----
    cls_rows = jnp.concatenate([x[b * S:b * S + 1, :] for b in range(B)], axis=0)      # [B, D]
    xn = _layernorm(cls_rows, ng_ref[...], nb_ref[...])
    out_ref[...] = jnp.dot(xn, wcls_ref[...],
                           preferred_element_type=jnp.float32) + bcls_ref[...]


# ----------------------------- wrapper ------------------------------------------
def transformer_forward(src, params):
    """src: [B, L] int32 token ids -> logits [B, NUM_CLASSES]."""
    B, L = src.shape
    C = params["wcls_t"].shape[1]

    smem_spec = pl.BlockSpec(memory_space=pltpu.MemorySpace.SMEM)
    n_vmem_inputs = 24                                     # src (vector copy) + 23 param arrays
    in_specs = [smem_spec] + [pl.BlockSpec(memory_space=pltpu.MemorySpace.VMEM)
                              for _ in range(n_vmem_inputs)]

    return pl.pallas_call(
        functools.partial(transformer_kernel, nhead=NHEAD),
        out_shape=jax.ShapeDtypeStruct((B, C), jnp.float32),
        in_specs=in_specs,
        out_specs=pl.BlockSpec(memory_space=pltpu.MemorySpace.VMEM),
    )(src,                                                  # token ids -> SMEM (scalar reads)
      src,                                                  # token ids -> VMEM (mask lanes)
      params["embedding"], params["cls_token"], params["pe"],
      params["ln1_g"], params["ln1_b"],
      params["wq_t"], params["wk_t"], params["wv_t"],
      params["bq"], params["bk"], params["bv"],
      params["wo_t"], params["bo"],
      params["ln2_g"], params["ln2_b"],
      params["w1_t"], params["b1"],
      params["w2_t"], params["b2"],
      params["norm_g"], params["norm_b"],
      params["wcls_t"], params["bcls"])


# ----------------------------- params -------------------------------------------
def make_positional_encoding(max_len, d_model):
    position = jnp.arange(max_len, dtype=jnp.float32)[:, None]
    div_term = jnp.exp(jnp.arange(0, d_model, 2, dtype=jnp.float32) *
                       (-math.log(10000.0) / d_model))
    pe = jnp.zeros((max_len, d_model), jnp.float32)
    pe = pe.at[:, 0::2].set(jnp.sin(position * div_term))
    pe = pe.at[:, 1::2].set(jnp.cos(position * div_term))
    return pe


def init_params(key):
    keys = iter(jax.random.split(key, 3 + 6 * NUM_LAYERS))
    p = {}
    emb = 0.02 * jax.random.normal(next(keys), (VOCAB, D_MODEL), jnp.float32)
    p["embedding"] = emb.at[PAD_IDX].set(0.0)               # nn.Embedding(padding_idx=...)
    p["cls_token"] = jax.random.normal(next(keys), (1, D_MODEL), jnp.float32)
    p["pe"] = make_positional_encoding(SEQ + 1, D_MODEL)

    wq, wk, wv, wo, w1, w2 = [], [], [], [], [], []
    for _ in range(NUM_LAYERS):
        wq.append(0.02 * jax.random.normal(next(keys), (D_MODEL, D_MODEL), jnp.float32))
        wk.append(0.02 * jax.random.normal(next(keys), (D_MODEL, D_MODEL), jnp.float32))
        wv.append(0.02 * jax.random.normal(next(keys), (D_MODEL, D_MODEL), jnp.float32))
        wo.append(0.02 * jax.random.normal(next(keys), (D_MODEL, D_MODEL), jnp.float32))
        w1.append(0.02 * jax.random.normal(next(keys), (DIM_FF, D_MODEL), jnp.float32))
        w2.append(0.02 * jax.random.normal(next(keys), (D_MODEL, DIM_FF), jnp.float32))

    # pre-transposed to [in, out] and stacked along the layer axis
    p["wq_t"] = jnp.stack([w.T for w in wq], axis=0)        # [NL, D, D]
    p["wk_t"] = jnp.stack([w.T for w in wk], axis=0)
    p["wv_t"] = jnp.stack([w.T for w in wv], axis=0)
    p["wo_t"] = jnp.stack([w.T for w in wo], axis=0)
    p["w1_t"] = jnp.stack([w.T for w in w1], axis=0)        # [NL, D, FF]
    p["w2_t"] = jnp.stack([w.T for w in w2], axis=0)        # [NL, FF, D]

    zeros_d = jnp.zeros((NUM_LAYERS, 1, D_MODEL), jnp.float32)
    p["bq"] = zeros_d
    p["bk"] = zeros_d
    p["bv"] = zeros_d
    p["bo"] = zeros_d
    p["b2"] = zeros_d
    p["b1"] = jnp.zeros((NUM_LAYERS, 1, DIM_FF), jnp.float32)
    p["ln1_g"] = jnp.ones((NUM_LAYERS, 1, D_MODEL), jnp.float32)
    p["ln1_b"] = jnp.zeros((NUM_LAYERS, 1, D_MODEL), jnp.float32)
    p["ln2_g"] = jnp.ones((NUM_LAYERS, 1, D_MODEL), jnp.float32)
    p["ln2_b"] = jnp.zeros((NUM_LAYERS, 1, D_MODEL), jnp.float32)

    p["norm_g"] = jnp.ones((1, D_MODEL), jnp.float32)
    p["norm_b"] = jnp.zeros((1, D_MODEL), jnp.float32)
    wcls = 0.02 * jax.random.normal(next(keys), (NUM_CLASSES, D_MODEL), jnp.float32)
    p["wcls_t"] = wcls.T
    p["bcls"] = jnp.zeros((1, NUM_CLASSES), jnp.float32)
    return p


# ----------------------------- main ----------------------------------------------
if __name__ == "__main__":
    key = jax.random.PRNGKey(0)
    pkey, dkey = jax.random.split(key)
    params = init_params(pkey)

    src = jax.random.randint(dkey, (2, SEQ), 0, VOCAB, dtype=jnp.int32)
    src = src.at[0, -2:].set(PAD_IDX)      # exercise the key padding mask

    logits = transformer_forward(src, params)
    jax.block_until_ready(logits)
    assert logits.shape == (2, NUM_CLASSES)
    assert bool(jnp.all(jnp.isfinite(logits)))
    print("KERNEL_OK")
</pallas_src>

<mosaic_0001>
module attributes {stable_mosaic.version = 11 : i64} {
  func.func @transformer_kernel(%arg0: memref<2x8xi32, #tpu.memory_space<smem>>, %arg1: memref<2x8xi32, #tpu.memory_space<vmem>>, %arg2: memref<50x32xf32, #tpu.memory_space<vmem>>, %arg3: memref<1x32xf32, #tpu.memory_space<vmem>>, %arg4: memref<9x32xf32, #tpu.memory_space<vmem>>, %arg5: memref<2x1x32xf32, #tpu.memory_space<vmem>>, %arg6: memref<2x1x32xf32, #tpu.memory_space<vmem>>, %arg7: memref<2x32x32xf32, #tpu.memory_space<vmem>>, %arg8: memref<2x32x32xf32, #tpu.memory_space<vmem>>, %arg9: memref<2x32x32xf32, #tpu.memory_space<vmem>>, %arg10: memref<2x1x32xf32, #tpu.memory_space<vmem>>, %arg11: memref<2x1x32xf32, #tpu.memory_space<vmem>>, %arg12: memref<2x1x32xf32, #tpu.memory_space<vmem>>, %arg13: memref<2x32x32xf32, #tpu.memory_space<vmem>>, %arg14: memref<2x1x32xf32, #tpu.memory_space<vmem>>, %arg15: memref<2x1x32xf32, #tpu.memory_space<vmem>>, %arg16: memref<2x1x32xf32, #tpu.memory_space<vmem>>, %arg17: memref<2x32x64xf32, #tpu.memory_space<vmem>>, %arg18: memref<2x1x64xf32, #tpu.memory_space<vmem>>, %arg19: memref<2x64x32xf32, #tpu.memory_space<vmem>>, %arg20: memref<2x1x32xf32, #tpu.memory_space<vmem>>, %arg21: memref<1x32xf32, #tpu.memory_space<vmem>>, %arg22: memref<1x32xf32, #tpu.memory_space<vmem>>, %arg23: memref<32x2xf32, #tpu.memory_space<vmem>>, %arg24: memref<1x2xf32, #tpu.memory_space<vmem>>, %arg25: memref<2x2xf32, #tpu.memory_space<vmem>>) attributes {dimension_semantics = [], scalar_prefetch = 0 : i64, scratch_operands = 0 : i64, tpu.core_type = #tpu.core_type<tc>} {
    %0 = tpu.iota {dimensions = array<i32: 1>} : vector<1x50xi32>
    %c0 = arith.constant 0 : index
    %c0_0 = arith.constant 0 : index
    %1 = memref.load %arg0[%c0, %c0_0] : memref<2x8xi32, #tpu.memory_space<smem>>
    %2 = vector.broadcast %1 : i32 to vector<1x50xi32>
    %3 = arith.cmpi eq, %0, %2 : vector<1x50xi32>
    %cst = arith.constant 1.000000e+00 : f32
    %cst_1 = arith.constant 0.000000e+00 : f32
    %4 = vector.broadcast %cst : f32 to vector<1x50xf32>
    %5 = vector.broadcast %cst_1 : f32 to vector<1x50xf32>
    %6 = arith.select %3, %4, %5 : vector<1x50xi1>, vector<1x50xf32>
    %c0_2 = arith.constant 0 : index
    %c1 = arith.constant 1 : index
    %7 = memref.load %arg0[%c0_2, %c1] : memref<2x8xi32, #tpu.memory_space<smem>>
    %8 = vector.broadcast %7 : i32 to vector<1x50xi32>
    %9 = arith.cmpi eq, %0, %8 : vector<1x50xi32>
    %cst_3 = arith.constant 1.000000e+00 : f32
    %cst_4 = arith.constant 0.000000e+00 : f32
    %10 = vector.broadcast %cst_3 : f32 to vector<1x50xf32>
    %11 = vector.broadcast %cst_4 : f32 to vector<1x50xf32>
    %12 = arith.select %9, %10, %11 : vector<1x50xi1>, vector<1x50xf32>
    %c0_5 = arith.constant 0 : index
    %c2 = arith.constant 2 : index
    %13 = memref.load %arg0[%c0_5, %c2] : memref<2x8xi32, #tpu.memory_space<smem>>
    %14 = vector.broadcast %13 : i32 to vector<1x50xi32>
    %15 = arith.cmpi eq, %0, %14 : vector<1x50xi32>
    %cst_6 = arith.constant 1.000000e+00 : f32
    %cst_7 = arith.constant 0.000000e+00 : f32
    %16 = vector.broadcast %cst_6 : f32 to vector<1x50xf32>
    %17 = vector.broadcast %cst_7 : f32 to vector<1x50xf32>
    %18 = arith.select %15, %16, %17 : vector<1x50xi1>, vector<1x50xf32>
    %c0_8 = arith.constant 0 : index
    %c3 = arith.constant 3 : index
    %19 = memref.load %arg0[%c0_8, %c3] : memref<2x8xi32, #tpu.memory_space<smem>>
    %20 = vector.broadcast %19 : i32 to vector<1x50xi32>
    %21 = arith.cmpi eq, %0, %20 : vector<1x50xi32>
    %cst_9 = arith.constant 1.000000e+00 : f32
    %cst_10 = arith.constant 0.000000e+00 : f32
    %22 = vector.broadcast %cst_9 : f32 to vector<1x50xf32>
    %23 = vector.broadcast %cst_10 : f32 to vector<1x50xf32>
    %24 = arith.select %21, %22, %23 : vector<1x50xi1>, vector<1x50xf32>
    %c0_11 = arith.constant 0 : index
    %c4 = arith.constant 4 : index
    %25 = memref.load %arg0[%c0_11, %c4] : memref<2x8xi32, #tpu.memory_space<smem>>
    %26 = vector.broadcast %25 : i32 to vector<1x50xi32>
    %27 = arith.cmpi eq, %0, %26 : vector<1x50xi32>
    %cst_12 = arith.constant 1.000000e+00 : f32
    %cst_13 = arith.constant 0.000000e+00 : f32
    %28 = vector.broadcast %cst_12 : f32 to vector<1x50xf32>
    %29 = vector.broadcast %cst_13 : f32 to vector<1x50xf32>
    %30 = arith.select %27, %28, %29 : vector<1x50xi1>, vector<1x50xf32>
    %c0_14 = arith.constant 0 : index
    %c5 = arith.constant 5 : index
    %31 = memref.load %arg0[%c0_14, %c5] : memref<2x8xi32, #tpu.memory_space<smem>>
    %32 = vector.broadcast %31 : i32 to vector<1x50xi32>
    %33 = arith.cmpi eq, %0, %32 : vector<1x50xi32>
    %cst_15 = arith.constant 1.000000e+00 : f32
    %cst_16 = arith.constant 0.000000e+00 : f32
    %34 = vector.broadcast %cst_15 : f32 to vector<1x50xf32>
    %35 = vector.broadcast %cst_16 : f32 to vector<1x50xf32>
    %36 = arith.select %33, %34, %35 : vector<1x50xi1>, vector<1x50xf32>
    %c0_17 = arith.constant 0 : index
    %c6 = arith.constant 6 : index
    %37 = memref.load %arg0[%c0_17, %c6] : memref<2x8xi32, #tpu.memory_space<smem>>
    %38 = vector.broadcast %37 : i32 to vector<1x50xi32>
    %39 = arith.cmpi eq, %0, %38 : vector<1x50xi32>
    %cst_18 = arith.constant 1.000000e+00 : f32
    %cst_19 = arith.constant 0.000000e+00 : f32
    %40 = vector.broadcast %cst_18 : f32 to vector<1x50xf32>
    %41 = vector.broadcast %cst_19 : f32 to vector<1x50xf32>
    %42 = arith.select %39, %40, %41 : vector<1x50xi1>, vector<1x50xf32>
    %c0_20 = arith.constant 0 : index
    %c7 = arith.constant 7 : index
    %43 = memref.load %arg0[%c0_20, %c7] : memref<2x8xi32, #tpu.memory_space<smem>>
    %44 = vector.broadcast %43 : i32 to vector<1x50xi32>
    %45 = arith.cmpi eq, %0, %44 : vector<1x50xi32>
    %cst_21 = arith.constant 1.000000e+00 : f32
    %cst_22 = arith.constant 0.000000e+00 : f32
    %46 = vector.broadcast %cst_21 : f32 to vector<1x50xf32>
    %47 = vector.broadcast %cst_22 : f32 to vector<1x50xf32>
    %48 = arith.select %45, %46, %47 : vector<1x50xi1>, vector<1x50xf32>
    %c1_23 = arith.constant 1 : index
    %c0_24 = arith.constant 0 : index
    %49 = memref.load %arg0[%c1_23, %c0_24] : memref<2x8xi32, #tpu.memory_space<smem>>
    %50 = vector.broadcast %49 : i32 to vector<1x50xi32>
    %51 = arith.cmpi eq, %0, %50 : vector<1x50xi32>
    %cst_25 = arith.constant 1.000000e+00 : f32
    %cst_26 = arith.constant 0.000000e+00 : f32
    %52 = vector.broadcast %cst_25 : f32 to vector<1x50xf32>
    %53 = vector.broadcast %cst_26 : f32 to vector<1x50xf32>
    %54 = arith.select %51, %52, %53 : vector<1x50xi1>, vector<1x50xf32>
    %c1_27 = arith.constant 1 : index
    %c1_28 = arith.constant 1 : index
    %55 = memref.load %arg0[%c1_27, %c1_28] : memref<2x8xi32, #tpu.memory_space<smem>>
    %56 = vector.broadcast %55 : i32 to vector<1x50xi32>
    %57 = arith.cmpi eq, %0, %56 : vector<1x50xi32>
    %cst_29 = arith.constant 1.000000e+00 : f32
    %cst_30 = arith.constant 0.000000e+00 : f32
    %58 = vector.broadcast %cst_29 : f32 to vector<1x50xf32>
    %59 = vector.broadcast %cst_30 : f32 to vector<1x50xf32>
    %60 = arith.select %57, %58, %59 : vector<1x50xi1>, vector<1x50xf32>
    %c1_31 = arith.constant 1 : index
    %c2_32 = arith.constant 2 : index
    %61 = memref.load %arg0[%c1_31, %c2_32] : memref<2x8xi32, #tpu.memory_space<smem>>
    %62 = vector.broadcast %61 : i32 to vector<1x50xi32>
    %63 = arith.cmpi eq, %0, %62 : vector<1x50xi32>
    %cst_33 = arith.constant 1.000000e+00 : f32
    %cst_34 = arith.constant 0.000000e+00 : f32
    %64 = vector.broadcast %cst_33 : f32 to vector<1x50xf32>
    %65 = vector.broadcast %cst_34 : f32 to vector<1x50xf32>
    %66 = arith.select %63, %64, %65 : vector<1x50xi1>, vector<1x50xf32>
    %c1_35 = arith.constant 1 : index
    %c3_36 = arith.constant 3 : index
    %67 = memref.load %arg0[%c1_35, %c3_36] : memref<2x8xi32, #tpu.memory_space<smem>>
    %68 = vector.broadcast %67 : i32 to vector<1x50xi32>
    %69 = arith.cmpi eq, %0, %68 : vector<1x50xi32>
    %cst_37 = arith.constant 1.000000e+00 : f32
    %cst_38 = arith.constant 0.000000e+00 : f32
    %70 = vector.broadcast %cst_37 : f32 to vector<1x50xf32>
    %71 = vector.broadcast %cst_38 : f32 to vector<1x50xf32>
    %72 = arith.select %69, %70, %71 : vector<1x50xi1>, vector<1x50xf32>
    %c1_39 = arith.constant 1 : index
    %c4_40 = arith.constant 4 : index
    %73 = memref.load %arg0[%c1_39, %c4_40] : memref<2x8xi32, #tpu.memory_space<smem>>
    %74 = vector.broadcast %73 : i32 to vector<1x50xi32>
    %75 = arith.cmpi eq, %0, %74 : vector<1x50xi32>
    %cst_41 = arith.constant 1.000000e+00 : f32
    %cst_42 = arith.constant 0.000000e+00 : f32
    %76 = vector.broadcast %cst_41 : f32 to vector<1x50xf32>
    %77 = vector.broadcast %cst_42 : f32 to vector<1x50xf32>
    %78 = arith.select %75, %76, %77 : vector<1x50xi1>, vector<1x50xf32>
    %c1_43 = arith.constant 1 : index
    %c5_44 = arith.constant 5 : index
    %79 = memref.load %arg0[%c1_43, %c5_44] : memref<2x8xi32, #tpu.memory_space<smem>>
    %80 = vector.broadcast %79 : i32 to vector<1x50xi32>
    %81 = arith.cmpi eq, %0, %80 : vector<1x50xi32>
    %cst_45 = arith.constant 1.000000e+00 : f32
    %cst_46 = arith.constant 0.000000e+00 : f32
    %82 = vector.broadcast %cst_45 : f32 to vector<1x50xf32>
    %83 = vector.broadcast %cst_46 : f32 to vector<1x50xf32>
    %84 = arith.select %81, %82, %83 : vector<1x50xi1>, vector<1x50xf32>
    %c1_47 = arith.constant 1 : index
    %c6_48 = arith.constant 6 : index
    %85 = memref.load %arg0[%c1_47, %c6_48] : memref<2x8xi32, #tpu.memory_space<smem>>
    %86 = vector.broadcast %85 : i32 to vector<1x50xi32>
    %87 = arith.cmpi eq, %0, %86 : vector<1x50xi32>
    %cst_49 = arith.constant 1.000000e+00 : f32
    %cst_50 = arith.constant 0.000000e+00 : f32
    %88 = vector.broadcast %cst_49 : f32 to vector<1x50xf32>
    %89 = vector.broadcast %cst_50 : f32 to vector<1x50xf32>
    %90 = arith.select %87, %88, %89 : vector<1x50xi1>, vector<1x50xf32>
    %c1_51 = arith.constant 1 : index
    %c7_52 = arith.constant 7 : index
    %91 = memref.load %arg0[%c1_51, %c7_52] : memref<2x8xi32, #tpu.memory_space<smem>>
    %92 = vector.broadcast %91 : i32 to vector<1x50xi32>
    %93 = arith.cmpi eq, %0, %92 : vector<1x50xi32>
    %cst_53 = arith.constant 1.000000e+00 : f32
    %cst_54 = arith.constant 0.000000e+00 : f32
    %94 = vector.broadcast %cst_53 : f32 to vector<1x50xf32>
    %95 = vector.broadcast %cst_54 : f32 to vector<1x50xf32>
    %96 = arith.select %93, %94, %95 : vector<1x50xi1>, vector<1x50xf32>
    %97 = tpu.concatenate %6, %12, %18, %24, %30, %36, %42, %48, %54, %60, %66, %72, %78, %84, %90, %96 in 0 : vector<1x50xf32>, vector<1x50xf32>, vector<1x50xf32>, vector<1x50xf32>, vector<1x50xf32>, vector<1x50xf32>, vector<1x50xf32>, vector<1x50xf32>, vector<1x50xf32>, vector<1x50xf32>, vector<1x50xf32>, vector<1x50xf32>, vector<1x50xf32>, vector<1x50xf32>, vector<1x50xf32>, vector<1x50xf32> -> vector<16x50xf32>
    %c0_55 = arith.constant 0 : index
    %c0_56 = arith.constant 0 : index
    %98 = vector.load %arg2[%c0_55, %c0_56] : memref<50x32xf32, #tpu.memory_space<vmem>>, vector<50x32xf32>
    %cst_57 = arith.constant dense<0.000000e+00> : vector<16x32xf32>
    %99 = tpu.matmul %97, %98, %cst_57 {dimension_numbers = #tpu.dot_dimension_numbers<[1], [0], [0], [1], [0, 0, 1, 1], [], []>} : vector<16x50xf32>, vector<50x32xf32>, vector<16x32xf32> -> vector<16x32xf32>
    %c0_58 = arith.constant 0 : index
    %c0_59 = arith.constant 0 : index
    %100 = vector.load %arg3[%c0_58, %c0_59] : memref<1x32xf32, #tpu.memory_space<vmem>>, vector<1x32xf32>
    %101 = vector.extract_strided_slice %99 {offsets = [0, 0], sizes = [8, 32], strides = [1, 1]} : vector<16x32xf32> to vector<8x32xf32>
    %c0_60 = arith.constant 0 : index
    %c0_61 = arith.constant 0 : index
    %102 = vector.load %arg3[%c0_60, %c0_61] : memref<1x32xf32, #tpu.memory_space<vmem>>, vector<1x32xf32>
    %103 = vector.extract_strided_slice %99 {offsets = [8, 0], sizes = [8, 32], strides = [1, 1]} : vector<16x32xf32> to vector<8x32xf32>
    %c0_62 = arith.constant 0 : index
    %c0_63 = arith.constant 0 : index
    %104 = vector.load %arg4[%c0_62, %c0_63] : memref<9x32xf32, #tpu.memory_space<vmem>>, vector<9x32xf32>
    %105 = tpu.concatenate %100, %101, %102, %103 in 0 : vector<1x32xf32>, vector<8x32xf32>, vector<1x32xf32>, vector<8x32xf32> -> vector<18x32xf32>
    %106 = tpu.concatenate %104, %104 in 0 : vector<9x32xf32>, vector<9x32xf32> -> vector<18x32xf32>
    %107 = arith.addf %105, %106 : vector<18x32xf32>
    %c0_64 = arith.constant 0 : index
    %c0_65 = arith.constant 0 : index
    %108 = vector.load %arg1[%c0_64, %c0_65] : memref<2x8xi32, #tpu.memory_space<vmem>>, vector<2x8xi32>
    %c0_i32 = arith.constant 0 : i32
    %109 = vector.broadcast %c0_i32 : i32 to vector<2x8xi32>
    %110 = arith.cmpi eq, %108, %109 : vector<2x8xi32>
    %cst_66 = arith.constant -1.000000e+30 : f32
    %cst_67 = arith.constant 0.000000e+00 : f32
    %111 = vector.broadcast %cst_66 : f32 to vector<2x8xf32>
    %112 = vector.broadcast %cst_67 : f32 to vector<2x8xf32>
    %113 = arith.select %110, %111, %112 : vector<2x8xi1>, vector<2x8xf32>
    %cst_68 = arith.constant 0.000000e+00 : f32
    %114 = vector.broadcast %cst_68 : f32 to vector<2x1xf32>
    %115 = tpu.concatenate %114, %113 in 1 : vector<2x1xf32>, vector<2x8xf32> -> vector<2x9xf32>
    %116 = vector.extract_strided_slice %115 {offsets = [0, 0], sizes = [1, 9], strides = [1, 1]} : vector<2x9xf32> to vector<1x9xf32>
    %117 = vector.extract_strided_slice %115 {offsets = [1, 0], sizes = [1, 9], strides = [1, 1]} : vector<2x9xf32> to vector<1x9xf32>
    %118 = tpu.concatenate %116, %117 in 1 : vector<1x9xf32>, vector<1x9xf32> -> vector<1x18xf32>
    %cst_69 = arith.constant 0.000000e+00 : f32
    %119 = vector.broadcast %cst_69 : f32 to vector<1x9xf32>
    %cst_70 = arith.constant -1.000000e+30 : f32
    %120 = vector.broadcast %cst_70 : f32 to vector<1x9xf32>
    %121 = tpu.concatenate %119, %120 in 1 : vector<1x9xf32>, vector<1x9xf32> -> vector<1x18xf32>
    %122 = vector.shape_cast %121 : vector<1x18xf32> to vector<1x18xf32>
    %123 = vector.broadcast %122 : vector<1x18xf32> to vector<9x18xf32>
    %cst_71 = arith.constant -1.000000e+30 : f32
    %124 = vector.broadcast %cst_71 : f32 to vector<1x9xf32>
    %cst_72 = arith.constant 0.000000e+00 : f32
    %125 = vector.broadcast %cst_72 : f32 to vector<1x9xf32>
    %126 = tpu.concatenate %124, %125 in 1 : vector<1x9xf32>, vector<1x9xf32> -> vector<1x18xf32>
    %127 = vector.shape_cast %126 : vector<1x18xf32> to vector<1x18xf32>
    %128 = vector.broadcast %127 : vector<1x18xf32> to vector<9x18xf32>
    %129 = tpu.concatenate %123, %128 in 0 : vector<9x18xf32>, vector<9x18xf32> -> vector<18x18xf32>
    %130 = vector.broadcast %118 : vector<1x18xf32> to vector<18x18xf32>
    %131 = arith.addf %129, %130 : vector<18x18xf32>
    %c0_73 = arith.constant 0 : index
    %c0_74 = arith.constant 0 : index
    %c0_75 = arith.constant 0 : index
    %132 = vector.load %arg5[%c0_73, %c0_74, %c0_75] : memref<2x1x32xf32, #tpu.memory_space<vmem>>, vector<1x1x32xf32>
    %133 = vector.shape_cast %132 : vector<1x1x32xf32> to vector<1x32xf32>
    %c0_76 = arith.constant 0 : index
    %c0_77 = arith.constant 0 : index
    %c0_78 = arith.constant 0 : index
    %134 = vector.load %arg6[%c0_76, %c0_77, %c0_78] : memref<2x1x32xf32, #tpu.memory_space<vmem>>, vector<1x1x32xf32>
    %135 = vector.shape_cast %134 : vector<1x1x32xf32> to vector<1x32xf32>
    %cst_79 = arith.constant dense<0.000000e+00> : vector<18xf32>
    %136 = vector.multi_reduction <add>, %107, %cst_79 [1] : vector<18x32xf32> to vector<18xf32>
    %137 = vector.shape_cast %136 : vector<18xf32> to vector<18x1xf32>
    %cst_80 = arith.constant 3.200000e+01 : f32
    %138 = vector.broadcast %cst_80 : f32 to vector<18x1xf32>
    %139 = arith.divf %137, %138 : vector<18x1xf32>
    %140 = vector.broadcast %139 : vector<18x1xf32> to vector<18x32xf32>
    %141 = arith.subf %107, %140 : vector<18x32xf32>
    %142 = arith.mulf %141, %141 : vector<18x32xf32>
    %cst_81 = arith.constant dense<0.000000e+00> : vector<18xf32>
    %143 = vector.multi_reduction <add>, %142, %cst_81 [1] : vector<18x32xf32> to vector<18xf32>
    %144 = vector.shape_cast %143 : vector<18xf32> to vector<18x1xf32>
    %cst_82 = arith.constant 3.200000e+01 : f32
    %145 = vector.broadcast %cst_82 : f32 to vector<18x1xf32>
    %146 = arith.divf %144, %145 : vector<18x1xf32>
    %147 = vector.broadcast %139 : vector<18x1xf32> to vector<18x32xf32>
    %148 = arith.subf %107, %147 : vector<18x32xf32>
    %cst_83 = arith.constant 9.99999974E-6 : f32
    %149 = vector.broadcast %cst_83 : f32 to vector<18x1xf32>
    %150 = arith.addf %146, %149 : vector<18x1xf32>
    %151 = math.rsqrt %150 : vector<18x1xf32>
    %152 = vector.broadcast %151 : vector<18x1xf32> to vector<18x32xf32>
    %153 = arith.mulf %148, %152 : vector<18x32xf32>
    %154 = vector.broadcast %133 : vector<1x32xf32> to vector<18x32xf32>
    %155 = arith.mulf %153, %154 : vector<18x32xf32>
    %156 = vector.broadcast %135 : vector<1x32xf32> to vector<18x32xf32>
    %157 = arith.addf %155, %156 : vector<18x32xf32>
    %c0_84 = arith.constant 0 : index
    %c0_85 = arith.constant 0 : index
    %c0_86 = arith.constant 0 : index
    %158 = vector.load %arg7[%c0_84, %c0_85, %c0_86] : memref<2x32x32xf32, #tpu.memory_space<vmem>>, vector<1x32x32xf32>
    %159 = vector.shape_cast %158 : vector<1x32x32xf32> to vector<32x32xf32>
    %cst_87 = arith.constant dense<0.000000e+00> : vector<18x32xf32>
    %160 = tpu.matmul %157, %159, %cst_87 {dimension_numbers = #tpu.dot_dimension_numbers<[1], [0], [0], [1], [0, 0, 1, 1], [], []>} : vector<18x32xf32>, vector<32x32xf32>, vector<18x32xf32> -> vector<18x32xf32>
    %c0_88 = arith.constant 0 : index
    %c0_89 = arith.constant 0 : index
    %c0_90 = arith.constant 0 : index
    %161 = vector.load %arg10[%c0_88, %c0_89, %c0_90] : memref<2x1x32xf32, #tpu.memory_space<vmem>>, vector<1x1x32xf32>
    %162 = vector.shape_cast %161 : vector<1x1x32xf32> to vector<1x32xf32>
    %163 = vector.broadcast %162 : vector<1x32xf32> to vector<18x32xf32>
    %164 = arith.addf %160, %163 : vector<18x32xf32>
    %cst_91 = arith.constant 0.353553385 : f32
    %165 = vector.broadcast %cst_91 : f32 to vector<18x32xf32>
    %166 = arith.mulf %164, %165 : vector<18x32xf32>
    %c0_92 = arith.constant 0 : index
    %c0_93 = arith.constant 0 : index
    %c0_94 = arith.constant 0 : index
    %167 = vector.load %arg8[%c0_92, %c0_93, %c0_94] : memref<2x32x32xf32, #tpu.memory_space<vmem>>, vector<1x32x32xf32>
    %168 = vector.shape_cast %167 : vector<1x32x32xf32> to vector<32x32xf32>
    %cst_95 = arith.constant dense<0.000000e+00> : vector<18x32xf32>
    %169 = tpu.matmul %157, %168, %cst_95 {dimension_numbers = #tpu.dot_dimension_numbers<[1], [0], [0], [1], [0, 0, 1, 1], [], []>} : vector<18x32xf32>, vector<32x32xf32>, vector<18x32xf32> -> vector<18x32xf32>
    %c0_96 = arith.constant 0 : index
    %c0_97 = arith.constant 0 : index
    %c0_98 = arith.constant 0 : index
    %170 = vector.load %arg11[%c0_96, %c0_97, %c0_98] : memref<2x1x32xf32, #tpu.memory_space<vmem>>, vector<1x1x32xf32>
    %171 = vector.shape_cast %170 : vector<1x1x32xf32> to vector<1x32xf32>
    %172 = vector.broadcast %171 : vector<1x32xf32> to vector<18x32xf32>
    %173 = arith.addf %169, %172 : vector<18x32xf32>
    %c0_99 = arith.constant 0 : index
    %c0_100 = arith.constant 0 : index
    %c0_101 = arith.constant 0 : index
    %174 = vector.load %arg9[%c0_99, %c0_100, %c0_101] : memref<2x32x32xf32, #tpu.memory_space<vmem>>, vector<1x32x32xf32>
    %175 = vector.shape_cast %174 : vector<1x32x32xf32> to vector<32x32xf32>
    %cst_102 = arith.constant dense<0.000000e+00> : vector<18x32xf32>
    %176 = tpu.matmul %157, %175, %cst_102 {dimension_numbers = #tpu.dot_dimension_numbers<[1], [0], [0], [1], [0, 0, 1, 1], [], []>} : vector<18x32xf32>, vector<32x32xf32>, vector<18x32xf32> -> vector<18x32xf32>
    %c0_103 = arith.constant 0 : index
    %c0_104 = arith.constant 0 : index
    %c0_105 = arith.constant 0 : index
    %177 = vector.load %arg12[%c0_103, %c0_104, %c0_105] : memref<2x1x32xf32, #tpu.memory_space<vmem>>, vector<1x1x32xf32>
    %178 = vector.shape_cast %177 : vector<1x1x32xf32> to vector<1x32xf32>
    %179 = vector.broadcast %178 : vector<1x32xf32> to vector<18x32xf32>
    %180 = arith.addf %176, %179 : vector<18x32xf32>
    %181 = vector.extract_strided_slice %166 {offsets = [0, 0], sizes = [18, 8], strides = [1, 1]} : vector<18x32xf32> to vector<18x8xf32>
    %182 = vector.extract_strided_slice %173 {offsets = [0, 0], sizes = [18, 8], strides = [1, 1]} : vector<18x32xf32> to vector<18x8xf32>
    %cst_106 = arith.constant dense<0.000000e+00> : vector<18x18xf32>
    %183 = tpu.matmul %181, %182, %cst_106 {dimension_numbers = #tpu.dot_dimension_numbers<[1], [1], [0], [0], [0, 0, 1, 0], [], []>} : vector<18x8xf32>, vector<18x8xf32>, vector<18x18xf32> -> vector<18x18xf32>
    %184 = arith.addf %183, %131 : vector<18x18xf32>
    %cst_107 = arith.constant dense<0xFF800000> : vector<18xf32>
    %185 = vector.multi_reduction <maximumf>, %184, %cst_107 [1] : vector<18x18xf32> to vector<18xf32>
    %cst_108 = arith.constant 0xFF800000 : f32
    %186 = vector.broadcast %cst_108 : f32 to vector<18xf32>
    %187 = arith.maximumf %186, %185 : vector<18xf32>
    %188 = vector.shape_cast %187 : vector<18xf32> to vector<18x1xf32>
    %189 = vector.broadcast %188 : vector<18x1xf32> to vector<18x18xf32>
    %190 = arith.subf %184, %189 : vector<18x18xf32>
    %191 = math.exp %190 : vector<18x18xf32>
    %cst_109 = arith.constant dense<0.000000e+00> : vector<18xf32>
    %192 = vector.multi_reduction <add>, %191, %cst_109 [1] : vector<18x18xf32> to vector<18xf32>
    %193 = vector.shape_cast %192 : vector<18xf32> to vector<18x1xf32>
    %194 = vector.broadcast %193 : vector<18x1xf32> to vector<18x18xf32>
    %195 = arith.divf %191, %194 : vector<18x18xf32>
    %196 = vector.extract_strided_slice %180 {offsets = [0, 0], sizes = [18, 8], strides = [1, 1]} : vector<18x32xf32> to vector<18x8xf32>
    %cst_110 = arith.constant dense<0.000000e+00> : vector<18x8xf32>
    %197 = tpu.matmul %195, %196, %cst_110 {dimension_numbers = #tpu.dot_dimension_numbers<[1], [0], [0], [1], [0, 0, 1, 1], [], []>} : vector<18x18xf32>, vector<18x8xf32>, vector<18x8xf32> -> vector<18x8xf32>
    %198 = vector.extract_strided_slice %166 {offsets = [0, 8], sizes = [18, 8], strides = [1, 1]} : vector<18x32xf32> to vector<18x8xf32>
    %199 = vector.extract_strided_slice %173 {offsets = [0, 8], sizes = [18, 8], strides = [1, 1]} : vector<18x32xf32> to vector<18x8xf32>
    %cst_111 = arith.constant dense<0.000000e+00> : vector<18x18xf32>
    %200 = tpu.matmul %198, %199, %cst_111 {dimension_numbers = #tpu.dot_dimension_numbers<[1], [1], [0], [0], [0, 0, 1, 0], [], []>} : vector<18x8xf32>, vector<18x8xf32>, vector<18x18xf32> -> vector<18x18xf32>
    %201 = arith.addf %200, %131 : vector<18x18xf32>
    %cst_112 = arith.constant dense<0xFF800000> : vector<18xf32>
    %202 = vector.multi_reduction <maximumf>, %201, %cst_112 [1] : vector<18x18xf32> to vector<18xf32>
    %cst_113 = arith.constant 0xFF800000 : f32
    %203 = vector.broadcast %cst_113 : f32 to vector<18xf32>
    %204 = arith.maximumf %203, %202 : vector<18xf32>
    %205 = vector.shape_cast %204 : vector<18xf32> to vector<18x1xf32>
    %206 = vector.broadcast %205 : vector<18x1xf32> to vector<18x18xf32>
    %207 = arith.subf %201, %206 : vector<18x18xf32>
    %208 = math.exp %207 : vector<18x18xf32>
    %cst_114 = arith.constant dense<0.000000e+00> : vector<18xf32>
    %209 = vector.multi_reduction <add>, %208, %cst_114 [1] : vector<18x18xf32> to vector<18xf32>
    %210 = vector.shape_cast %209 : vector<18xf32> to vector<18x1xf32>
    %211 = vector.broadcast %210 : vector<18x1xf32> to vector<18x18xf32>
    %212 = arith.divf %208, %211 : vector<18x18xf32>
    %213 = vector.extract_strided_slice %180 {offsets = [0, 8], sizes = [18, 8], strides = [1, 1]} : vector<18x32xf32> to vector<18x8xf32>
    %cst_115 = arith.constant dense<0.000000e+00> : vector<18x8xf32>
    %214 = tpu.matmul %212, %213, %cst_115 {dimension_numbers = #tpu.dot_dimension_numbers<[1], [0], [0], [1], [0, 0, 1, 1], [], []>} : vector<18x18xf32>, vector<18x8xf32>, vector<18x8xf32> -> vector<18x8xf32>
    %215 = vector.extract_strided_slice %166 {offsets = [0, 16], sizes = [18, 8], strides = [1, 1]} : vector<18x32xf32> to vector<18x8xf32>
    %216 = vector.extract_strided_slice %173 {offsets = [0, 16], sizes = [18, 8], strides = [1, 1]} : vector<18x32xf32> to vector<18x8xf32>
    %cst_116 = arith.constant dense<0.000000e+00> : vector<18x18xf32>
    %217 = tpu.matmul %215, %216, %cst_116 {dimension_numbers = #tpu.dot_dimension_numbers<[1], [1], [0], [0], [0, 0, 1, 0], [], []>} : vector<18x8xf32>, vector<18x8xf32>, vector<18x18xf32> -> vector<18x18xf32>
    %218 = arith.addf %217, %131 : vector<18x18xf32>
    %cst_117 = arith.constant dense<0xFF800000> : vector<18xf32>
    %219 = vector.multi_reduction <maximumf>, %218, %cst_117 [1] : vector<18x18xf32> to vector<18xf32>
    %cst_118 = arith.constant 0xFF800000 : f32
    %220 = vector.broadcast %cst_118 : f32 to vector<18xf32>
    %221 = arith.maximumf %220, %219 : vector<18xf32>
    %222 = vector.shape_cast %221 : vector<18xf32> to vector<18x1xf32>
    %223 = vector.broadcast %222 : vector<18x1xf32> to vector<18x18xf32>
    %224 = arith.subf %218, %223 : vector<18x18xf32>
    %225 = math.exp %224 : vector<18x18xf32>
    %cst_119 = arith.constant dense<0.000000e+00> : vector<18xf32>
    %226 = vector.multi_reduction <add>, %225, %cst_119 [1] : vector<18x18xf32> to vector<18xf32>
    %227 = vector.shape_cast %226 : vector<18xf32> to vector<18x1xf32>
    %228 = vector.broadcast %227 : vector<18x1xf32> to vector<18x18xf32>
    %229 = arith.divf %225, %228 : vector<18x18xf32>
    %230 = vector.extract_strided_slice %180 {offsets = [0, 16], sizes = [18, 8], strides = [1, 1]} : vector<18x32xf32> to vector<18x8xf32>
    %cst_120 = arith.constant dense<0.000000e+00> : vector<18x8xf32>
    %231 = tpu.matmul %229, %230, %cst_120 {dimension_numbers = #tpu.dot_dimension_numbers<[1], [0], [0], [1], [0, 0, 1, 1], [], []>} : vector<18x18xf32>, vector<18x8xf32>, vector<18x8xf32> -> vector<18x8xf32>
    %232 = vector.extract_strided_slice %166 {offsets = [0, 24], sizes = [18, 8], strides = [1, 1]} : vector<18x32xf32> to vector<18x8xf32>
    %233 = vector.extract_strided_slice %173 {offsets = [0, 24], sizes = [18, 8], strides = [1, 1]} : vector<18x32xf32> to vector<18x8xf32>
    %cst_121 = arith.constant dense<0.000000e+00> : vector<18x18xf32>
    %234 = tpu.matmul %232, %233, %cst_121 {dimension_numbers = #tpu.dot_dimension_numbers<[1], [1], [0], [0], [0, 0, 1, 0], [], []>} : vector<18x8xf32>, vector<18x8xf32>, vector<18x18xf32> -> vector<18x18xf32>
    %235 = arith.addf %234, %131 : vector<18x18xf32>
    %cst_122 = arith.constant dense<0xFF800000> : vector<18xf32>
    %236 = vector.multi_reduction <maximumf>, %235, %cst_122 [1] : vector<18x18xf32> to vector<18xf32>
    %cst_123 = arith.constant 0xFF800000 : f32
    %237 = vector.broadcast %cst_123 : f32 to vector<18xf32>
    %238 = arith.maximumf %237, %236 : vector<18xf32>
    %239 = vector.shape_cast %238 : vector<18xf32> to vector<18x1xf32>
    %240 = vector.broadcast %239 : vector<18x1xf32> to vector<18x18xf32>
    %241 = arith.subf %235, %240 : vector<18x18xf32>
    %242 = math.exp %241 : vector<18x18xf32>
    %cst_124 = arith.constant dense<0.000000e+00> : vector<18xf32>
    %243 = vector.multi_reduction <add>, %242, %cst_124 [1] : vector<18x18xf32> to vector<18xf32>
    %244 = vector.shape_cast %243 : vector<18xf32> to vector<18x1xf32>
    %245 = vector.broadcast %244 : vector<18x1xf32> to vector<18x18xf32>
    %246 = arith.divf %242, %245 : vector<18x18xf32>
    %247 = vector.extract_strided_slice %180 {offsets = [0, 24], sizes = [18, 8], strides = [1, 1]} : vector<18x32xf32> to vector<18x8xf32>
    %cst_125 = arith.constant dense<0.000000e+00> : vector<18x8xf32>
    %248 = tpu.matmul %246, %247, %cst_125 {dimension_numbers = #tpu.dot_dimension_numbers<[1], [0], [0], [1], [0, 0, 1, 1], [], []>} : vector<18x18xf32>, vector<18x8xf32>, vector<18x8xf32> -> vector<18x8xf32>
    %249 = tpu.concatenate %197, %214, %231, %248 in 1 : vector<18x8xf32>, vector<18x8xf32>, vector<18x8xf32>, vector<18x8xf32> -> vector<18x32xf32>
    %c0_126 = arith.constant 0 : index
    %c0_127 = arith.constant 0 : index
    %c0_128 = arith.constant 0 : index
    %250 = vector.load %arg13[%c0_126, %c0_127, %c0_128] : memref<2x32x32xf32, #tpu.memory_space<vmem>>, vector<1x32x32xf32>
    %251 = vector.shape_cast %250 : vector<1x32x32xf32> to vector<32x32xf32>
    %cst_129 = arith.constant dense<0.000000e+00> : vector<18x32xf32>
    %252 = tpu.matmul %249, %251, %cst_129 {dimension_numbers = #tpu.dot_dimension_numbers<[1], [0], [0], [1], [0, 0, 1, 1], [], []>} : vector<18x32xf32>, vector<32x32xf32>, vector<18x32xf32> -> vector<18x32xf32>
    %253 = arith.addf %107, %252 : vector<18x32xf32>
    %c0_130 = arith.constant 0 : index
    %c0_131 = arith.constant 0 : index
    %c0_132 = arith.constant 0 : index
    %254 = vector.load %arg14[%c0_130, %c0_131, %c0_132] : memref<2x1x32xf32, #tpu.memory_space<vmem>>, vector<1x1x32xf32>
    %255 = vector.shape_cast %254 : vector<1x1x32xf32> to vector<1x32xf32>
    %256 = vector.broadcast %255 : vector<1x32xf32> to vector<18x32xf32>
    %257 = arith.addf %253, %256 : vector<18x32xf32>
    %c0_133 = arith.constant 0 : index
    %c0_134 = arith.constant 0 : index
    %c0_135 = arith.constant 0 : index
    %258 = vector.load %arg15[%c0_133, %c0_134, %c0_135] : memref<2x1x32xf32, #tpu.memory_space<vmem>>, vector<1x1x32xf32>
    %259 = vector.shape_cast %258 : vector<1x1x32xf32> to vector<1x32xf32>
    %c0_136 = arith.constant 0 : index
    %c0_137 = arith.constant 0 : index
    %c0_138 = arith.constant 0 : index
    %260 = vector.load %arg16[%c0_136, %c0_137, %c0_138] : memref<2x1x32xf32, #tpu.memory_space<vmem>>, vector<1x1x32xf32>
    %261 = vector.shape_cast %260 : vector<1x1x32xf32> to vector<1x32xf32>
    %cst_139 = arith.constant dense<0.000000e+00> : vector<18xf32>
    %262 = vector.multi_reduction <add>, %257, %cst_139 [1] : vector<18x32xf32> to vector<18xf32>
    %263 = vector.shape_cast %262 : vector<18xf32> to vector<18x1xf32>
    %cst_140 = arith.constant 3.200000e+01 : f32
    %264 = vector.broadcast %cst_140 : f32 to vector<18x1xf32>
    %265 = arith.divf %263, %264 : vector<18x1xf32>
    %266 = vector.broadcast %265 : vector<18x1xf32> to vector<18x32xf32>
    %267 = arith.subf %257, %266 : vector<18x32xf32>
    %268 = arith.mulf %267, %267 : vector<18x32xf32>
    %cst_141 = arith.constant dense<0.000000e+00> : vector<18xf32>
    %269 = vector.multi_reduction <add>, %268, %cst_141 [1] : vector<18x32xf32> to vector<18xf32>
    %270 = vector.shape_cast %269 : vector<18xf32> to vector<18x1xf32>
    %cst_142 = arith.constant 3.200000e+01 : f32
    %271 = vector.broadcast %cst_142 : f32 to vector<18x1xf32>
    %272 = arith.divf %270, %271 : vector<18x1xf32>
    %273 = vector.broadcast %265 : vector<18x1xf32> to vector<18x32xf32>
    %274 = arith.subf %257, %273 : vector<18x32xf32>
    %cst_143 = arith.constant 9.99999974E-6 : f32
    %275 = vector.broadcast %cst_143 : f32 to vector<18x1xf32>
    %276 = arith.addf %272, %275 : vector<18x1xf32>
    %277 = math.rsqrt %276 : vector<18x1xf32>
    %278 = vector.broadcast %277 : vector<18x1xf32> to vector<18x32xf32>
    %279 = arith.mulf %274, %278 : vector<18x32xf32>
    %280 = vector.broadcast %259 : vector<1x32xf32> to vector<18x32xf32>
    %281 = arith.mulf %279, %280 : vector<18x32xf32>
    %282 = vector.broadcast %261 : vector<1x32xf32> to vector<18x32xf32>
    %283 = arith.addf %281, %282 : vector<18x32xf32>
    %c0_144 = arith.constant 0 : index
    %c0_145 = arith.constant 0 : index
    %c0_146 = arith.constant 0 : index
    %284 = vector.load %arg17[%c0_144, %c0_145, %c0_146] : memref<2x32x64xf32, #tpu.memory_space<vmem>>, vector<1x32x64xf32>
    %285 = vector.shape_cast %284 : vector<1x32x64xf32> to vector<32x64xf32>
    %cst_147 = arith.constant dense<0.000000e+00> : vector<18x64xf32>
    %286 = tpu.matmul %283, %285, %cst_147 {dimension_numbers = #tpu.dot_dimension_numbers<[1], [0], [0], [1], [0, 0, 1, 1], [], []>} : vector<18x32xf32>, vector<32x64xf32>, vector<18x64xf32> -> vector<18x64xf32>
    %c0_148 = arith.constant 0 : index
    %c0_149 = arith.constant 0 : index
    %c0_150 = arith.constant 0 : index
    %287 = vector.load %arg18[%c0_148, %c0_149, %c0_150] : memref<2x1x64xf32, #tpu.memory_space<vmem>>, vector<1x1x64xf32>
    %288 = vector.shape_cast %287 : vector<1x1x64xf32> to vector<1x64xf32>
    %289 = vector.broadcast %288 : vector<1x64xf32> to vector<18x64xf32>
    %290 = arith.addf %286, %289 : vector<18x64xf32>
    %291 = arith.mulf %290, %290 : vector<18x64xf32>
    %292 = arith.mulf %290, %291 : vector<18x64xf32>
    %cst_151 = arith.constant 4.471500e-02 : f32
    %293 = vector.broadcast %cst_151 : f32 to vector<18x64xf32>
    %294 = arith.mulf %293, %292 : vector<18x64xf32>
    %295 = arith.addf %290, %294 : vector<18x64xf32>
    %cst_152 = arith.constant 0.797884583 : f32
    %296 = vector.broadcast %cst_152 : f32 to vector<18x64xf32>
    %297 = arith.mulf %296, %295 : vector<18x64xf32>
    %298 = math.tanh %297 : vector<18x64xf32>
    %cst_153 = arith.constant 1.000000e+00 : f32
    %299 = vector.broadcast %cst_153 : f32 to vector<18x64xf32>
    %300 = arith.addf %299, %298 : vector<18x64xf32>
    %cst_154 = arith.constant 5.000000e-01 : f32
    %301 = vector.broadcast %cst_154 : f32 to vector<18x64xf32>
    %302 = arith.mulf %301, %300 : vector<18x64xf32>
    %303 = arith.mulf %290, %302 : vector<18x64xf32>
    %c0_155 = arith.constant 0 : index
    %c0_156 = arith.constant 0 : index
    %c0_157 = arith.constant 0 : index
    %304 = vector.load %arg19[%c0_155, %c0_156, %c0_157] : memref<2x64x32xf32, #tpu.memory_space<vmem>>, vector<1x64x32xf32>
    %305 = vector.shape_cast %304 : vector<1x64x32xf32> to vector<64x32xf32>
    %cst_158 = arith.constant dense<0.000000e+00> : vector<18x32xf32>
    %306 = tpu.matmul %303, %305, %cst_158 {dimension_numbers = #tpu.dot_dimension_numbers<[1], [0], [0], [1], [0, 0, 1, 1], [], []>} : vector<18x64xf32>, vector<64x32xf32>, vector<18x32xf32> -> vector<18x32xf32>
    %307 = arith.addf %257, %306 : vector<18x32xf32>
    %c0_159 = arith.constant 0 : index
    %c0_160 = arith.constant 0 : index
    %c0_161 = arith.constant 0 : index
    %308 = vector.load %arg20[%c0_159, %c0_160, %c0_161] : memref<2x1x32xf32, #tpu.memory_space<vmem>>, vector<1x1x32xf32>
    %309 = vector.shape_cast %308 : vector<1x1x32xf32> to vector<1x32xf32>
    %310 = vector.broadcast %309 : vector<1x32xf32> to vector<18x32xf32>
    %311 = arith.addf %307, %310 : vector<18x32xf32>
    %c1_162 = arith.constant 1 : index
    %c0_163 = arith.constant 0 : index
    %c0_164 = arith.constant 0 : index
    %312 = vector.load %arg5[%c1_162, %c0_163, %c0_164] : memref<2x1x32xf32, #tpu.memory_space<vmem>>, vector<1x1x32xf32>
    %313 = vector.shape_cast %312 : vector<1x1x32xf32> to vector<1x32xf32>
    %c1_165 = arith.constant 1 : index
    %c0_166 = arith.constant 0 : index
    %c0_167 = arith.constant 0 : index
    %314 = vector.load %arg6[%c1_165, %c0_166, %c0_167] : memref<2x1x32xf32, #tpu.memory_space<vmem>>, vector<1x1x32xf32>
    %315 = vector.shape_cast %314 : vector<1x1x32xf32> to vector<1x32xf32>
    %cst_168 = arith.constant dense<0.000000e+00> : vector<18xf32>
    %316 = vector.multi_reduction <add>, %311, %cst_168 [1] : vector<18x32xf32> to vector<18xf32>
    %317 = vector.shape_cast %316 : vector<18xf32> to vector<18x1xf32>
    %cst_169 = arith.constant 3.200000e+01 : f32
    %318 = vector.broadcast %cst_169 : f32 to vector<18x1xf32>
    %319 = arith.divf %317, %318 : vector<18x1xf32>
    %320 = vector.broadcast %319 : vector<18x1xf32> to vector<18x32xf32>
    %321 = arith.subf %311, %320 : vector<18x32xf32>
    %322 = arith.mulf %321, %321 : vector<18x32xf32>
    %cst_170 = arith.constant dense<0.000000e+00> : vector<18xf32>
    %323 = vector.multi_reduction <add>, %322, %cst_170 [1] : vector<18x32xf32> to vector<18xf32>
    %324 = vector.shape_cast %323 : vector<18xf32> to vector<18x1xf32>
    %cst_171 = arith.constant 3.200000e+01 : f32
    %325 = vector.broadcast %cst_171 : f32 to vector<18x1xf32>
    %326 = arith.divf %324, %325 : vector<18x1xf32>
    %327 = vector.broadcast %319 : vector<18x1xf32> to vector<18x32xf32>
    %328 = arith.subf %311, %327 : vector<18x32xf32>
    %cst_172 = arith.constant 9.99999974E-6 : f32
    %329 = vector.broadcast %cst_172 : f32 to vector<18x1xf32>
    %330 = arith.addf %326, %329 : vector<18x1xf32>
    %331 = math.rsqrt %330 : vector<18x1xf32>
    %332 = vector.broadcast %331 : vector<18x1xf32> to vector<18x32xf32>
    %333 = arith.mulf %328, %332 : vector<18x32xf32>
    %334 = vector.broadcast %313 : vector<1x32xf32> to vector<18x32xf32>
    %335 = arith.mulf %333, %334 : vector<18x32xf32>
    %336 = vector.broadcast %315 : vector<1x32xf32> to vector<18x32xf32>
    %337 = arith.addf %335, %336 : vector<18x32xf32>
    %c1_173 = arith.constant 1 : index
    %c0_174 = arith.constant 0 : index
    %c0_175 = arith.constant 0 : index
    %338 = vector.load %arg7[%c1_173, %c0_174, %c0_175] : memref<2x32x32xf32, #tpu.memory_space<vmem>>, vector<1x32x32xf32>
    %339 = vector.shape_cast %338 : vector<1x32x32xf32> to vector<32x32xf32>
    %cst_176 = arith.constant dense<0.000000e+00> : vector<18x32xf32>
    %340 = tpu.matmul %337, %339, %cst_176 {dimension_numbers = #tpu.dot_dimension_numbers<[1], [0], [0], [1], [0, 0, 1, 1], [], []>} : vector<18x32xf32>, vector<32x32xf32>, vector<18x32xf32> -> vector<18x32xf32>
    %c1_177 = arith.constant 1 : index
    %c0_178 = arith.constant 0 : index
    %c0_179 = arith.constant 0 : index
    %341 = vector.load %arg10[%c1_177, %c0_178, %c0_179] : memref<2x1x32xf32, #tpu.memory_space<vmem>>, vector<1x1x32xf32>
    %342 = vector.shape_cast %341 : vector<1x1x32xf32> to vector<1x32xf32>
    %343 = vector.broadcast %342 : vector<1x32xf32> to vector<18x32xf32>
    %344 = arith.addf %340, %343 : vector<18x32xf32>
    %cst_180 = arith.constant 0.353553385 : f32
    %345 = vector.broadcast %cst_180 : f32 to vector<18x32xf32>
    %346 = arith.mulf %344, %345 : vector<18x32xf32>
    %c1_181 = arith.constant 1 : index
    %c0_182 = arith.constant 0 : index
    %c0_183 = arith.constant 0 : index
    %347 = vector.load %arg8[%c1_181, %c0_182, %c0_183] : memref<2x32x32xf32, #tpu.memory_space<vmem>>, vector<1x32x32xf32>
    %348 = vector.shape_cast %347 : vector<1x32x32xf32> to vector<32x32xf32>
    %cst_184 = arith.constant dense<0.000000e+00> : vector<18x32xf32>
    %349 = tpu.matmul %337, %348, %cst_184 {dimension_numbers = #tpu.dot_dimension_numbers<[1], [0], [0], [1], [0, 0, 1, 1], [], []>} : vector<18x32xf32>, vector<32x32xf32>, vector<18x32xf32> -> vector<18x32xf32>
    %c1_185 = arith.constant 1 : index
    %c0_186 = arith.constant 0 : index
    %c0_187 = arith.constant 0 : index
    %350 = vector.load %arg11[%c1_185, %c0_186, %c0_187] : memref<2x1x32xf32, #tpu.memory_space<vmem>>, vector<1x1x32xf32>
    %351 = vector.shape_cast %350 : vector<1x1x32xf32> to vector<1x32xf32>
    %352 = vector.broadcast %351 : vector<1x32xf32> to vector<18x32xf32>
    %353 = arith.addf %349, %352 : vector<18x32xf32>
    %c1_188 = arith.constant 1 : index
    %c0_189 = arith.constant 0 : index
    %c0_190 = arith.constant 0 : index
    %354 = vector.load %arg9[%c1_188, %c0_189, %c0_190] : memref<2x32x32xf32, #tpu.memory_space<vmem>>, vector<1x32x32xf32>
    %355 = vector.shape_cast %354 : vector<1x32x32xf32> to vector<32x32xf32>
    %cst_191 = arith.constant dense<0.000000e+00> : vector<18x32xf32>
    %356 = tpu.matmul %337, %355, %cst_191 {dimension_numbers = #tpu.dot_dimension_numbers<[1], [0], [0], [1], [0, 0, 1, 1], [], []>} : vector<18x32xf32>, vector<32x32xf32>, vector<18x32xf32> -> vector<18x32xf32>
    %c1_192 = arith.constant 1 : index
    %c0_193 = arith.constant 0 : index
    %c0_194 = arith.constant 0 : index
    %357 = vector.load %arg12[%c1_192, %c0_193, %c0_194] : memref<2x1x32xf32, #tpu.memory_space<vmem>>, vector<1x1x32xf32>
    %358 = vector.shape_cast %357 : vector<1x1x32xf32> to vector<1x32xf32>
    %359 = vector.broadcast %358 : vector<1x32xf32> to vector<18x32xf32>
    %360 = arith.addf %356, %359 : vector<18x32xf32>
    %361 = vector.extract_strided_slice %346 {offsets = [0, 0], sizes = [18, 8], strides = [1, 1]} : vector<18x32xf32> to vector<18x8xf32>
    %362 = vector.extract_strided_slice %353 {offsets = [0, 0], sizes = [18, 8], strides = [1, 1]} : vector<18x32xf32> to vector<18x8xf32>
    %cst_195 = arith.constant dense<0.000000e+00> : vector<18x18xf32>
    %363 = tpu.matmul %361, %362, %cst_195 {dimension_numbers = #tpu.dot_dimension_numbers<[1], [1], [0], [0], [0, 0, 1, 0], [], []>} : vector<18x8xf32>, vector<18x8xf32>, vector<18x18xf32> -> vector<18x18xf32>
    %364 = arith.addf %363, %131 : vector<18x18xf32>
    %cst_196 = arith.constant dense<0xFF800000> : vector<18xf32>
    %365 = vector.multi_reduction <maximumf>, %364, %cst_196 [1] : vector<18x18xf32> to vector<18xf32>
    %cst_197 = arith.constant 0xFF800000 : f32
    %366 = vector.broadcast %cst_197 : f32 to vector<18xf32>
    %367 = arith.maximumf %366, %365 : vector<18xf32>
    %368 = vector.shape_cast %367 : vector<18xf32> to vector<18x1xf32>
    %369 = vector.broadcast %368 : vector<18x1xf32> to vector<18x18xf32>
    %370 = arith.subf %364, %369 : vector<18x18xf32>
    %371 = math.exp %370 : vector<18x18xf32>
    %cst_198 = arith.constant dense<0.000000e+00> : vector<18xf32>
    %372 = vector.multi_reduction <add>, %371, %cst_198 [1] : vector<18x18xf32> to vector<18xf32>
    %373 = vector.shape_cast %372 : vector<18xf32> to vector<18x1xf32>
    %374 = vector.broadcast %373 : vector<18x1xf32> to vector<18x18xf32>
    %375 = arith.divf %371, %374 : vector<18x18xf32>
    %376 = vector.extract_strided_slice %360 {offsets = [0, 0], sizes = [18, 8], strides = [1, 1]} : vector<18x32xf32> to vector<18x8xf32>
    %cst_199 = arith.constant dense<0.000000e+00> : vector<18x8xf32>
    %377 = tpu.matmul %375, %376, %cst_199 {dimension_numbers = #tpu.dot_dimension_numbers<[1], [0], [0], [1], [0, 0, 1, 1], [], []>} : vector<18x18xf32>, vector<18x8xf32>, vector<18x8xf32> -> vector<18x8xf32>
    %378 = vector.extract_strided_slice %346 {offsets = [0, 8], sizes = [18, 8], strides = [1, 1]} : vector<18x32xf32> to vector<18x8xf32>
    %379 = vector.extract_strided_slice %353 {offsets = [0, 8], sizes = [18, 8], strides = [1, 1]} : vector<18x32xf32> to vector<18x8xf32>
    %cst_200 = arith.constant dense<0.000000e+00> : vector<18x18xf32>
    %380 = tpu.matmul %378, %379, %cst_200 {dimension_numbers = #tpu.dot_dimension_numbers<[1], [1], [0], [0], [0, 0, 1, 0], [], []>} : vector<18x8xf32>, vector<18x8xf32>, vector<18x18xf32> -> vector<18x18xf32>
    %381 = arith.addf %380, %131 : vector<18x18xf32>
    %cst_201 = arith.constant dense<0xFF800000> : vector<18xf32>
    %382 = vector.multi_reduction <maximumf>, %381, %cst_201 [1] : vector<18x18xf32> to vector<18xf32>
    %cst_202 = arith.constant 0xFF800000 : f32
    %383 = vector.broadcast %cst_202 : f32 to vector<18xf32>
    %384 = arith.maximumf %383, %382 : vector<18xf32>
    %385 = vector.shape_cast %384 : vector<18xf32> to vector<18x1xf32>
    %386 = vector.broadcast %385 : vector<18x1xf32> to vector<18x18xf32>
    %387 = arith.subf %381, %386 : vector<18x18xf32>
    %388 = math.exp %387 : vector<18x18xf32>
    %cst_203 = arith.constant dense<0.000000e+00> : vector<18xf32>
    %389 = vector.multi_reduction <add>, %388, %cst_203 [1] : vector<18x18xf32> to vector<18xf32>
    %390 = vector.shape_cast %389 : vector<18xf32> to vector<18x1xf32>
    %391 = vector.broadcast %390 : vector<18x1xf32> to vector<18x18xf32>
    %392 = arith.divf %388, %391 : vector<18x18xf32>
    %393 = vector.extract_strided_slice %360 {offsets = [0, 8], sizes = [18, 8], strides = [1, 1]} : vector<18x32xf32> to vector<18x8xf32>
    %cst_204 = arith.constant dense<0.000000e+00> : vector<18x8xf32>
    %394 = tpu.matmul %392, %393, %cst_204 {dimension_numbers = #tpu.dot_dimension_numbers<[1], [0], [0], [1], [0, 0, 1, 1], [], []>} : vector<18x18xf32>, vector<18x8xf32>, vector<18x8xf32> -> vector<18x8xf32>
    %395 = vector.extract_strided_slice %346 {offsets = [0, 16], sizes = [18, 8], strides = [1, 1]} : vector<18x32xf32> to vector<18x8xf32>
    %396 = vector.extract_strided_slice %353 {offsets = [0, 16], sizes = [18, 8], strides = [1, 1]} : vector<18x32xf32> to vector<18x8xf32>
    %cst_205 = arith.constant dense<0.000000e+00> : vector<18x18xf32>
    %397 = tpu.matmul %395, %396, %cst_205 {dimension_numbers = #tpu.dot_dimension_numbers<[1], [1], [0], [0], [0, 0, 1, 0], [], []>} : vector<18x8xf32>, vector<18x8xf32>, vector<18x18xf32> -> vector<18x18xf32>
    %398 = arith.addf %397, %131 : vector<18x18xf32>
    %cst_206 = arith.constant dense<0xFF800000> : vector<18xf32>
    %399 = vector.multi_reduction <maximumf>, %398, %cst_206 [1] : vector<18x18xf32> to vector<18xf32>
    %cst_207 = arith.constant 0xFF800000 : f32
    %400 = vector.broadcast %cst_207 : f32 to vector<18xf32>
    %401 = arith.maximumf %400, %399 : vector<18xf32>
    %402 = vector.shape_cast %401 : vector<18xf32> to vector<18x1xf32>
    %403 = vector.broadcast %402 : vector<18x1xf32> to vector<18x18xf32>
    %404 = arith.subf %398, %403 : vector<18x18xf32>
    %405 = math.exp %404 : vector<18x18xf32>
    %cst_208 = arith.constant dense<0.000000e+00> : vector<18xf32>
    %406 = vector.multi_reduction <add>, %405, %cst_208 [1] : vector<18x18xf32> to vector<18xf32>
    %407 = vector.shape_cast %406 : vector<18xf32> to vector<18x1xf32>
    %408 = vector.broadcast %407 : vector<18x1xf32> to vector<18x18xf32>
    %409 = arith.divf %405, %408 : vector<18x18xf32>
    %410 = vector.extract_strided_slice %360 {offsets = [0, 16], sizes = [18, 8], strides = [1, 1]} : vector<18x32xf32> to vector<18x8xf32>
    %cst_209 = arith.constant dense<0.000000e+00> : vector<18x8xf32>
    %411 = tpu.matmul %409, %410, %cst_209 {dimension_numbers = #tpu.dot_dimension_numbers<[1], [0], [0], [1], [0, 0, 1, 1], [], []>} : vector<18x18xf32>, vector<18x8xf32>, vector<18x8xf32> -> vector<18x8xf32>
    %412 = vector.extract_strided_slice %346 {offsets = [0, 24], sizes = [18, 8], strides = [1, 1]} : vector<18x32xf32> to vector<18x8xf32>
    %413 = vector.extract_strided_slice %353 {offsets = [0, 24], sizes = [18, 8], strides = [1, 1]} : vector<18x32xf32> to vector<18x8xf32>
    %cst_210 = arith.constant dense<0.000000e+00> : vector<18x18xf32>
    %414 = tpu.matmul %412, %413, %cst_210 {dimension_numbers = #tpu.dot_dimension_numbers<[1], [1], [0], [0], [0, 0, 1, 0], [], []>} : vector<18x8xf32>, vector<18x8xf32>, vector<18x18xf32> -> vector<18x18xf32>
    %415 = arith.addf %414, %131 : vector<18x18xf32>
    %cst_211 = arith.constant dense<0xFF800000> : vector<18xf32>
    %416 = vector.multi_reduction <maximumf>, %415, %cst_211 [1] : vector<18x18xf32> to vector<18xf32>
    %cst_212 = arith.constant 0xFF800000 : f32
    %417 = vector.broadcast %cst_212 : f32 to vector<18xf32>
    %418 = arith.maximumf %417, %416 : vector<18xf32>
    %419 = vector.shape_cast %418 : vector<18xf32> to vector<18x1xf32>
    %420 = vector.broadcast %419 : vector<18x1xf32> to vector<18x18xf32>
    %421 = arith.subf %415, %420 : vector<18x18xf32>
    %422 = math.exp %421 : vector<18x18xf32>
    %cst_213 = arith.constant dense<0.000000e+00> : vector<18xf32>
    %423 = vector.multi_reduction <add>, %422, %cst_213 [1] : vector<18x18xf32> to vector<18xf32>
    %424 = vector.shape_cast %423 : vector<18xf32> to vector<18x1xf32>
    %425 = vector.broadcast %424 : vector<18x1xf32> to vector<18x18xf32>
    %426 = arith.divf %422, %425 : vector<18x18xf32>
    %427 = vector.extract_strided_slice %360 {offsets = [0, 24], sizes = [18, 8], strides = [1, 1]} : vector<18x32xf32> to vector<18x8xf32>
    %cst_214 = arith.constant dense<0.000000e+00> : vector<18x8xf32>
    %428 = tpu.matmul %426, %427, %cst_214 {dimension_numbers = #tpu.dot_dimension_numbers<[1], [0], [0], [1], [0, 0, 1, 1], [], []>} : vector<18x18xf32>, vector<18x8xf32>, vector<18x8xf32> -> vector<18x8xf32>
    %429 = tpu.concatenate %377, %394, %411, %428 in 1 : vector<18x8xf32>, vector<18x8xf32>, vector<18x8xf32>, vector<18x8xf32> -> vector<18x32xf32>
    %c1_215 = arith.constant 1 : index
    %c0_216 = arith.constant 0 : index
    %c0_217 = arith.constant 0 : index
    %430 = vector.load %arg13[%c1_215, %c0_216, %c0_217] : memref<2x32x32xf32, #tpu.memory_space<vmem>>, vector<1x32x32xf32>
    %431 = vector.shape_cast %430 : vector<1x32x32xf32> to vector<32x32xf32>
    %cst_218 = arith.constant dense<0.000000e+00> : vector<18x32xf32>
    %432 = tpu.matmul %429, %431, %cst_218 {dimension_numbers = #tpu.dot_dimension_numbers<[1], [0], [0], [1], [0, 0, 1, 1], [], []>} : vector<18x32xf32>, vector<32x32xf32>, vector<18x32xf32> -> vector<18x32xf32>
    %433 = arith.addf %311, %432 : vector<18x32xf32>
    %c1_219 = arith.constant 1 : index
    %c0_220 = arith.constant 0 : index
    %c0_221 = arith.constant 0 : index
    %434 = vector.load %arg14[%c1_219, %c0_220, %c0_221] : memref<2x1x32xf32, #tpu.memory_space<vmem>>, vector<1x1x32xf32>
    %435 = vector.shape_cast %434 : vector<1x1x32xf32> to vector<1x32xf32>
    %436 = vector.broadcast %435 : vector<1x32xf32> to vector<18x32xf32>
    %437 = arith.addf %433, %436 : vector<18x32xf32>
    %c1_222 = arith.constant 1 : index
    %c0_223 = arith.constant 0 : index
    %c0_224 = arith.constant 0 : index
    %438 = vector.load %arg15[%c1_222, %c0_223, %c0_224] : memref<2x1x32xf32, #tpu.memory_space<vmem>>, vector<1x1x32xf32>
    %439 = vector.shape_cast %438 : vector<1x1x32xf32> to vector<1x32xf32>
    %c1_225 = arith.constant 1 : index
    %c0_226 = arith.constant 0 : index
    %c0_227 = arith.constant 0 : index
    %440 = vector.load %arg16[%c1_225, %c0_226, %c0_227] : memref<2x1x32xf32, #tpu.memory_space<vmem>>, vector<1x1x32xf32>
    %441 = vector.shape_cast %440 : vector<1x1x32xf32> to vector<1x32xf32>
    %cst_228 = arith.constant dense<0.000000e+00> : vector<18xf32>
    %442 = vector.multi_reduction <add>, %437, %cst_228 [1] : vector<18x32xf32> to vector<18xf32>
    %443 = vector.shape_cast %442 : vector<18xf32> to vector<18x1xf32>
    %cst_229 = arith.constant 3.200000e+01 : f32
    %444 = vector.broadcast %cst_229 : f32 to vector<18x1xf32>
    %445 = arith.divf %443, %444 : vector<18x1xf32>
    %446 = vector.broadcast %445 : vector<18x1xf32> to vector<18x32xf32>
    %447 = arith.subf %437, %446 : vector<18x32xf32>
    %448 = arith.mulf %447, %447 : vector<18x32xf32>
    %cst_230 = arith.constant dense<0.000000e+00> : vector<18xf32>
    %449 = vector.multi_reduction <add>, %448, %cst_230 [1] : vector<18x32xf32> to vector<18xf32>
    %450 = vector.shape_cast %449 : vector<18xf32> to vector<18x1xf32>
    %cst_231 = arith.constant 3.200000e+01 : f32
    %451 = vector.broadcast %cst_231 : f32 to vector<18x1xf32>
    %452 = arith.divf %450, %451 : vector<18x1xf32>
    %453 = vector.broadcast %445 : vector<18x1xf32> to vector<18x32xf32>
    %454 = arith.subf %437, %453 : vector<18x32xf32>
    %cst_232 = arith.constant 9.99999974E-6 : f32
    %455 = vector.broadcast %cst_232 : f32 to vector<18x1xf32>
    %456 = arith.addf %452, %455 : vector<18x1xf32>
    %457 = math.rsqrt %456 : vector<18x1xf32>
    %458 = vector.broadcast %457 : vector<18x1xf32> to vector<18x32xf32>
    %459 = arith.mulf %454, %458 : vector<18x32xf32>
    %460 = vector.broadcast %439 : vector<1x32xf32> to vector<18x32xf32>
    %461 = arith.mulf %459, %460 : vector<18x32xf32>
    %462 = vector.broadcast %441 : vector<1x32xf32> to vector<18x32xf32>
    %463 = arith.addf %461, %462 : vector<18x32xf32>
    %c1_233 = arith.constant 1 : index
    %c0_234 = arith.constant 0 : index
    %c0_235 = arith.constant 0 : index
    %464 = vector.load %arg17[%c1_233, %c0_234, %c0_235] : memref<2x32x64xf32, #tpu.memory_space<vmem>>, vector<1x32x64xf32>
    %465 = vector.shape_cast %464 : vector<1x32x64xf32> to vector<32x64xf32>
    %cst_236 = arith.constant dense<0.000000e+00> : vector<18x64xf32>
    %466 = tpu.matmul %463, %465, %cst_236 {dimension_numbers = #tpu.dot_dimension_numbers<[1], [0], [0], [1], [0, 0, 1, 1], [], []>} : vector<18x32xf32>, vector<32x64xf32>, vector<18x64xf32> -> vector<18x64xf32>
    %c1_237 = arith.constant 1 : index
    %c0_238 = arith.constant 0 : index
    %c0_239 = arith.constant 0 : index
    %467 = vector.load %arg18[%c1_237, %c0_238, %c0_239] : memref<2x1x64xf32, #tpu.memory_space<vmem>>, vector<1x1x64xf32>
    %468 = vector.shape_cast %467 : vector<1x1x64xf32> to vector<1x64xf32>
    %469 = vector.broadcast %468 : vector<1x64xf32> to vector<18x64xf32>
    %470 = arith.addf %466, %469 : vector<18x64xf32>
    %471 = arith.mulf %470, %470 : vector<18x64xf32>
    %472 = arith.mulf %470, %471 : vector<18x64xf32>
    %cst_240 = arith.constant 4.471500e-02 : f32
    %473 = vector.broadcast %cst_240 : f32 to vector<18x64xf32>
    %474 = arith.mulf %473, %472 : vector<18x64xf32>
    %475 = arith.addf %470, %474 : vector<18x64xf32>
    %cst_241 = arith.constant 0.797884583 : f32
    %476 = vector.broadcast %cst_241 : f32 to vector<18x64xf32>
    %477 = arith.mulf %476, %475 : vector<18x64xf32>
    %478 = math.tanh %477 : vector<18x64xf32>
    %cst_242 = arith.constant 1.000000e+00 : f32
    %479 = vector.broadcast %cst_242 : f32 to vector<18x64xf32>
    %480 = arith.addf %479, %478 : vector<18x64xf32>
    %cst_243 = arith.constant 5.000000e-01 : f32
    %481 = vector.broadcast %cst_243 : f32 to vector<18x64xf32>
    %482 = arith.mulf %481, %480 : vector<18x64xf32>
    %483 = arith.mulf %470, %482 : vector<18x64xf32>
    %c1_244 = arith.constant 1 : index
    %c0_245 = arith.constant 0 : index
    %c0_246 = arith.constant 0 : index
    %484 = vector.load %arg19[%c1_244, %c0_245, %c0_246] : memref<2x64x32xf32, #tpu.memory_space<vmem>>, vector<1x64x32xf32>
    %485 = vector.shape_cast %484 : vector<1x64x32xf32> to vector<64x32xf32>
    %cst_247 = arith.constant dense<0.000000e+00> : vector<18x32xf32>
    %486 = tpu.matmul %483, %485, %cst_247 {dimension_numbers = #tpu.dot_dimension_numbers<[1], [0], [0], [1], [0, 0, 1, 1], [], []>} : vector<18x64xf32>, vector<64x32xf32>, vector<18x32xf32> -> vector<18x32xf32>
    %487 = arith.addf %437, %486 : vector<18x32xf32>
    %c1_248 = arith.constant 1 : index
    %c0_249 = arith.constant 0 : index
    %c0_250 = arith.constant 0 : index
    %488 = vector.load %arg20[%c1_248, %c0_249, %c0_250] : memref<2x1x32xf32, #tpu.memory_space<vmem>>, vector<1x1x32xf32>
    %489 = vector.shape_cast %488 : vector<1x1x32xf32> to vector<1x32xf32>
    %490 = vector.broadcast %489 : vector<1x32xf32> to vector<18x32xf32>
    %491 = arith.addf %487, %490 : vector<18x32xf32>
    %492 = vector.extract_strided_slice %491 {offsets = [0, 0], sizes = [1, 32], strides = [1, 1]} : vector<18x32xf32> to vector<1x32xf32>
    %493 = vector.extract_strided_slice %491 {offsets = [9, 0], sizes = [1, 32], strides = [1, 1]} : vector<18x32xf32> to vector<1x32xf32>
    %494 = tpu.concatenate %492, %493 in 0 : vector<1x32xf32>, vector<1x32xf32> -> vector<2x32xf32>
    %c0_251 = arith.constant 0 : index
    %c0_252 = arith.constant 0 : index
    %495 = vector.load %arg21[%c0_251, %c0_252] : memref<1x32xf32, #tpu.memory_space<vmem>>, vector<1x32xf32>
    %c0_253 = arith.constant 0 : index
    %c0_254 = arith.constant 0 : index
    %496 = vector.load %arg22[%c0_253, %c0_254] : memref<1x32xf32, #tpu.memory_space<vmem>>, vector<1x32xf32>
    %cst_255 = arith.constant dense<0.000000e+00> : vector<2xf32>
    %497 = vector.multi_reduction <add>, %494, %cst_255 [1] : vector<2x32xf32> to vector<2xf32>
    %498 = vector.shape_cast %497 : vector<2xf32> to vector<2x1xf32>
    %cst_256 = arith.constant 3.200000e+01 : f32
    %499 = vector.broadcast %cst_256 : f32 to vector<2x1xf32>
    %500 = arith.divf %498, %499 : vector<2x1xf32>
    %501 = vector.broadcast %500 : vector<2x1xf32> to vector<2x32xf32>
    %502 = arith.subf %494, %501 : vector<2x32xf32>
    %503 = arith.mulf %502, %502 : vector<2x32xf32>
    %cst_257 = arith.constant dense<0.000000e+00> : vector<2xf32>
    %504 = vector.multi_reduction <add>, %503, %cst_257 [1] : vector<2x32xf32> to vector<2xf32>
    %505 = vector.shape_cast %504 : vector<2xf32> to vector<2x1xf32>
    %cst_258 = arith.constant 3.200000e+01 : f32
    %506 = vector.broadcast %cst_258 : f32 to vector<2x1xf32>
    %507 = arith.divf %505, %506 : vector<2x1xf32>
    %508 = vector.broadcast %500 : vector<2x1xf32> to vector<2x32xf32>
    %509 = arith.subf %494, %508 : vector<2x32xf32>
    %cst_259 = arith.constant 9.99999974E-6 : f32
    %510 = vector.broadcast %cst_259 : f32 to vector<2x1xf32>
    %511 = arith.addf %507, %510 : vector<2x1xf32>
    %512 = math.rsqrt %511 : vector<2x1xf32>
    %513 = vector.broadcast %512 : vector<2x1xf32> to vector<2x32xf32>
    %514 = arith.mulf %509, %513 : vector<2x32xf32>
    %515 = vector.broadcast %495 : vector<1x32xf32> to vector<2x32xf32>
    %516 = arith.mulf %514, %515 : vector<2x32xf32>
    %517 = vector.broadcast %496 : vector<1x32xf32> to vector<2x32xf32>
    %518 = arith.addf %516, %517 : vector<2x32xf32>
    %c0_260 = arith.constant 0 : index
    %c0_261 = arith.constant 0 : index
    %519 = vector.load %arg23[%c0_260, %c0_261] : memref<32x2xf32, #tpu.memory_space<vmem>>, vector<32x2xf32>
    %cst_262 = arith.constant dense<0.000000e+00> : vector<2x2xf32>
    %520 = tpu.matmul %518, %519, %cst_262 {dimension_numbers = #tpu.dot_dimension_numbers<[1], [0], [0], [1], [0, 0, 1, 1], [], []>} : vector<2x32xf32>, vector<32x2xf32>, vector<2x2xf32> -> vector<2x2xf32>
    %c0_263 = arith.constant 0 : index
    %c0_264 = arith.constant 0 : index
    %521 = vector.load %arg24[%c0_263, %c0_264] : memref<1x2xf32, #tpu.memory_space<vmem>>, vector<1x2xf32>
    %522 = vector.broadcast %521 : vector<1x2xf32> to vector<2x2xf32>
    %523 = arith.addf %520, %522 : vector<2x2xf32>
    %c0_265 = arith.constant 0 : index
    %c0_266 = arith.constant 0 : index
    %524 = vector.load %arg25[%c0_265, %c0_266] : memref<2x2xf32, #tpu.memory_space<vmem>>, vector<2x2xf32>
    tpu.vector_store %arg25[%c0_265, %c0_266], %523 {strides = array<i32>} : memref<2x2xf32, #tpu.memory_space<vmem>>, vector<2x2xf32>,
    return
  }
}

</mosaic_0001>

<llo_original>
// kernel: tpu_custom_call.1
$region0: #{tpu_custom_call.1}
  #allocation0 [shape = 'u32[]', space=smem, size = 0x4, offset = 0x4, fixed_abs, tag = 'smem constant byte address 0x4 - core index']
  #allocation1 [shape = 'u32[144,128]{1,0:T(1,128)}', space=vmem, size = 0x12000, scoped, tag = 'internal scratch']
  %s0 = inlined_call_operand.hbm [shape: s32[2,8], index: 0, kind: input, shape index: {}]
  %s1 = inlined_call_operand.hbm [shape: s32[2,8], index: 1, kind: input, shape index: {}]
  %s2 = inlined_call_operand.vmem [shape: f32[50,32], index: 2, kind: input, shape index: {}]
  %s3 = inlined_call_operand.hbm [shape: f32[1,32], index: 3, kind: input, shape index: {}]
  %s4 = inlined_call_operand.hbm [shape: f32[9,32], index: 4, kind: input, shape index: {}]
  %s5 = inlined_call_operand.vmem [shape: f32[2,1,32], index: 5, kind: input, shape index: {}]
  %s6 = inlined_call_operand.vmem [shape: f32[2,1,32], index: 6, kind: input, shape index: {}]
  %s7 = inlined_call_operand.vmem [shape: f32[2,32,32], index: 7, kind: input, shape index: {}]
  %s8 = inlined_call_operand.vmem [shape: f32[2,32,32], index: 8, kind: input, shape index: {}]
  %s9 = inlined_call_operand.vmem [shape: f32[2,32,32], index: 9, kind: input, shape index: {}]
  %s10 = inlined_call_operand.vmem [shape: f32[2,1,32], index: 10, kind: input, shape index: {}]
  %s11 = inlined_call_operand.vmem [shape: f32[2,1,32], index: 11, kind: input, shape index: {}]
  %s12 = inlined_call_operand.vmem [shape: f32[2,1,32], index: 12, kind: input, shape index: {}]
  %s13 = inlined_call_operand.vmem [shape: f32[2,32,32], index: 13, kind: input, shape index: {}]
  %s14 = inlined_call_operand.vmem [shape: f32[2,1,32], index: 14, kind: input, shape index: {}]
  %s15 = inlined_call_operand.vmem [shape: f32[2,1,32], index: 15, kind: input, shape index: {}]
  %s16 = inlined_call_operand.vmem [shape: f32[2,1,32], index: 16, kind: input, shape index: {}]
  %s17 = inlined_call_operand.hbm [shape: f32[2,32,64], index: 17, kind: input, shape index: {}]
  %s18 = inlined_call_operand.vmem [shape: f32[2,1,64], index: 18, kind: input, shape index: {}]
  %s19 = inlined_call_operand.vmem [shape: f32[2,64,32], index: 19, kind: input, shape index: {}]
  %s20 = inlined_call_operand.vmem [shape: f32[2,1,32], index: 20, kind: input, shape index: {}]
  %s21 = inlined_call_operand.vmem [shape: f32[1,32], index: 21, kind: input, shape index: {}]
  %s22 = inlined_call_operand.vmem [shape: f32[1,32], index: 22, kind: input, shape index: {}]
  %s23 = inlined_call_operand.vmem [shape: f32[32,2], index: 23, kind: input, shape index: {}]
  %s24 = inlined_call_operand.vmem [shape: f32[1,2], index: 24, kind: input, shape index: {}]
  %s25 = inlined_call_operand.hbm [shape: f32[2,2], index: 25, kind: output, shape index: {}]
  %s26 = sld [smem:[#allocation0]]
  $region130: #{tpu_custom_call.1} parent=0
    _
  %s28 = ssub.s32 1, %s26
  %s29 = scalar_select 0, %s28, %s26
  $region1: #{tpu_custom_call.1} parent=0
    #allocation2 [shape = 'u8[1024]{0}', space=smem, size = 0x400, scoped, tag = 'input window, operand 0, single buffered']
    #allocation3 [shape = 's32[1]{0}', space=sflag, size = 0x4, scoped, tag = 'scoped memory for tpu_custom_call.1']
    #allocation4 [shape = 's32[1]{0}', space=sflag, size = 0x4, scoped, tag = 'scoped memory for tpu_custom_call.1']
    #allocation5 [shape = 's32[1]{0}', space=sflag, size = 0x4, scoped, tag = 'scoped memory for tpu_custom_call.1']
    #allocation6 [shape = 'u8[1024]{0}', space=vmem, size = 0x400, scoped, tag = 'input window, operand 1, single buffered']
    #allocation7 [shape = 'u8[512]{0}', space=vmem, size = 0x400, scoped, tag = 'input window, operand 3, single buffered']
    #allocation8 [shape = 's32[1]{0}', space=sflag, size = 0x4, scoped, tag = 'scoped memory for tpu_custom_call.1']
    #allocation9 [shape = 'u8[8192]{0}', space=vmem, size = 0x2000, scoped, tag = 'input window, operand 4, single buffered']
    #allocation10 [shape = 'u8[32768]{0}', space=vmem, size = 0x8000, scoped, tag = 'input window, operand 17, single buffered']
    #allocation11 [shape = 's32[1]{0}', space=sflag, size = 0x4, scoped, tag = 'scoped memory for tpu_custom_call.1']
    #allocation12 [shape = 'u8[1024]{0}', space=vmem, size = 0x400, scoped, tag = 'output window, operand 0, single buffered']
    %30 = vsyncpa [#allocation5], 0
    %31 = vsyncpa [#allocation3], 0
    %32 = vsyncpa [#allocation8], 0
    %33 = vsyncpa [#allocation11], 0
    %34 = vsyncpa [#allocation4], 0
    // Predicated region
    $region2: #{tpu_custom_call.1} parent=1 // pred_check
      _
    $region3: #{tpu_custom_call.1} parent=1 // pred_check_branch
      %36 = sbr.rel (0) target = $region5
    $region4: #{tpu_custom_call.1} parent=1 // pred_region
      %s38 = ssub.s32 32, 32
      %39 = vsyncadd [#allocation5], %s38
      %42 = dma.hbm_to_smem %s0, 32, [#allocation2], [#allocation5]
    $region5: #{tpu_custom_call.1} parent=1 // pred_fallthru
      _
    // Predicated region
    $region6: #{tpu_custom_call.1} parent=1 // pred_check
      _
    $region7: #{tpu_custom_call.1} parent=1 // pred_check_branch
      %44 = sbr.rel (0) target = $region9
    $region8: #{tpu_custom_call.1} parent=1 // pred_region
      %s46 = ssub.s32 32, 32
      %47 = vsyncadd [#allocation3], %s46
      %s49 = sshll.u32 [#allocation6], 4
      %s50 = int_to_ptr.vmem [resolvable:$true] %s49
      %52 = dma.hbm_to_vmem [thread:$0]  %s1, 32, %s50, [#allocation3]
    $region9: #{tpu_custom_call.1} parent=1 // pred_fallthru
      _
    // Predicated region
    $region10: #{tpu_custom_call.1} parent=1 // pred_check
      _
    $region11: #{tpu_custom_call.1} parent=1 // pred_check_branch
      %54 = sbr.rel (0) target = $region13
    $region12: #{tpu_custom_call.1} parent=1 // pred_region
      _
    $region13: #{tpu_custom_call.1} parent=1 // pred_fallthru
      _
    // Predicated region
    $region14: #{tpu_custom_call.1} parent=1 // pred_check
      _
    $region15: #{tpu_custom_call.1} parent=1 // pred_check_branch
      %56 = sbr.rel (0) target = $region17
    $region16: #{tpu_custom_call.1} parent=1 // pred_region
      %s58 = ssub.s32 16, 16
      %59 = vsyncadd [#allocation8], %s58
      %s61 = sshll.u32 [#allocation7], 4
      %s62 = int_to_ptr.vmem [resolvable:$true] %s61
      %64 = dma.hbm_to_vmem [thread:$0]  %s3, 16, %s62, [#allocation8]
    $region17: #{tpu_custom_call.1} parent=1 // pred_fallthru
      _
    // Predicated region
    $region18: #{tpu_custom_call.1} parent=1 // pred_check
      _
    $region19: #{tpu_custom_call.1} parent=1 // pred_check_branch
      %66 = sbr.rel (0) target = $region21
    $region20: #{tpu_custom_call.1} parent=1 // pred_region
      %s68 = ssub.s32 256, 256
      %69 = vsyncadd [#allocation8], %s68
      %s70 = sshll.u32 [#allocation9], 4
      %s71 = int_to_ptr.vmem [resolvable:$true] %s70
      %76 = dma.hbm_to_vmem [thread:$0]  %s4, 256, %s71, [#allocation8], 128, 128, 8
    $region21: #{tpu_custom_call.1} parent=1 // pred_fallthru
      _
    // Predicated region
    $region22: #{tpu_custom_call.1} parent=1 // pred_check
      _
    $region23: #{tpu_custom_call.1} parent=1 // pred_check_branch
      %78 = sbr.rel (0) target = $region25
    $region24: #{tpu_custom_call.1} parent=1 // pred_region
      _
    $region25: #{tpu_custom_call.1} parent=1 // pred_fallthru
      _
    // Predicated region
    $region26: #{tpu_custom_call.1} parent=1 // pred_check
      _
    $region27: #{tpu_custom_call.1} parent=1 // pred_check_branch
      %80 = sbr.rel (0) target = $region29
    $region28: #{tpu_custom_call.1} parent=1 // pred_region
      _
    $region29: #{tpu_custom_call.1} parent=1 // pred_fallthru
      _
    // Predicated region
    $region30: #{tpu_custom_call.1} parent=1 // pred_check
      _
    $region31: #{tpu_custom_call.1} parent=1 // pred_check_branch
      %82 = sbr.rel (0) target = $region33
    $region32: #{tpu_custom_call.1} parent=1 // pred_region
      _
    $region33: #{tpu_custom_call.1} parent=1 // pred_fallthru
      _
    // Predicated region
    $region34: #{tpu_custom_call.1} parent=1 // pred_check
      _
    $region35: #{tpu_custom_call.1} parent=1 // pred_check_branch
      %84 = sbr.rel (0) target = $region37
    $region36: #{tpu_custom_call.1} parent=1 // pred_region
      _
    $region37: #{tpu_custom_call.1} parent=1 // pred_fallthru
      _
    // Predicated region
    $region38: #{tpu_custom_call.1} parent=1 // pred_check
      _
    $region39: #{tpu_custom_call.1} parent=1 // pred_check_branch
      %86 = sbr.rel (0) target = $region41
    $region40: #{tpu_custom_call.1} parent=1 // pred_region
      _
    $region41: #{tpu_custom_call.1} parent=1 // pred_fallthru
      _
    // Predicated region
    $region42: #{tpu_custom_call.1} parent=1 // pred_check
      _
    $region43: #{tpu_custom_call.1} parent=1 // pred_check_branch
      %88 = sbr.rel (0) target = $region45
    $region44: #{tpu_custom_call.1} parent=1 // pred_region
      _
    $region45: #{tpu_custom_call.1} parent=1 // pred_fallthru
      _
    // Predicated region
    $region46: #{tpu_custom_call.1} parent=1 // pred_check
      _
    $region47: #{tpu_custom_call.1} parent=1 // pred_check_branch
      %90 = sbr.rel (0) target = $region49
    $region48: #{tpu_custom_call.1} parent=1 // pred_region
      _
    $region49: #{tpu_custom_call.1} parent=1 // pred_fallthru
      _
    // Predicated region
    $region50: #{tpu_custom_call.1} parent=1 // pred_check
      _
    $region51: #{tpu_custom_call.1} parent=1 // pred_check_branch
      %92 = sbr.rel (0) target = $region53
    $region52: #{tpu_custom_call.1} parent=1 // pred_region
      _
    $region53: #{tpu_custom_call.1} parent=1 // pred_fallthru
      _
    // Predicated region
    $region54: #{tpu_custom_call.1} parent=1 // pred_check
      _
    $region55: #{tpu_custom_call.1} parent=1 // pred_check_branch
      %94 = sbr.rel (0) target = $region57
    $region56: #{tpu_custom_call.1} parent=1 // pred_region
      _
    $region57: #{tpu_custom_call.1} parent=1 // pred_fallthru
      _
    // Predicated region
    $region58: #{tpu_custom_call.1} parent=1 // pred_check
      _
    $region59: #{tpu_custom_call.1} parent=1 // pred_check_branch
      %96 = sbr.rel (0) target = $region61
    $region60: #{tpu_custom_call.1} parent=1 // pred_region
      _
    $region61: #{tpu_custom_call.1} parent=1 // pred_fallthru
      _
    // Predicated region
    $region62: #{tpu_custom_call.1} parent=1 // pred_check
      _
    $region63: #{tpu_custom_call.1} parent=1 // pred_check_branch
      %98 = sbr.rel (0) target = $region65
    $region64: #{tpu_custom_call.1} parent=1 // pred_region
      _
    $region65: #{tpu_custom_call.1} parent=1 // pred_fallthru
      _
    // Predicated region
    $region66: #{tpu_custom_call.1} parent=1 // pred_check
      _
    $region67: #{tpu_custom_call.1} parent=1 // pred_check_branch
      %100 = sbr.rel (0) target = $region69
    $region68: #{tpu_custom_call.1} parent=1 // pred_region
      _
    $region69: #{tpu_custom_call.1} parent=1 // pred_fallthru
      _
    // Predicated region
    $region70: #{tpu_custom_call.1} parent=1 // pred_check
      _
    $region71: #{tpu_custom_call.1} parent=1 // pred_check_branch
      %102 = sbr.rel (0) target = $region73
    $region72: #{tpu_custom_call.1} parent=1 // pred_region
      %s104 = ssub.s32 1024, 1024
      %105 = vsyncadd [#allocation11], %s104
      %s106 = sshll.u32 [#allocation10], 4
      %s107 = int_to_ptr.vmem [resolvable:$true] %s106
      %112 = dma.hbm_to_vmem [thread:$0]  %s17, 1024, %s107, [#allocation11], 128, 128, 8
    $region73: #{tpu_custom_call.1} parent=1 // pred_fallthru
      _
    // Predicated region
    $region74: #{tpu_custom_call.1} parent=1 // pred_check
      _
    $region75: #{tpu_custom_call.1} parent=1 // pred_check_branch
      %114 = sbr.rel (0) target = $region77
    $region76: #{tpu_custom_call.1} parent=1 // pred_region
      _
    $region77: #{tpu_custom_call.1} parent=1 // pred_fallthru
      _
    // Predicated region
    $region78: #{tpu_custom_call.1} parent=1 // pred_check
      _
    $region79: #{tpu_custom_call.1} parent=1 // pred_check_branch
      %116 = sbr.rel (0) target = $region81
    $region80: #{tpu_custom_call.1} parent=1 // pred_region
      _
    $region81: #{tpu_custom_call.1} parent=1 // pred_fallthru
      _
    // Predicated region
    $region82: #{tpu_custom_call.1} parent=1 // pred_check
      _
    $region83: #{tpu_custom_call.1} parent=1 // pred_check_branch
      %118 = sbr.rel (0) target = $region85
    $region84: #{tpu_custom_call.1} parent=1 // pred_region
      _
    $region85: #{tpu_custom_call.1} parent=1 // pred_fallthru
      _
    // Predicated region
    $region86: #{tpu_custom_call.1} parent=1 // pred_check
      _
    $region87: #{tpu_custom_call.1} parent=1 // pred_check_branch
      %120 = sbr.rel (0) target = $region89
    $region88: #{tpu_custom_call.1} parent=1 // pred_region
      _
    $region89: #{tpu_custom_call.1} parent=1 // pred_fallthru
      _
    // Predicated region
    $region90: #{tpu_custom_call.1} parent=1 // pred_check
      _
    $region91: #{tpu_custom_call.1} parent=1 // pred_check_branch
      %122 = sbr.rel (0) target = $region93
    $region92: #{tpu_custom_call.1} parent=1 // pred_region
      _
    $region93: #{tpu_custom_call.1} parent=1 // pred_fallthru
      _
    // Predicated region
    $region94: #{tpu_custom_call.1} parent=1 // pred_check
      _
    $region95: #{tpu_custom_call.1} parent=1 // pred_check_branch
      %124 = sbr.rel (0) target = $region97
    $region96: #{tpu_custom_call.1} parent=1 // pred_region
      _
    $region97: #{tpu_custom_call.1} parent=1 // pred_fallthru
      _
    // Predicated region
    $region98: #{tpu_custom_call.1} parent=1 // pred_check
      _
    $region99: #{tpu_custom_call.1} parent=1 // pred_check_branch
      %126 = sbr.rel (0) target = $region101
    $region100: #{tpu_custom_call.1} parent=1 // pred_region
      _
    $region101: #{tpu_custom_call.1} parent=1 // pred_fallthru
      _
    // Predicated region
    $region102: #{tpu_custom_call.1} parent=1 // pred_check
      _
    $region103: #{tpu_custom_call.1} parent=1 // pred_check_branch
      %128 = sbr.rel (0) target = $region105
    $region104: #{tpu_custom_call.1} parent=1 // pred_region
      %129 = dma.done [#allocation5], 32
    $region105: #{tpu_custom_call.1} parent=1 // pred_fallthru
      _
    // Predicated region
    $region106: #{tpu_custom_call.1} parent=1 // pred_check
      _
    $region107: #{tpu_custom_call.1} parent=1 // pred_check_branch
      %131 = sbr.rel (0) target = $region109
    $region108: #{tpu_custom_call.1} parent=1 // pred_region
      %132 = dma.done [#allocation3], 32
    $region109: #{tpu_custom_call.1} parent=1 // pred_fallthru
      _
    // Predicated region
    $region110: #{tpu_custom_call.1} parent=1 // pred_check
      _
    $region111: #{tpu_custom_call.1} parent=1 // pred_check_branch
      %134 = sbr.rel (0) target = $region113
    $region112: #{tpu_custom_call.1} parent=1 // pred_region
      %135 = dma.done [#allocation8], 16
    $region113: #{tpu_custom_call.1} parent=1 // pred_fallthru
      _
    // Predicated region
    $region114: #{tpu_custom_call.1} parent=1 // pred_check
      _
    $region115: #{tpu_custom_call.1} parent=1 // pred_check_branch
      %137 = sbr.rel (0) target = $region117
    $region116: #{tpu_custom_call.1} parent=1 // pred_region
      %138 = dma.done [#allocation8], 256
    $region117: #{tpu_custom_call.1} parent=1 // pred_fallthru
      _
    // Predicated region
    $region118: #{tpu_custom_call.1} parent=1 // pred_check
      _
    $region119: #{tpu_custom_call.1} parent=1 // pred_check_branch
      %140 = sbr.rel (0) target = $region121
    $region120: #{tpu_custom_call.1} parent=1 // pred_region
      %141 = dma.done [#allocation11], 1024
    $region121: #{tpu_custom_call.1} parent=1 // pred_fallthru
      _
    %142 = sfence
    %v143 = vlaneseq
    %v144 = vand.u32 %v143, 127
    %s145 = sld [smem:[#allocation2]]
    %v146 = vstv %s145
    %vm147 = vcmp.eq.s32.totalorder %v144, %v146
    %v148 = vsel %vm147, 1.0, 0.0
    %s149 = sld [smem:[#allocation2 + $0x1]]
    %v150 = vstv %s149
    %vm151 = vcmp.eq.s32.totalorder %v144, %v150
    %v152 = vsel %vm151, 1.0, 0.0
    %s153 = sld [smem:[#allocation2 + $0x2]]
    %v154 = vstv %s153
    %vm155 = vcmp.eq.s32.totalorder %v144, %v154
    %v156 = vsel %vm155, 1.0, 0.0
    %s157 = sld [smem:[#allocation2 + $0x3]]
    %v158 = vstv %s157
    %vm159 = vcmp.eq.s32.totalorder %v144, %v158
    %v160 = vsel %vm159, 1.0, 0.0
    %s161 = sld [smem:[#allocation2 + $0x4]]
    %v162 = vstv %s161
    %vm163 = vcmp.eq.s32.totalorder %v144, %v162
    %v164 = vsel %vm163, 1.0, 0.0
    %s165 = sld [smem:[#allocation2 + $0x5]]
    %v166 = vstv %s165
    %vm167 = vcmp.eq.s32.totalorder %v144, %v166
    %v168 = vsel %vm167, 1.0, 0.0
    %s169 = sld [smem:[#allocation2 + $0x6]]
    %v170 = vstv %s169
    %vm171 = vcmp.eq.s32.totalorder %v144, %v170
    %v172 = vsel %vm171, 1.0, 0.0
    %s173 = sld [smem:[#allocation2 + $0x7]]
    %v174 = vstv %s173
    %vm175 = vcmp.eq.s32.totalorder %v144, %v174
    %v176 = vsel %vm175, 1.0, 0.0
    %s177 = sld [smem:[#allocation2 + $0x80]]
    %v178 = vstv %s177
    %vm179 = vcmp.eq.s32.totalorder %v144, %v178
    %v180 = vsel %vm179, 1.0, 0.0
    %s181 = sld [smem:[#allocation2 + $0x81]]
    %v182 = vstv %s181
    %vm183 = vcmp.eq.s32.totalorder %v144, %v182
    %v184 = vsel %vm183, 1.0, 0.0
    %s185 = sld [smem:[#allocation2 + $0x82]]
    %v186 = vstv %s185
    %vm187 = vcmp.eq.s32.totalorder %v144, %v186
    %v188 = vsel %vm187, 1.0, 0.0
    %s189 = sld [smem:[#allocation2 + $0x83]]
    %v190 = vstv %s189
    %vm191 = vcmp.eq.s32.totalorder %v144, %v190
    %v192 = vsel %vm191, 1.0, 0.0
    %s193 = sld [smem:[#allocation2 + $0x84]]
    %v194 = vstv %s193
    %vm195 = vcmp.eq.s32.totalorder %v144, %v194
    %v196 = vsel %vm195, 1.0, 0.0
    %s197 = sld [smem:[#allocation2 + $0x85]]
    %v198 = vstv %s197
    %vm199 = vcmp.eq.s32.totalorder %v144, %v198
    %v200 = vsel %vm199, 1.0, 0.0
    %s201 = sld [smem:[#allocation2 + $0x86]]
    %v202 = vstv %s201
    %vm203 = vcmp.eq.s32.totalorder %v144, %v202
    %v204 = vsel %vm203, 1.0, 0.0
    %s205 = sld [smem:[#allocation2 + $0x87]]
    %v206 = vstv %s205
    %vm207 = vcmp.eq.s32.totalorder %v144, %v206
    %v208 = vsel %vm207, 1.0, 0.0
    %vm209 = vcmask 1040384
    %v210 = vsel %vm209, %v148, %v152
    %vm211 = vcmask 1041408
    %v212 = vsel %vm211, %v210, %v156
    %vm213 = vcmask 1042432
    %v214 = vsel %vm213, %v212, %v160
    %vm215 = vcmask 1043456
    %v216 = vsel %vm215, %v214, %v164
    %vm217 = vcmask 1044480
    %v218 = vsel %vm217, %v216, %v168
    %vm219 = vcmask 1045504
    %v220 = vsel %vm219, %v218, %v172
    %vm221 = vcmask 1046528
    %v222 = vsel %vm221, %v220, %v176
    %v223 = vsel %vm209, %v180, %v184
    %v224 = vsel %vm211, %v223, %v188
    %v225 = vsel %vm213, %v224, %v192
    %v226 = vsel %vm215, %v225, %v196
    %v227 = vsel %vm217, %v226, %v200
    %v228 = vsel %vm219, %v227, %v204
    %v229 = vsel %vm221, %v228, %v208
    %v230 = vld [vmem:[%s2] sm:$0xff]
    %v231 = vld [vmem:[%s2 + $0x8] sm:$0xff]
    %v232 = vld [vmem:[%s2 + $0x10] sm:$0xff]
    %v233 = vld [vmem:[%s2 + $0x18] sm:$0xff]
    %v234 = vld [vmem:[%s2 + $0x20] sm:$0xff]
    %v235 = vld [vmem:[%s2 + $0x28] sm:$0xff]
    %v236 = vld [vmem:[%s2 + $0x30] sm:$0x3]
    %vm237 = vcmask 408576
    %v239 = vsel %vm237, %v222, 0
    %v242 = vsel %vm237, %v229, 0
    %v245 = vsel %vm211, %v236, 0
    %247 = vmatprep.subr.mxu0 0.0
    %248 = vmatpush1.msra.mxu0 %v230
    %249 = vmatprep.subr.mxu0 0.0
    %250 = vmatpush1.msra.mxu0 %v231
    %251 = vmatprep.subr.mxu0 0.0
    %252 = vmatpush1.msra.mxu0 %v232
    %253 = vmatprep.subr.mxu0 0.0
    %254 = vmatpush1.msra.mxu0 %v233
    %255 = vmatprep.subr.mxu0 0.0
    %256 = vmatpush1.msra.mxu0 %v234
    %257 = vmatprep.subr.mxu0 0.0
    %258 = vmatpush1.msra.mxu0 %v235
    %259 = vmatprep.subr.mxu0 0.0
    %260 = vmatpush1.msra.mxu0 %v245
    %261 = vmatprep.subr.mxu0 0.0
    %262 = vmatpush1.msra.mxu0 0.0
    %263 = vmatprep.subr.mxu0 0.0
    %264 = vmatpush1.msra.mxu0 0.0
    %265 = vmatprep.subr.mxu0 0.0
    %266 = vmatpush1.msra.mxu0 0.0
    %267 = vmatprep.subr.mxu0 0.0
    %268 = vmatpush1.msra.mxu0 0.0
    %269 = vmatprep.subr.mxu0 0.0
    %270 = vmatpush1.msra.mxu0 0.0
    %271 = vmatprep.subr.mxu0 0.0
    %272 = vmatpush1.msra.mxu0 0.0
    %273 = vmatprep.subr.mxu0 0.0
    %274 = vmatpush1.msra.mxu0 0.0
    %275 = vmatprep.subr.mxu0 0.0
    %276 = vmatpush1.msra.mxu0 0.0
    %277 = vmatprep.subr.mxu0 0.0
    %278 = vmatpush1.msra.mxu0 0.0
    %279 = vmatprep.subr.mxu0 0.0
    %280 = vmatpush1.msra.mxu0 0.0
    %281 = vmatprep.subr.mxu0 0.0
    %282 = vmatpush1.msra.mxu0 0.0
    %283 = vmatprep.subr.mxu0 0.0
    %284 = vmatpush1.msra.mxu0 0.0
    %285 = vmatprep.subr.mxu0 0.0
    %286 = vmatpush1.msra.mxu0 0.0
    %287 = vmatprep.subr.mxu0 0.0
    %288 = vmatpush1.msra.mxu0 0.0
    %289 = vmatprep.subr.mxu0 0.0
    %290 = vmatpush1.msra.mxu0 0.0
    %291 = vmatprep.subr.mxu0 0.0
    %292 = vmatpush1.msra.mxu0 0.0
    %293 = vmatprep.subr.mxu0 0.0
    %294 = vmatpush1.msra.mxu0 0.0
    %295 = vmatprep.subr.mxu0 0.0
    %296 = vmatpush1.msra.mxu0 0.0
    %297 = vmatprep.subr.mxu0 0.0
    %298 = vmatpush1.msra.mxu0 0.0
    %299 = vmatprep.subr.mxu0 0.0
    %300 = vmatpush1.msra.mxu0 0.0
    %301 = vmatprep.subr.mxu0 0.0
    %302 = vmatpush1.msra.mxu0 0.0
    %303 = vmatprep.subr.mxu0 0.0
    %304 = vmatpush1.msra.mxu0 0.0
    %305 = vmatprep.subr.mxu0 0.0
    %306 = vmatpush1.msra.mxu0 0.0
    %307 = vmatprep.subr.mxu0 0.0
    %308 = vmatpush1.msra.mxu0 0.0
    %309 = vmatprep.subr.mxu0 0.0
    %310 = vmatpush1.msra.mxu0 0.0
    %311 = vmatprep.mubr.f32.mxu0 0.0
    %312 = vmatmul.mubr.f32.gmra.mrb[0].mxu0 %v239
    %v313 = vpop.f32.mrb[0].mxu0
    %v314 = vadd.f32 0.0, %v313
    %v315 = vpop.f32.mrb[0].mxu0
    %316 = vmatprep.mubr.f32.mxu0 0.0
    %317 = vmatmul.mubr.f32.gmra.mrb[0].mxu0 %v242
    %v318 = vpop.f32.mrb[0].mxu0
    %v319 = vadd.f32 0.0, %v318
    %v320 = vpop.f32.mrb[0].mxu0
    %321 = vdwg.mxu0
    %v322 = vld [vmem:[#allocation7] sm:$0x1]
    %v323 = vld [vmem:[#allocation9] sm:$0xff]
    %v324 = vld [vmem:[#allocation9 + $0x8] sm:$0x1]
    %v326 = vrot.slane %v314, 7
    %v329 = vlaneseq
    %v330 = vshrl.u32 %v329, 7
    %v331 = vsub.s32 0, %v330
    %v332 = vrot.slane %v322, %v331
    %v335 = vrot.slane %v319, 6
    %v337 = vsel %vm209, %v322, %v326
    %v338 = vsel %vm209, %v326, %v332
    %v339 = vsel %vm211, %v338, %v335
    %v342 = vrot.slane %v323, 7
    %v343 = vrot.slane %v324, 7
    %v344 = vsel %vm209, %v342, %v343
    %v347 = vsel %vm209, %v324, %v342
    %v348 = vadd.f32 %v337, %v323
    %v349 = vadd.f32 %v339, %v347
    %v350 = vadd.f32 %v335, %v344
    %v351 = vld [vmem:[#allocation6] sm:$0x3]
    %vm352 = vcmp.eq.s32.totalorder %v351, 0
    %v353 = vsel %vm352, -1e+30, 0.0
    %355 = vrot.lane.b32.xlu0 %v353, 1
    %v356 = vpop.permute.xlu0 %355
    %vm358 = vcmask 7168
    %v359 = vsel %vm358, 0.0, %v356
    %v361 = vrot.slane %v359, 1
    %362 = vrot.lane.b32.xlu0 %v361, 9
    %v363 = vpop.permute.xlu0 %362
    %vm365 = vcmask 72704
    %v366 = vsel %vm365, %v359, %v363
    %v367 = vsel %vm365, 0.0, -1e+30
    %v368 = vlaneseq
    %v369 = vshrl.u32 %v368, 7
    %v370 = vsub.s32 0, %v369
    %v371 = vrot.slane %v367, %v370
    %v372 = vsel %vm365, -1e+30, 0.0
    %v373 = vlaneseq
    %v374 = vshrl.u32 %v373, 7
    %v375 = vsub.s32 0, %v374
    %v376 = vrot.slane %v372, %v375
    %v377 = vsel %vm209, %v371, %v376
    %v378 = vlaneseq
    %v379 = vshrl.u32 %v378, 7
    %v380 = vsub.s32 0, %v379
    %v381 = vrot.slane %v366, %v380
    %v382 = vadd.f32 %v371, %v381
    %v383 = vadd.f32 %v377, %v381
    %v384 = vadd.f32 %v376, %v381
    %v385 = vld [vmem:[%s5] sm:$0x1]
    %v386 = vld [vmem:[%s6] sm:$0x1]
    %vm387 = vcmask 261120
    %v388 = vsel %vm387, %v348, 0.0
    %389 = vadd.xlane.f32.xlu0 %v388
    %v390 = vpop.xlane.xlu0 %389
    %v391 = vsel %vm387, %v349, 0.0
    %392 = vadd.xlane.f32.xlu0 %v391
    %v393 = vpop.xlane.xlu0 %392
    %vm394 = vcmask 254976
    %v395 = vsel %vm394, %v350, 0.0
    %396 = vadd.xlane.f32.xlu0 %v395
    %v397 = vpop.xlane.xlu0 %396
    %v398 = vrcp.pop 32.0
    %v399 = vmul.f32 %v390, %v398
    %v400 = vmul.f32 %v393, %v398
    %v401 = vmul.f32 %v397, %v398
    %v402 = vsub.f32 %v348, %v399
    %v403 = vsub.f32 %v349, %v400
    %v404 = vsub.f32 %v350, %v401
    %v405 = vmul.f32 %v402, %v402
    %v406 = vmul.f32 %v403, %v403
    %v407 = vmul.f32 %v404, %v404
    %v408 = vsel %vm387, %v405, 0.0
    %409 = vadd.xlane.f32.xlu0 %v408
    %v410 = vpop.xlane.xlu0 %409
    %v411 = vsel %vm387, %v406, 0.0
    %412 = vadd.xlane.f32.xlu0 %v411
    %v413 = vpop.xlane.xlu0 %412
    %v414 = vsel %vm394, %v407, 0.0
    %415 = vadd.xlane.f32.xlu0 %v414
    %v416 = vpop.xlane.xlu0 %415
    %v417 = vmul.f32 %v410, %v398
    %v418 = vmul.f32 %v413, %v398
    %v419 = vmul.f32 %v416, %v398
    %v420 = vadd.f32 %v417, 1e-05
    %v421 = vadd.f32 %v418, 1e-05
    %v422 = vadd.f32 %v419, 1e-05
    %v423 = vrsqrt.pop %v420
    %v424 = vrsqrt.pop %v421
    %v425 = vrsqrt.pop %v422
    %v426 = vmul.f32 %v402, %v423
    %v427 = vmul.f32 %v403, %v424
    %v428 = vmul.f32 %v404, %v425
    %v430 = vlaneseq
    %v431 = vshrl.u32 %v430, 7
    %v432 = vsub.s32 0, %v431
    %v433 = vrot.slane %v385, %v432
    %v435 = vmul.f32 %v426, %v433
    %v436 = vmul.f32 %v427, %v433
    %v437 = vmul.f32 %v428, %v433
    %v439 = vlaneseq
    %v440 = vshrl.u32 %v439, 7
    %v441 = vsub.s32 0, %v440
    %v442 = vrot.slane %v386, %v441
    %v444 = vadd.f32 %v435, %v442
    %v445 = vadd.f32 %v436, %v442
    %v446 = vadd.f32 %v437, %v442
    %v447 = vld [vmem:[%s7] sm:$0xff]
    %v448 = vld [vmem:[%s7 + $0x8] sm:$0xff]
    %v449 = vld [vmem:[%s7 + $0x10] sm:$0xff]
    %v450 = vld [vmem:[%s7 + $0x18] sm:$0xff]
    %v451 = vld [vmem:[%s10] sm:$0x1]
    %v453 = vlaneseq
    %v454 = vshrl.u32 %v453, 7
    %v455 = vsub.s32 0, %v454
    %v456 = vrot.slane %v451, %v455
    %v459 = vsel %vm387, %v444, 0
    %v462 = vsel %vm387, %v445, 0
    %v465 = vsel %vm387, %v446, 0
    %467 = vmatprep.subr.mxu0 0.0
    %468 = vmatpush1.msra.mxu0 %v447
    %469 = vmatprep.subr.mxu0 0.0
    %470 = vmatpush1.msra.mxu0 %v448
    %471 = vmatprep.subr.mxu0 0.0
    %472 = vmatpush1.msra.mxu0 %v449
    %473 = vmatprep.subr.mxu0 0.0
    %474 = vmatpush1.msra.mxu0 %v450
    %475 = vmatprep.subr.mxu0 0.0
    %476 = vmatpush1.msra.mxu0 0.0
    %477 = vmatprep.subr.mxu0 0.0
    %478 = vmatpush1.msra.mxu0 0.0
    %479 = vmatprep.subr.mxu0 0.0
    %480 = vmatpush1.msra.mxu0 0.0
    %481 = vmatprep.subr.mxu0 0.0
    %482 = vmatpush1.msra.mxu0 0.0
    %483 = vmatprep.subr.mxu0 0.0
    %484 = vmatpush1.msra.mxu0 0.0
    %485 = vmatprep.subr.mxu0 0.0
    %486 = vmatpush1.msra.mxu0 0.0
    %487 = vmatprep.subr.mxu0 0.0
    %488 = vmatpush1.msra.mxu0 0.0
    %489 = vmatprep.subr.mxu0 0.0
    %490 = vmatpush1.msra.mxu0 0.0
    %491 = vmatprep.subr.mxu0 0.0
    %492 = vmatpush1.msra.mxu0 0.0
    %493 = vmatprep.subr.mxu0 0.0
    %494 = vmatpush1.msra.mxu0 0.0
    %495 = vmatprep.subr.mxu0 0.0
    %496 = vmatpush1.msra.mxu0 0.0
    %497 = vmatprep.subr.mxu0 0.0
    %498 = vmatpush1.msra.mxu0 0.0
    %499 = vmatprep.subr.mxu0 0.0
    %500 = vmatpush1.msra.mxu0 0.0
    %501 = vmatprep.subr.mxu0 0.0
    %502 = vmatpush1.msra.mxu0 0.0
    %503 = vmatprep.subr.mxu0 0.0
    %504 = vmatpush1.msra.mxu0 0.0
    %505 = vmatprep.subr.mxu0 0.0
    %506 = vmatpush1.msra.mxu0 0.0
    %507 = vmatprep.subr.mxu0 0.0
    %508 = vmatpush1.msra.mxu0 0.0
    %509 = vmatprep.subr.mxu0 0.0
    %510 = vmatpush1.msra.mxu0 0.0
    %511 = vmatprep.subr.mxu0 0.0
    %512 = vmatpush1.msra.mxu0 0.0
    %513 = vmatprep.subr.mxu0 0.0
    %514 = vmatpush1.msra.mxu0 0.0
    %515 = vmatprep.subr.mxu0 0.0
    %516 = vmatpush1.msra.mxu0 0.0
    %517 = vmatprep.subr.mxu0 0.0
    %518 = vmatpush1.msra.mxu0 0.0
    %519 = vmatprep.subr.mxu0 0.0
    %520 = vmatpush1.msra.mxu0 0.0
    %521 = vmatprep.subr.mxu0 0.0
    %522 = vmatpush1.msra.mxu0 0.0
    %523 = vmatprep.subr.mxu0 0.0
    %524 = vmatpush1.msra.mxu0 0.0
    %525 = vmatprep.subr.mxu0 0.0
    %526 = vmatpush1.msra.mxu0 0.0
    %527 = vmatprep.subr.mxu0 0.0
    %528 = vmatpush1.msra.mxu0 0.0
    %529 = vmatprep.subr.mxu0 0.0
    %530 = vmatpush1.msra.mxu0 0.0
    %531 = vmatprep.mubr.f32.mxu0 0.0
    %532 = vmatmul.mubr.f32.gmra.mrb[0].mxu0 %v459
    %v533 = vpop.f32.mrb[0].mxu0
    %v534 = vadd.f32 %v456, %v533
    %v535 = vpop.f32.mrb[0].mxu0
    %536 = vmatprep.mubr.f32.mxu0 0.0
    %537 = vmatmul.mubr.f32.gmra.mrb[0].mxu0 %v462
    %v538 = vpop.f32.mrb[0].mxu0
    %v539 = vadd.f32 %v456, %v538
    %v540 = vpop.f32.mrb[0].mxu0
    %541 = vmatprep.mubr.f32.mxu0 0.0
    %542 = vmatmul.mubr.f32.gmra.mrb[0].mxu0 %v465
    %v543 = vpop.f32.mrb[0].mxu0
    %v544 = vadd.f32 %v456, %v543
    %v545 = vpop.f32.mrb[0].mxu0
    %546 = vdwg.mxu0
    %v547 = vmul.f32 %v534, 0.35355338
    %v548 = vmul.f32 %v539, 0.35355338
    %v549 = vmul.f32 %v544, 0.35355338
    %v550 = vld [vmem:[%s8] sm:$0xff]
    %v551 = vld [vmem:[%s8 + $0x8] sm:$0xff]
    %v552 = vld [vmem:[%s8 + $0x10] sm:$0xff]
    %v553 = vld [vmem:[%s8 + $0x18] sm:$0xff]
    %v554 = vld [vmem:[%s11] sm:$0x1]
    %v556 = vlaneseq
    %v557 = vshrl.u32 %v556, 7
    %v558 = vsub.s32 0, %v557
    %v559 = vrot.slane %v554, %v558
    %561 = vmatprep.subr.mxu0 0.0
    %562 = vmatpush1.msra.mxu0 %v550
    %563 = vmatprep.subr.mxu0 0.0
    %564 = vmatpush1.msra.mxu0 %v551
    %565 = vmatprep.subr.mxu0 0.0
    %566 = vmatpush1.msra.mxu0 %v552
    %567 = vmatprep.subr.mxu0 0.0
    %568 = vmatpush1.msra.mxu0 %v553
    %569 = vmatprep.subr.mxu0 0.0
    %570 = vmatpush1.msra.mxu0 0.0
    %571 = vmatprep.subr.mxu0 0.0
    %572 = vmatpush1.msra.mxu0 0.0
    %573 = vmatprep.subr.mxu0 0.0
    %574 = vmatpush1.msra.mxu0 0.0
    %575 = vmatprep.subr.mxu0 0.0
    %576 = vmatpush1.msra.mxu0 0.0
    %577 = vmatprep.subr.mxu0 0.0
    %578 = vmatpush1.msra.mxu0 0.0
    %579 = vmatprep.subr.mxu0 0.0
    %580 = vmatpush1.msra.mxu0 0.0
    %581 = vmatprep.subr.mxu0 0.0
    %582 = vmatpush1.msra.mxu0 0.0
    %583 = vmatprep.subr.mxu0 0.0
    %584 = vmatpush1.msra.mxu0 0.0
    %585 = vmatprep.subr.mxu0 0.0
    %586 = vmatpush1.msra.mxu0 0.0
    %587 = vmatprep.subr.mxu0 0.0
    %588 = vmatpush1.msra.mxu0 0.0
    %589 = vmatprep.subr.mxu0 0.0
    %590 = vmatpush1.msra.mxu0 0.0
    %591 = vmatprep.subr.mxu0 0.0
    %592 = vmatpush1.msra.mxu0 0.0
    %593 = vmatprep.subr.mxu0 0.0
    %594 = vmatpush1.msra.mxu0 0.0
    %595 = vmatprep.subr.mxu0 0.0
    %596 = vmatpush1.msra.mxu0 0.0
    %597 = vmatprep.subr.mxu0 0.0
    %598 = vmatpush1.msra.mxu0 0.0
    %599 = vmatprep.subr.mxu0 0.0
    %600 = vmatpush1.msra.mxu0 0.0
    %601 = vmatprep.subr.mxu0 0.0
    %602 = vmatpush1.msra.mxu0 0.0
    %603 = vmatprep.subr.mxu0 0.0
    %604 = vmatpush1.msra.mxu0 0.0
    %605 = vmatprep.subr.mxu0 0.0
    %606 = vmatpush1.msra.mxu0 0.0
    %607 = vmatprep.subr.mxu0 0.0
    %608 = vmatpush1.msra.mxu0 0.0
    %609 = vmatprep.subr.mxu0 0.0
    %610 = vmatpush1.msra.mxu0 0.0
    %611 = vmatprep.subr.mxu0 0.0
    %612 = vmatpush1.msra.mxu0 0.0
    %613 = vmatprep.subr.mxu0 0.0
    %614 = vmatpush1.msra.mxu0 0.0
    %615 = vmatprep.subr.mxu0 0.0
    %616 = vmatpush1.msra.mxu0 0.0
    %617 = vmatprep.subr.mxu0 0.0
    %618 = vmatpush1.msra.mxu0 0.0
    %619 = vmatprep.subr.mxu0 0.0
    %620 = vmatpush1.msra.mxu0 0.0
    %621 = vmatprep.subr.mxu0 0.0
    %622 = vmatpush1.msra.mxu0 0.0
    %623 = vmatprep.subr.mxu0 0.0
    %624 = vmatpush1.msra.mxu0 0.0
    %625 = vmatprep.mubr.f32.mxu0 0.0
    %626 = vmatmul.mubr.f32.gmra.mrb[0].mxu0 %v459
    %v627 = vpop.f32.mrb[0].mxu0
    %v628 = vadd.f32 %v559, %v627
    %v629 = vpop.f32.mrb[0].mxu0
    %630 = vmatprep.mubr.f32.mxu0 0.0
    %631 = vmatmul.mubr.f32.gmra.mrb[0].mxu0 %v462
    %v632 = vpop.f32.mrb[0].mxu0
    %v633 = vadd.f32 %v559, %v632
    %v634 = vpop.f32.mrb[0].mxu0
    %635 = vmatprep.mubr.f32.mxu0 0.0
    %636 = vmatmul.mubr.f32.gmra.mrb[0].mxu0 %v465
    %v637 = vpop.f32.mrb[0].mxu0
    %v638 = vadd.f32 %v559, %v637
    %v639 = vpop.f32.mrb[0].mxu0
    %640 = vdwg.mxu0
    %v641 = vld [vmem:[%s9] sm:$0xff]
    %v642 = vld [vmem:[%s9 + $0x8] sm:$0xff]
    %v643 = vld [vmem:[%s9 + $0x10] sm:$0xff]
    %v644 = vld [vmem:[%s9 + $0x18] sm:$0xff]
    %v645 = vld [vmem:[%s12] sm:$0x1]
    %v647 = vlaneseq
    %v648 = vshrl.u32 %v647, 7
    %v649 = vsub.s32 0, %v648
    %v650 = vrot.slane %v645, %v649
    %652 = vmatprep.subr.mxu0 0.0
    %653 = vmatpush1.msra.mxu0 %v641
    %654 = vmatprep.subr.mxu0 0.0
    %655 = vmatpush1.msra.mxu0 %v642
    %656 = vmatprep.subr.mxu0 0.0
    %657 = vmatpush1.msra.mxu0 %v643
    %658 = vmatprep.subr.mxu0 0.0
    %659 = vmatpush1.msra.mxu0 %v644
    %660 = vmatprep.subr.mxu0 0.0
    %661 = vmatpush1.msra.mxu0 0.0
    %662 = vmatprep.subr.mxu0 0.0
    %663 = vmatpush1.msra.mxu0 0.0
    %664 = vmatprep.subr.mxu0 0.0
    %665 = vmatpush1.msra.mxu0 0.0
    %666 = vmatprep.subr.mxu0 0.0
    %667 = vmatpush1.msra.mxu0 0.0
    %668 = vmatprep.subr.mxu0 0.0
    %669 = vmatpush1.msra.mxu0 0.0
    %670 = vmatprep.subr.mxu0 0.0
    %671 = vmatpush1.msra.mxu0 0.0
    %672 = vmatprep.subr.mxu0 0.0
    %673 = vmatpush1.msra.mxu0 0.0
    %674 = vmatprep.subr.mxu0 0.0
    %675 = vmatpush1.msra.mxu0 0.0
    %676 = vmatprep.subr.mxu0 0.0
    %677 = vmatpush1.msra.mxu0 0.0
    %678 = vmatprep.subr.mxu0 0.0
    %679 = vmatpush1.msra.mxu0 0.0
    %680 = vmatprep.subr.mxu0 0.0
    %681 = vmatpush1.msra.mxu0 0.0
    %682 = vmatprep.subr.mxu0 0.0
    %683 = vmatpush1.msra.mxu0 0.0
    %684 = vmatprep.subr.mxu0 0.0
    %685 = vmatpush1.msra.mxu0 0.0
    %686 = vmatprep.subr.mxu0 0.0
    %687 = vmatpush1.msra.mxu0 0.0
    %688 = vmatprep.subr.mxu0 0.0
    %689 = vmatpush1.msra.mxu0 0.0
    %690 = vmatprep.subr.mxu0 0.0
    %691 = vmatpush1.msra.mxu0 0.0
    %692 = vmatprep.subr.mxu0 0.0
    %693 = vmatpush1.msra.mxu0 0.0
    %694 = vmatprep.subr.mxu0 0.0
    %695 = vmatpush1.msra.mxu0 0.0
    %696 = vmatprep.subr.mxu0 0.0
    %697 = vmatpush1.msra.mxu0 0.0
    %698 = vmatprep.subr.mxu0 0.0
    %699 = vmatpush1.msra.mxu0 0.0
    %700 = vmatprep.subr.mxu0 0.0
    %701 = vmatpush1.msra.mxu0 0.0
    %702 = vmatprep.subr.mxu0 0.0
    %703 = vmatpush1.msra.mxu0 0.0
    %704 = vmatprep.subr.mxu0 0.0
    %705 = vmatpush1.msra.mxu0 0.0
    %706 = vmatprep.subr.mxu0 0.0
    %707 = vmatpush1.msra.mxu0 0.0
    %708 = vmatprep.subr.mxu0 0.0
    %709 = vmatpush1.msra.mxu0 0.0
    %710 = vmatprep.subr.mxu0 0.0
    %711 = vmatpush1.msra.mxu0 0.0
    %712 = vmatprep.subr.mxu0 0.0
    %713 = vmatpush1.msra.mxu0 0.0
    %714 = vmatprep.subr.mxu0 0.0
    %715 = vmatpush1.msra.mxu0 0.0
    %716 = vmatprep.mubr.f32.mxu0 0.0
    %717 = vmatmul.mubr.f32.gmra.mrb[0].mxu0 %v459
    %v718 = vpop.f32.mrb[0].mxu0
    %v719 = vadd.f32 %v650, %v718
    %v720 = vpop.f32.mrb[0].mxu0
    %721 = vmatprep.mubr.f32.mxu0 0.0
    %722 = vmatmul.mubr.f32.gmra.mrb[0].mxu0 %v462
    %v723 = vpop.f32.mrb[0].mxu0
    %v724 = vadd.f32 %v650, %v723
    %v725 = vpop.f32.mrb[0].mxu0
    %726 = vmatprep.mubr.f32.mxu0 0.0
    %727 = vmatmul.mubr.f32.gmra.mrb[0].mxu0 %v465
    %v728 = vpop.f32.mrb[0].mxu0
    %v729 = vadd.f32 %v650, %v728
    %v730 = vpop.f32.mrb[0].mxu0
    %731 = vdwg.mxu0
    %vm732 = vcmask 64512
    %v734 = vsel %vm732, %v547, 0
    %v737 = vsel %vm732, %v548, 0
    %v740 = vsel %vm732, %v549, 0
    %v743 = vsel %vm732, %v628, 0
    %v746 = vsel %vm732, %v633, 0
    %v749 = vsel %vm732, %v638, 0
    %751 = vmatprep.subr.mxu0 0.0
    %752 = vmatpush1.xpose.msra.mxu0 %v743
    %753 = vmatprep.subr.mxu0 0.0
    %754 = vmatpush1.xpose.msra.mxu0 %v746
    %755 = vmatprep.subr.mxu0 0.0
    %756 = vmatpush1.xpose.msra.mxu0 %v749
    %757 = vmatprep.subr.mxu0 0.0
    %758 = vmatpush1.xpose.msra.mxu0 0.0
    %759 = vmatprep.subr.mxu0 0.0
    %760 = vmatpush1.xpose.msra.mxu0 0.0
    %761 = vmatprep.subr.mxu0 0.0
    %762 = vmatpush1.xpose.msra.mxu0 0.0
    %763 = vmatprep.subr.mxu0 0.0
    %764 = vmatpush1.xpose.msra.mxu0 0.0
    %765 = vmatprep.subr.mxu0 0.0
    %766 = vmatpush1.xpose.msra.mxu0 0.0
    %767 = vmatprep.subr.mxu0 0.0
    %768 = vmatpush1.xpose.msra.mxu0 0.0
    %769 = vmatprep.subr.mxu0 0.0
    %770 = vmatpush1.xpose.msra.mxu0 0.0
    %771 = vmatprep.subr.mxu0 0.0
    %772 = vmatpush1.xpose.msra.mxu0 0.0
    %773 = vmatprep.subr.mxu0 0.0
    %774 = vmatpush1.xpose.msra.mxu0 0.0
    %775 = vmatprep.subr.mxu0 0.0
    %776 = vmatpush1.xpose.msra.mxu0 0.0
    %777 = vmatprep.subr.mxu0 0.0
    %778 = vmatpush1.xpose.msra.mxu0 0.0
    %779 = vmatprep.subr.mxu0 0.0
    %780 = vmatpush1.xpose.msra.mxu0 0.0
    %781 = vmatprep.subr.mxu0 0.0
    %782 = vmatpush1.xpose.msra.mxu0 0.0
    %783 = vmatprep.subr.mxu0 0.0
    %784 = vmatpush1.xpose.msra.mxu0 0.0
    %785 = vmatprep.subr.mxu0 0.0
    %786 = vmatpush1.xpose.msra.mxu0 0.0
    %787 = vmatprep.subr.mxu0 0.0
    %788 = vmatpush1.xpose.msra.mxu0 0.0
    %789 = vmatprep.subr.mxu0 0.0
    %790 = vmatpush1.xpose.msra.mxu0 0.0
    %791 = vmatprep.subr.mxu0 0.0
    %792 = vmatpush1.xpose.msra.mxu0 0.0
    %793 = vmatprep.subr.mxu0 0.0
    %794 = vmatpush1.xpose.msra.mxu0 0.0
    %795 = vmatprep.subr.mxu0 0.0
    %796 = vmatpush1.xpose.msra.mxu0 0.0
    %797 = vmatprep.subr.mxu0 0.0
    %798 = vmatpush1.xpose.msra.mxu0 0.0
    %799 = vmatprep.subr.mxu0 0.0
    %800 = vmatpush1.xpose.msra.mxu0 0.0
    %801 = vmatprep.subr.mxu0 0.0
    %802 = vmatpush1.xpose.msra.mxu0 0.0
    %803 = vmatprep.subr.mxu0 0.0
    %804 = vmatpush1.xpose.msra.mxu0 0.0
    %805 = vmatprep.subr.mxu0 0.0
    %806 = vmatpush1.xpose.msra.mxu0 0.0
    %807 = vmatprep.subr.mxu0 0.0
    %808 = vmatpush1.xpose.msra.mxu0 0.0
    %809 = vmatprep.subr.mxu0 0.0
    %810 = vmatpush1.xpose.msra.mxu0 0.0
    %811 = vmatprep.subr.mxu0 0.0
    %812 = vmatpush1.xpose.msra.mxu0 0.0
    %813 = vmatprep.subr.mxu0 0.0
    %814 = vmatpush1.xpose.msra.mxu0 0.0
    %815 = vmatprep.mubr.f32.mxu0 0.0
    %816 = vmatmul.mubr.f32.gmra.mrb[0].mxu0 %v734
    %v817 = vpop.f32.mrb[0].mxu0
    %v818 = vadd.f32 %v382, %v817
    %v819 = vpop.f32.mrb[0].mxu0
    %820 = vmatprep.mubr.f32.mxu0 0.0
    %821 = vmatmul.mubr.f32.gmra.mrb[0].mxu0 %v737
    %v822 = vpop.f32.mrb[0].mxu0
    %v823 = vadd.f32 %v383, %v822
    %v824 = vpop.f32.mrb[0].mxu0
    %825 = vmatprep.mubr.f32.mxu0 0.0
    %826 = vmatmul.mubr.f32.gmra.mrb[0].mxu0 %v740
    %v827 = vpop.f32.mrb[0].mxu0
    %v828 = vadd.f32 %v384, %v827
    %v829 = vpop.f32.mrb[0].mxu0
    %830 = vdwg.mxu0
    %vm831 = vcmask 146432
    %v832 = vsel %vm831, %v818, -inf
    %833 = vmax.xlane.f32.xlu0 %v832
    %v834 = vpop.xlane.xlu0 %833
    %v835 = vsel %vm831, %v823, -inf
    %836 = vmax.xlane.f32.xlu0 %v835
    %v837 = vpop.xlane.xlu0 %836
    %vm838 = vcmask 140288
    %v839 = vsel %vm838, %v828, -inf
    %840 = vmax.xlane.f32.xlu0 %v839
    %v841 = vpop.xlane.xlu0 %840
    %v842 = vsub.f32 %v818, %v834
    %v843 = vsub.f32 %v823, %v837
    %v844 = vsub.f32 %v828, %v841
    %v845 = vmul.f32 %v842, 1.442695
    %v846 = vpow.pop %v845
    %v847 = vmul.f32 %v843, 1.442695
    %v848 = vpow.pop %v847
    %v849 = vmul.f32 %v844, 1.442695
    %v850 = vpow.pop %v849
    %v851 = vsel %vm831, %v846, 0.0
    %852 = vadd.xlane.f32.xlu0 %v851
    %v853 = vpop.xlane.xlu0 %852
    %v854 = vsel %vm831, %v848, 0.0
    %855 = vadd.xlane.f32.xlu0 %v854
    %v856 = vpop.xlane.xlu0 %855
    %v857 = vsel %vm838, %v850, 0.0
    %858 = vadd.xlane.f32.xlu0 %v857
    %v859 = vpop.xlane.xlu0 %858
    %v860 = vrcp.pop %v853
    %v861 = vmul.f32 %v846, %v860
    %v862 = vrcp.pop %v856
    %v863 = vmul.f32 %v848, %v862
    %v864 = vrcp.pop %v859
    %v865 = vmul.f32 %v850, %v864
    %v867 = vsel %vm831, %v861, 0
    %v870 = vsel %vm831, %v863, 0
    %v873 = vsel %vm831, %v865, 0
    %v876 = vsel %vm211, %v729, 0
    %878 = vmatprep.subr.mxu0 0.0
    %879 = vmatpush1.msra.mxu0 %v719
    %880 = vmatprep.subr.mxu0 0.0
    %881 = vmatpush1.msra.mxu0 %v724
    %882 = vmatprep.subr.mxu0 0.0
    %883 = vmatpush1.msra.mxu0 %v876
    %884 = vmatprep.subr.mxu0 0.0
    %885 = vmatpush1.msra.mxu0 0.0
    %886 = vmatprep.subr.mxu0 0.0
    %887 = vmatpush1.msra.mxu0 0.0
    %888 = vmatprep.subr.mxu0 0.0
    %889 = vmatpush1.msra.mxu0 0.0
    %890 = vmatprep.subr.mxu0 0.0
    %891 = vmatpush1.msra.mxu0 0.0
    %892 = vmatprep.subr.mxu0 0.0
    %893 = vmatpush1.msra.mxu0 0.0
    %894 = vmatprep.subr.mxu0 0.0
    %895 = vmatpush1.msra.mxu0 0.0
    %896 = vmatprep.subr.mxu0 0.0
    %897 = vmatpush1.msra.mxu0 0.0
    %898 = vmatprep.subr.mxu0 0.0
    %899 = vmatpush1.msra.mxu0 0.0
    %900 = vmatprep.subr.mxu0 0.0
    %901 = vmatpush1.msra.mxu0 0.0
    %902 = vmatprep.subr.mxu0 0.0
    %903 = vmatpush1.msra.mxu0 0.0
    %904 = vmatprep.subr.mxu0 0.0
    %905 = vmatpush1.msra.mxu0 0.0
    %906 = vmatprep.subr.mxu0 0.0
    %907 = vmatpush1.msra.mxu0 0.0
    %908 = vmatprep.subr.mxu0 0.0
    %909 = vmatpush1.msra.mxu0 0.0
    %910 = vmatprep.subr.mxu0 0.0
    %911 = vmatpush1.msra.mxu0 0.0
    %912 = vmatprep.subr.mxu0 0.0
    %913 = vmatpush1.msra.mxu0 0.0
    %914 = vmatprep.subr.mxu0 0.0
    %915 = vmatpush1.msra.mxu0 0.0
    %916 = vmatprep.subr.mxu0 0.0
    %917 = vmatpush1.msra.mxu0 0.0
    %918 = vmatprep.subr.mxu0 0.0
    %919 = vmatpush1.msra.mxu0 0.0
    %920 = vmatprep.subr.mxu0 0.0
    %921 = vmatpush1.msra.mxu0 0.0
    %922 = vmatprep.subr.mxu0 0.0
    %923 = vmatpush1.msra.mxu0 0.0
    %924 = vmatprep.subr.mxu0 0.0
    %925 = vmatpush1.msra.mxu0 0.0
    %926 = vmatprep.subr.mxu0 0.0
    %927 = vmatpush1.msra.mxu0 0.0
    %928 = vmatprep.subr.mxu0 0.0
    %929 = vmatpush1.msra.mxu0 0.0
    %930 = vmatprep.subr.mxu0 0.0
    %931 = vmatpush1.msra.mxu0 0.0
    %932 = vmatprep.subr.mxu0 0.0
    %933 = vmatpush1.msra.mxu0 0.0
    %934 = vmatprep.subr.mxu0 0.0
    %935 = vmatpush1.msra.mxu0 0.0
    %936 = vmatprep.subr.mxu0 0.0
    %937 = vmatpush1.msra.mxu0 0.0
    %938 = vmatprep.subr.mxu0 0.0
    %939 = vmatpush1.msra.mxu0 0.0
    %940 = vmatprep.subr.mxu0 0.0
    %941 = vmatpush1.msra.mxu0 0.0
    %942 = vmatprep.mubr.f32.mxu0 0.0
    %943 = vmatmul.mubr.f32.gmra.mrb[0].mxu0 %v867
    %v944 = vpop.f32.mrb[0].mxu0
    %v945 = vadd.f32 0.0, %v944
    %v946 = vpop.f32.mrb[0].mxu0
    %947 = vmatprep.mubr.f32.mxu0 0.0
    %948 = vmatmul.mubr.f32.gmra.mrb[0].mxu0 %v870
    %v949 = vpop.f32.mrb[0].mxu0
    %v950 = vadd.f32 0.0, %v949
    %v951 = vpop.f32.mrb[0].mxu0
    %952 = vmatprep.mubr.f32.mxu0 0.0
    %953 = vmatmul.mubr.f32.gmra.mrb[0].mxu0 %v873
    %v954 = vpop.f32.mrb[0].mxu0
    %v955 = vadd.f32 0.0, %v954
    %v956 = vpop.f32.mrb[0].mxu0
    %957 = vdwg.mxu0
    %958 = vrot.lane.b32.xlu0 %v547, 120
    %v959 = vpop.permute.xlu0 %958
    %960 = vrot.lane.b32.xlu0 %v548, 120
    %v961 = vpop.permute.xlu0 %960
    %962 = vrot.lane.b32.xlu0 %v549, 120
    %v963 = vpop.permute.xlu0 %962
    %964 = vrot.lane.b32.xlu0 %v628, 120
    %v965 = vpop.permute.xlu0 %964
    %966 = vrot.lane.b32.xlu0 %v633, 120
    %v967 = vpop.permute.xlu0 %966
    %968 = vrot.lane.b32.xlu0 %v638, 120
    %v969 = vpop.permute.xlu0 %968
    %v970 = vsel %vm732, %v959, 0
    %v972 = vsel %vm732, %v961, 0
    %v974 = vsel %vm732, %v963, 0
    %v976 = vsel %vm732, %v965, 0
    %v978 = vsel %vm732, %v967, 0
    %v980 = vsel %vm732, %v969, 0
    %982 = vmatprep.subr.mxu0 0.0
    %983 = vmatpush1.xpose.msra.mxu0 %v976
    %984 = vmatprep.subr.mxu0 0.0
    %985 = vmatpush1.xpose.msra.mxu0 %v978
    %986 = vmatprep.subr.mxu0 0.0
    %987 = vmatpush1.xpose.msra.mxu0 %v980
    %988 = vmatprep.subr.mxu0 0.0
    %989 = vmatpush1.xpose.msra.mxu0 0.0
    %990 = vmatprep.subr.mxu0 0.0
    %991 = vmatpush1.xpose.msra.mxu0 0.0
    %992 = vmatprep.subr.mxu0 0.0
    %993 = vmatpush1.xpose.msra.mxu0 0.0
    %994 = vmatprep.subr.mxu0 0.0
    %995 = vmatpush1.xpose.msra.mxu0 0.0
    %996 = vmatprep.subr.mxu0 0.0
    %997 = vmatpush1.xpose.msra.mxu0 0.0
    %998 = vmatprep.subr.mxu0 0.0
    %999 = vmatpush1.xpose.msra.mxu0 0.0
    %1000 = vmatprep.subr.mxu0 0.0
    %1001 = vmatpush1.xpose.msra.mxu0 0.0
    %1002 = vmatprep.subr.mxu0 0.0
    %1003 = vmatpush1.xpose.msra.mxu0 0.0
    %1004 = vmatprep.subr.mxu0 0.0
    %1005 = vmatpush1.xpose.msra.mxu0 0.0
    %1006 = vmatprep.subr.mxu0 0.0
    %1007 = vmatpush1.xpose.msra.mxu0 0.0
    %1008 = vmatprep.subr.mxu0 0.0
    %1009 = vmatpush1.xpose.msra.mxu0 0.0
    %1010 = vmatprep.subr.mxu0 0.0
    %1011 = vmatpush1.xpose.msra.mxu0 0.0
    %1012 = vmatprep.subr.mxu0 0.0
    %1013 = vmatpush1.xpose.msra.mxu0 0.0
    %1014 = vmatprep.subr.mxu0 0.0
    %1015 = vmatpush1.xpose.msra.mxu0 0.0
    %1016 = vmatprep.subr.mxu0 0.0
    %1017 = vmatpush1.xpose.msra.mxu0 0.0
    %1018 = vmatprep.subr.mxu0 0.0
    %1019 = vmatpush1.xpose.msra.mxu0 0.0
    %1020 = vmatprep.subr.mxu0 0.0
    %1021 = vmatpush1.xpose.msra.mxu0 0.0
    %1022 = vmatprep.subr.mxu0 0.0
    %1023 = vmatpush1.xpose.msra.mxu0 0.0
    %1024 = vmatprep.subr.mxu0 0.0
    %1025 = vmatpush1.xpose.msra.mxu0 0.0
    %1026 = vmatprep.subr.mxu0 0.0
    %1027 = vmatpush1.xpose.msra.mxu0 0.0
    %1028 = vmatprep.subr.mxu0 0.0
    %1029 = vmatpush1.xpose.msra.mxu0 0.0
    %1030 = vmatprep.subr.mxu0 0.0
    %1031 = vmatpush1.xpose.msra.mxu0 0.0
    %1032 = vmatprep.subr.mxu0 0.0
    %1033 = vmatpush1.xpose.msra.mxu0 0.0
    %1034 = vmatprep.subr.mxu0 0.0
    %1035 = vmatpush1.xpose.msra.mxu0 0.0
    %1036 = vmatprep.subr.mxu0 0.0
    %1037 = vmatpush1.xpose.msra.mxu0 0.0
    %1038 = vmatprep.subr.mxu0 0.0
    %1039 = vmatpush1.xpose.msra.mxu0 0.0
    %1040 = vmatprep.subr.mxu0 0.0
    %1041 = vmatpush1.xpose.msra.mxu0 0.0
    %1042 = vmatprep.subr.mxu0 0.0
    %1043 = vmatpush1.xpose.msra.mxu0 0.0
    %1044 = vmatprep.subr.mxu0 0.0
    %1045 = vmatpush1.xpose.msra.mxu0 0.0
    %1046 = vmatprep.mubr.f32.mxu0 0.0
    %1047 = vmatmul.mubr.f32.gmra.mrb[0].mxu0 %v970
    %v1048 = vpop.f32.mrb[0].mxu0
    %v1049 = vadd.f32 %v382, %v1048
    %v1050 = vpop.f32.mrb[0].mxu0
    %1051 = vmatprep.mubr.f32.mxu0 0.0
    %1052 = vmatmul.mubr.f32.gmra.mrb[0].mxu0 %v972
    %v1053 = vpop.f32.mrb[0].mxu0
    %v1054 = vadd.f32 %v383, %v1053
    %v1055 = vpop.f32.mrb[0].mxu0
    %1056 = vmatprep.mubr.f32.mxu0 0.0
    %1057 = vmatmul.mubr.f32.gmra.mrb[0].mxu0 %v974
    %v1058 = vpop.f32.mrb[0].mxu0
    %v1059 = vadd.f32 %v384, %v1058
    %v1060 = vpop.f32.mrb[0].mxu0
    %1061 = vdwg.mxu0
    %v1062 = vsel %vm831, %v1049, -inf
    %1063 = vmax.xlane.f32.xlu0 %v1062
    %v1064 = vpop.xlane.xlu0 %1063
    %v1065 = vsel %vm831, %v1054, -inf
    %1066 = vmax.xlane.f32.xlu0 %v1065
    %v1067 = vpop.xlane.xlu0 %1066
    %v1068 = vsel %vm838, %v1059, -inf
    %1069 = vmax.xlane.f32.xlu0 %v1068
    %v1070 = vpop.xlane.xlu0 %1069
    %v1071 = vsub.f32 %v1049, %v1064
    %v1072 = vsub.f32 %v1054, %v1067
    %v1073 = vsub.f32 %v1059, %v1070
    %v1074 = vmul.f32 %v1071, 1.442695
    %v1075 = vpow.pop %v1074
    %v1076 = vmul.f32 %v1072, 1.442695
    %v1077 = vpow.pop %v1076
    %v1078 = vmul.f32 %v1073, 1.442695
    %v1079 = vpow.pop %v1078
    %v1080 = vsel %vm831, %v1075, 0.0
    %1081 = vadd.xlane.f32.xlu0 %v1080
    %v1082 = vpop.xlane.xlu0 %1081
    %v1083 = vsel %vm831, %v1077, 0.0
    %1084 = vadd.xlane.f32.xlu0 %v1083
    %v1085 = vpop.xlane.xlu0 %1084
    %v1086 = vsel %vm838, %v1079, 0.0
    %1087 = vadd.xlane.f32.xlu0 %v1086
    %v1088 = vpop.xlane.xlu0 %1087
    %v1089 = vrcp.pop %v1082
    %v1090 = vmul.f32 %v1075, %v1089
    %v1091 = vrcp.pop %v1085
    %v1092 = vmul.f32 %v1077, %v1091
    %v1093 = vrcp.pop %v1088
    %v1094 = vmul.f32 %v1079, %v1093
    %1097 = vrot.lane.b32.xlu0 %v719, 120
    %v1098 = vpop.permute.xlu0 %1097
    %1099 = vrot.lane.b32.xlu0 %v724, 120
    %v1100 = vpop.permute.xlu0 %1099
    %1101 = vrot.lane.b32.xlu0 %v729, 120
    %v1102 = vpop.permute.xlu0 %1101
    %v1106 = vsel %vm831, %v1090, 0
    %v1109 = vsel %vm831, %v1092, 0
    %v1112 = vsel %vm831, %v1094, 0
    %v1114 = vsel %vm211, %v1102, 0
    %1116 = vmatprep.subr.mxu0 0.0
    %1117 = vmatpush1.msra.mxu0 %v1098
    %1118 = vmatprep.subr.mxu0 0.0
    %1119 = vmatpush1.msra.mxu0 %v1100
    %1120 = vmatprep.subr.mxu0 0.0
    %1121 = vmatpush1.msra.mxu0 %v1114
    %1122 = vmatprep.subr.mxu0 0.0
    %1123 = vmatpush1.msra.mxu0 0.0
    %1124 = vmatprep.subr.mxu0 0.0
    %1125 = vmatpush1.msra.mxu0 0.0
    %1126 = vmatprep.subr.mxu0 0.0
    %1127 = vmatpush1.msra.mxu0 0.0
    %1128 = vmatprep.subr.mxu0 0.0
    %1129 = vmatpush1.msra.mxu0 0.0
    %1130 = vmatprep.subr.mxu0 0.0
    %1131 = vmatpush1.msra.mxu0 0.0
    %1132 = vmatprep.subr.mxu0 0.0
    %1133 = vmatpush1.msra.mxu0 0.0
    %1134 = vmatprep.subr.mxu0 0.0
    %1135 = vmatpush1.msra.mxu0 0.0
    %1136 = vmatprep.subr.mxu0 0.0
    %1137 = vmatpush1.msra.mxu0 0.0
    %1138 = vmatprep.subr.mxu0 0.0
    %1139 = vmatpush1.msra.mxu0 0.0
    %1140 = vmatprep.subr.mxu0 0.0
    %1141 = vmatpush1.msra.mxu0 0.0
    %1142 = vmatprep.subr.mxu0 0.0
    %1143 = vmatpush1.msra.mxu0 0.0
    %1144 = vmatprep.subr.mxu0 0.0
    %1145 = vmatpush1.msra.mxu0 0.0
    %1146 = vmatprep.subr.mxu0 0.0
    %1147 = vmatpush1.msra.mxu0 0.0
    %1148 = vmatprep.subr.mxu0 0.0
    %1149 = vmatpush1.msra.mxu0 0.0
    %1150 = vmatprep.subr.mxu0 0.0
    %1151 = vmatpush1.msra.mxu0 0.0
    %1152 = vmatprep.subr.mxu0 0.0
    %1153 = vmatpush1.msra.mxu0 0.0
    %1154 = vmatprep.subr.mxu0 0.0
    %1155 = vmatpush1.msra.mxu0 0.0
    %1156 = vmatprep.subr.mxu0 0.0
    %1157 = vmatpush1.msra.mxu0 0.0
    %1158 = vmatprep.subr.mxu0 0.0
    %1159 = vmatpush1.msra.mxu0 0.0
    %1160 = vmatprep.subr.mxu0 0.0
    %1161 = vmatpush1.msra.mxu0 0.0
    %1162 = vmatprep.subr.mxu0 0.0
    %1163 = vmatpush1.msra.mxu0 0.0
    %1164 = vmatprep.subr.mxu0 0.0
    %1165 = vmatpush1.msra.mxu0 0.0
    %1166 = vmatprep.subr.mxu0 0.0
    %1167 = vmatpush1.msra.mxu0 0.0
    %1168 = vmatprep.subr.mxu0 0.0
    %1169 = vmatpush1.msra.mxu0 0.0
    %1170 = vmatprep.subr.mxu0 0.0
    %1171 = vmatpush1.msra.mxu0 0.0
    %1172 = vmatprep.subr.mxu0 0.0
    %1173 = vmatpush1.msra.mxu0 0.0
    %1174 = vmatprep.subr.mxu0 0.0
    %1175 = vmatpush1.msra.mxu0 0.0
    %1176 = vmatprep.subr.mxu0 0.0
    %1177 = vmatpush1.msra.mxu0 0.0
    %1178 = vmatprep.subr.mxu0 0.0
    %1179 = vmatpush1.msra.mxu0 0.0
    %1180 = vmatprep.mubr.f32.mxu0 0.0
    %1181 = vmatmul.mubr.f32.gmra.mrb[0].mxu0 %v1106
    %v1182 = vpop.f32.mrb[0].mxu0
    %v1183 = vadd.f32 0.0, %v1182
    %v1184 = vpop.f32.mrb[0].mxu0
    %1185 = vmatprep.mubr.f32.mxu0 0.0
    %1186 = vmatmul.mubr.f32.gmra.mrb[0].mxu0 %v1109
    %v1187 = vpop.f32.mrb[0].mxu0
    %v1188 = vadd.f32 0.0, %v1187
    %v1189 = vpop.f32.mrb[0].mxu0
    %1190 = vmatprep.mubr.f32.mxu0 0.0
    %1191 = vmatmul.mubr.f32.gmra.mrb[0].mxu0 %v1112
    %v1192 = vpop.f32.mrb[0].mxu0
    %v1193 = vadd.f32 0.0, %v1192
    %v1194 = vpop.f32.mrb[0].mxu0
    %1195 = vdwg.mxu0
    %1196 = vrot.lane.b32.xlu0 %v547, 112
    %v1197 = vpop.permute.xlu0 %1196
    %1198 = vrot.lane.b32.xlu0 %v548, 112
    %v1199 = vpop.permute.xlu0 %1198
    %1200 = vrot.lane.b32.xlu0 %v549, 112
    %v1201 = vpop.permute.xlu0 %1200
    %1202 = vrot.lane.b32.xlu0 %v628, 112
    %v1203 = vpop.permute.xlu0 %1202
    %1204 = vrot.lane.b32.xlu0 %v633, 112
    %v1205 = vpop.permute.xlu0 %1204
    %1206 = vrot.lane.b32.xlu0 %v638, 112
    %v1207 = vpop.permute.xlu0 %1206
    %v1208 = vsel %vm732, %v1197, 0
    %v1210 = vsel %vm732, %v1199, 0
    %v1212 = vsel %vm732, %v1201, 0
    %v1214 = vsel %vm732, %v1203, 0
    %v1216 = vsel %vm732, %v1205, 0
    %v1218 = vsel %vm732, %v1207, 0
    %1220 = vmatprep.subr.mxu0 0.0
    %1221 = vmatpush1.xpose.msra.mxu0 %v1214
    %1222 = vmatprep.subr.mxu0 0.0
    %1223 = vmatpush1.xpose.msra.mxu0 %v1216
    %1224 = vmatprep.subr.mxu0 0.0
    %1225 = vmatpush1.xpose.msra.mxu0 %v1218
    %1226 = vmatprep.subr.mxu0 0.0
    %1227 = vmatpush1.xpose.msra.mxu0 0.0
    %1228 = vmatprep.subr.mxu0 0.0
    %1229 = vmatpush1.xpose.msra.mxu0 0.0
    %1230 = vmatprep.subr.mxu0 0.0
    %1231 = vmatpush1.xpose.msra.mxu0 0.0
    %1232 = vmatprep.subr.mxu0 0.0
    %1233 = vmatpush1.xpose.msra.mxu0 0.0
    %1234 = vmatprep.subr.mxu0 0.0
    %1235 = vmatpush1.xpose.msra.mxu0 0.0
    %1236 = vmatprep.subr.mxu0 0.0
    %1237 = vmatpush1.xpose.msra.mxu0 0.0
    %1238 = vmatprep.subr.mxu0 0.0
    %1239 = vmatpush1.xpose.msra.mxu0 0.0
    %1240 = vmatprep.subr.mxu0 0.0
    %1241 = vmatpush1.xpose.msra.mxu0 0.0
    %1242 = vmatprep.subr.mxu0 0.0
    %1243 = vmatpush1.xpose.msra.mxu0 0.0
    %1244 = vmatprep.subr.mxu0 0.0
    %1245 = vmatpush1.xpose.msra.mxu0 0.0
    %1246 = vmatprep.subr.mxu0 0.0
    %1247 = vmatpush1.xpose.msra.mxu0 0.0
    %1248 = vmatprep.subr.mxu0 0.0
    %1249 = vmatpush1.xpose.msra.mxu0 0.0
    %1250 = vmatprep.subr.mxu0 0.0
    %1251 = vmatpush1.xpose.msra.mxu0 0.0
    %1252 = vmatprep.subr.mxu0 0.0
    %1253 = vmatpush1.xpose.msra.mxu0 0.0
    %1254 = vmatprep.subr.mxu0 0.0
    %1255 = vmatpush1.xpose.msra.mxu0 0.0
    %1256 = vmatprep.subr.mxu0 0.0
    %1257 = vmatpush1.xpose.msra.mxu0 0.0
    %1258 = vmatprep.subr.mxu0 0.0
    %1259 = vmatpush1.xpose.msra.mxu0 0.0
    %1260 = vmatprep.subr.mxu0 0.0
    %1261 = vmatpush1.xpose.msra.mxu0 0.0
    %1262 = vmatprep.subr.mxu0 0.0
    %1263 = vmatpush1.xpose.msra.mxu0 0.0
    %1264 = vmatprep.subr.mxu0 0.0
    %1265 = vmatpush1.xpose.msra.mxu0 0.0
    %1266 = vmatprep.subr.mxu0 0.0
    %1267 = vmatpush1.xpose.msra.mxu0 0.0
    %1268 = vmatprep.subr.mxu0 0.0
    %1269 = vmatpush1.xpose.msra.mxu0 0.0
    %1270 = vmatprep.subr.mxu0 0.0
    %1271 = vmatpush1.xpose.msra.mxu0 0.0
    %1272 = vmatprep.subr.mxu0 0.0
    %1273 = vmatpush1.xpose.msra.mxu0 0.0
    %1274 = vmatprep.subr.mxu0 0.0
    %1275 = vmatpush1.xpose.msra.mxu0 0.0
    %1276 = vmatprep.subr.mxu0 0.0
    %1277 = vmatpush1.xpose.msra.mxu0 0.0
    %1278 = vmatprep.subr.mxu0 0.0
    %1279 = vmatpush1.xpose.msra.mxu0 0.0
    %1280 = vmatprep.subr.mxu0 0.0
    %1281 = vmatpush1.xpose.msra.mxu0 0.0
    %1282 = vmatprep.subr.mxu0 0.0
    %1283 = vmatpush1.xpose.msra.mxu0 0.0
    %1284 = vmatprep.mubr.f32.mxu0 0.0
    %1285 = vmatmul.mubr.f32.gmra.mrb[0].mxu0 %v1208
    %v1286 = vpop.f32.mrb[0].mxu0
    %v1287 = vadd.f32 %v382, %v1286
    %v1288 = vpop.f32.mrb[0].mxu0
    %1289 = vmatprep.mubr.f32.mxu0 0.0
    %1290 = vmatmul.mubr.f32.gmra.mrb[0].mxu0 %v1210
    %v1291 = vpop.f32.mrb[0].mxu0
    %v1292 = vadd.f32 %v383, %v1291
    %v1293 = vpop.f32.mrb[0].mxu0
    %1294 = vmatprep.mubr.f32.mxu0 0.0
    %1295 = vmatmul.mubr.f32.gmra.mrb[0].mxu0 %v1212
    %v1296 = vpop.f32.mrb[0].mxu0
    %v1297 = vadd.f32 %v384, %v1296
    %v1298 = vpop.f32.mrb[0].mxu0
    %1299 = vdwg.mxu0
    %v1300 = vsel %vm831, %v1287, -inf
    %1301 = vmax.xlane.f32.xlu0 %v1300
    %v1302 = vpop.xlane.xlu0 %1301
    %v1303 = vsel %vm831, %v1292, -inf
    %1304 = vmax.xlane.f32.xlu0 %v1303
    %v1305 = vpop.xlane.xlu0 %1304
    %v1306 = vsel %vm838, %v1297, -inf
    %1307 = vmax.xlane.f32.xlu0 %v1306
    %v1308 = vpop.xlane.xlu0 %1307
    %v1309 = vsub.f32 %v1287, %v1302
    %v1310 = vsub.f32 %v1292, %v1305
    %v1311 = vsub.f32 %v1297, %v1308
    %v1312 = vmul.f32 %v1309, 1.442695
    %v1313 = vpow.pop %v1312
    %v1314 = vmul.f32 %v1310, 1.442695
    %v1315 = vpow.pop %v1314
    %v1316 = vmul.f32 %v1311, 1.442695
    %v1317 = vpow.pop %v1316
    %v1318 = vsel %vm831, %v1313, 0.0
    %1319 = vadd.xlane.f32.xlu0 %v1318
    %v1320 = vpop.xlane.xlu0 %1319
    %v1321 = vsel %vm831, %v1315, 0.0
    %1322 = vadd.xlane.f32.xlu0 %v1321
    %v1323 = vpop.xlane.xlu0 %1322
    %v1324 = vsel %vm838, %v1317, 0.0
    %1325 = vadd.xlane.f32.xlu0 %v1324
    %v1326 = vpop.xlane.xlu0 %1325
    %v1327 = vrcp.pop %v1320
    %v1328 = vmul.f32 %v1313, %v1327
    %v1329 = vrcp.pop %v1323
    %v1330 = vmul.f32 %v1315, %v1329
    %v1331 = vrcp.pop %v1326
    %v1332 = vmul.f32 %v1317, %v1331
    %1333 = vrot.lane.b32.xlu0 %v719, 112
    %v1334 = vpop.permute.xlu0 %1333
    %1335 = vrot.lane.b32.xlu0 %v724, 112
    %v1336 = vpop.permute.xlu0 %1335
    %1337 = vrot.lane.b32.xlu0 %v729, 112
    %v1338 = vpop.permute.xlu0 %1337
    %v1342 = vsel %vm831, %v1328, 0
    %v1345 = vsel %vm831, %v1330, 0
    %v1348 = vsel %vm831, %v1332, 0
    %v1350 = vsel %vm211, %v1338, 0
    %1352 = vmatprep.subr.mxu0 0.0
    %1353 = vmatpush1.msra.mxu0 %v1334
    %1354 = vmatprep.subr.mxu0 0.0
    %1355 = vmatpush1.msra.mxu0 %v1336
    %1356 = vmatprep.subr.mxu0 0.0
    %1357 = vmatpush1.msra.mxu0 %v1350
    %1358 = vmatprep.subr.mxu0 0.0
    %1359 = vmatpush1.msra.mxu0 0.0
    %1360 = vmatprep.subr.mxu0 0.0
    %1361 = vmatpush1.msra.mxu0 0.0
    %1362 = vmatprep.subr.mxu0 0.0
    %1363 = vmatpush1.msra.mxu0 0.0
    %1364 = vmatprep.subr.mxu0 0.0
    %1365 = vmatpush1.msra.mxu0 0.0
    %1366 = vmatprep.subr.mxu0 0.0
    %1367 = vmatpush1.msra.mxu0 0.0
    %1368 = vmatprep.subr.mxu0 0.0
    %1369 = vmatpush1.msra.mxu0 0.0
    %1370 = vmatprep.subr.mxu0 0.0
    %1371 = vmatpush1.msra.mxu0 0.0
    %1372 = vmatprep.subr.mxu0 0.0
    %1373 = vmatpush1.msra.mxu0 0.0
    %1374 = vmatprep.subr.mxu0 0.0
    %1375 = vmatpush1.msra.mxu0 0.0
    %1376 = vmatprep.subr.mxu0 0.0
    %1377 = vmatpush1.msra.mxu0 0.0
    %1378 = vmatprep.subr.mxu0 0.0
    %1379 = vmatpush1.msra.mxu0 0.0
    %1380 = vmatprep.subr.mxu0 0.0
    %1381 = vmatpush1.msra.mxu0 0.0
    %1382 = vmatprep.subr.mxu0 0.0
    %1383 = vmatpush1.msra.mxu0 0.0
    %1384 = vmatprep.subr.mxu0 0.0
    %1385 = vmatpush1.msra.mxu0 0.0
    %1386 = vmatprep.subr.mxu0 0.0
    %1387 = vmatpush1.msra.mxu0 0.0
    %1388 = vmatprep.subr.mxu0 0.0
    %1389 = vmatpush1.msra.mxu0 0.0
    %1390 = vmatprep.subr.mxu0 0.0
    %1391 = vmatpush1.msra.mxu0 0.0
    %1392 = vmatprep.subr.mxu0 0.0
    %1393 = vmatpush1.msra.mxu0 0.0
    %1394 = vmatprep.subr.mxu0 0.0
    %1395 = vmatpush1.msra.mxu0 0.0
    %1396 = vmatprep.subr.mxu0 0.0
    %1397 = vmatpush1.msra.mxu0 0.0
    %1398 = vmatprep.subr.mxu0 0.0
    %1399 = vmatpush1.msra.mxu0 0.0
    %1400 = vmatprep.subr.mxu0 0.0
    %1401 = vmatpush1.msra.mxu0 0.0
    %1402 = vmatprep.subr.mxu0 0.0
    %1403 = vmatpush1.msra.mxu0 0.0
    %1404 = vmatprep.subr.mxu0 0.0
    %1405 = vmatpush1.msra.mxu0 0.0
    %1406 = vmatprep.subr.mxu0 0.0
    %1407 = vmatpush1.msra.mxu0 0.0
    %1408 = vmatprep.subr.mxu0 0.0
    %1409 = vmatpush1.msra.mxu0 0.0
    %1410 = vmatprep.subr.mxu0 0.0
    %1411 = vmatpush1.msra.mxu0 0.0
    %1412 = vmatprep.subr.mxu0 0.0
    %1413 = vmatpush1.msra.mxu0 0.0
    %1414 = vmatprep.subr.mxu0 0.0
    %1415 = vmatpush1.msra.mxu0 0.0
    %1416 = vmatprep.mubr.f32.mxu0 0.0
    %1417 = vmatmul.mubr.f32.gmra.mrb[0].mxu0 %v1342
    %v1418 = vpop.f32.mrb[0].mxu0
    %v1419 = vadd.f32 0.0, %v1418
    %v1420 = vpop.f32.mrb[0].mxu0
    %1421 = vmatprep.mubr.f32.mxu0 0.0
    %1422 = vmatmul.mubr.f32.gmra.mrb[0].mxu0 %v1345
    %v1423 = vpop.f32.mrb[0].mxu0
    %v1424 = vadd.f32 0.0, %v1423
    %v1425 = vpop.f32.mrb[0].mxu0
    %1426 = vmatprep.mubr.f32.mxu0 0.0
    %1427 = vmatmul.mubr.f32.gmra.mrb[0].mxu0 %v1348
    %v1428 = vpop.f32.mrb[0].mxu0
    %v1429 = vadd.f32 0.0, %v1428
    %v1430 = vpop.f32.mrb[0].mxu0
    %1431 = vdwg.mxu0
    %1432 = vrot.lane.b32.xlu0 %v547, 104
    %v1433 = vpop.permute.xlu0 %1432
    %1434 = vrot.lane.b32.xlu0 %v548, 104
    %v1435 = vpop.permute.xlu0 %1434
    %1436 = vrot.lane.b32.xlu0 %v549, 104
    %v1437 = vpop.permute.xlu0 %1436
    %1438 = vrot.lane.b32.xlu0 %v628, 104
    %v1439 = vpop.permute.xlu0 %1438
    %1440 = vrot.lane.b32.xlu0 %v633, 104
    %v1441 = vpop.permute.xlu0 %1440
    %1442 = vrot.lane.b32.xlu0 %v638, 104
    %v1443 = vpop.permute.xlu0 %1442
    %v1444 = vsel %vm732, %v1433, 0
    %v1446 = vsel %vm732, %v1435, 0
    %v1448 = vsel %vm732, %v1437, 0
    %v1450 = vsel %vm732, %v1439, 0
    %v1452 = vsel %vm732, %v1441, 0
    %v1454 = vsel %vm732, %v1443, 0
    %1456 = vmatprep.subr.mxu0 0.0
    %1457 = vmatpush1.xpose.msra.mxu0 %v1450
    %1458 = vmatprep.subr.mxu0 0.0
    %1459 = vmatpush1.xpose.msra.mxu0 %v1452
    %1460 = vmatprep.subr.mxu0 0.0
    %1461 = vmatpush1.xpose.msra.mxu0 %v1454
    %1462 = vmatprep.subr.mxu0 0.0
    %1463 = vmatpush1.xpose.msra.mxu0 0.0
    %1464 = vmatprep.subr.mxu0 0.0
    %1465 = vmatpush1.xpose.msra.mxu0 0.0
    %1466 = vmatprep.subr.mxu0 0.0
    %1467 = vmatpush1.xpose.msra.mxu0 0.0
    %1468 = vmatprep.subr.mxu0 0.0
    %1469 = vmatpush1.xpose.msra.mxu0 0.0
    %1470 = vmatprep.subr.mxu0 0.0
    %1471 = vmatpush1.xpose.msra.mxu0 0.0
    %1472 = vmatprep.subr.mxu0 0.0
    %1473 = vmatpush1.xpose.msra.mxu0 0.0
    %1474 = vmatprep.subr.mxu0 0.0
    %1475 = vmatpush1.xpose.msra.mxu0 0.0
    %1476 = vmatprep.subr.mxu0 0.0
    %1477 = vmatpush1.xpose.msra.mxu0 0.0
    %1478 = vmatprep.subr.mxu0 0.0
    %1479 = vmatpush1.xpose.msra.mxu0 0.0
    %1480 = vmatprep.subr.mxu0 0.0
    %1481 = vmatpush1.xpose.msra.mxu0 0.0
    %1482 = vmatprep.subr.mxu0 0.0
    %1483 = vmatpush1.xpose.msra.mxu0 0.0
    %1484 = vmatprep.subr.mxu0 0.0
    %1485 = vmatpush1.xpose.msra.mxu0 0.0
    %1486 = vmatprep.subr.mxu0 0.0
    %1487 = vmatpush1.xpose.msra.mxu0 0.0
    %1488 = vmatprep.subr.mxu0 0.0
    %1489 = vmatpush1.xpose.msra.mxu0 0.0
    %1490 = vmatprep.subr.mxu0 0.0
    %1491 = vmatpush1.xpose.msra.mxu0 0.0
    %1492 = vmatprep.subr.mxu0 0.0
    %1493 = vmatpush1.xpose.msra.mxu0 0.0
    %1494 = vmatprep.subr.mxu0 0.0
    %1495 = vmatpush1.xpose.msra.mxu0 0.0
    %1496 = vmatprep.subr.mxu0 0.0
    %1497 = vmatpush1.xpose.msra.mxu0 0.0
    %1498 = vmatprep.subr.mxu0 0.0
    %1499 = vmatpush1.xpose.msra.mxu0 0.0
    %1500 = vmatprep.subr.mxu0 0.0
    %1501 = vmatpush1.xpose.msra.mxu0 0.0
    %1502 = vmatprep.subr.mxu0 0.0
    %1503 = vmatpush1.xpose.msra.mxu0 0.0
    %1504 = vmatprep.subr.mxu0 0.0
    %1505 = vmatpush1.xpose.msra.mxu0 0.0
    %1506 = vmatprep.subr.mxu0 0.0
    %1507 = vmatpush1.xpose.msra.mxu0 0.0
    %1508 = vmatprep.subr.mxu0 0.0
    %1509 = vmatpush1.xpose.msra.mxu0 0.0
    %1510 = vmatprep.subr.mxu0 0.0
    %1511 = vmatpush1.xpose.msra.mxu0 0.0
    %1512 = vmatprep.subr.mxu0 0.0
    %1513 = vmatpush1.xpose.msra.mxu0 0.0
    %1514 = vmatprep.subr.mxu0 0.0
    %1515 = vmatpush1.xpose.msra.mxu0 0.0
    %1516 = vmatprep.subr.mxu0 0.0
    %1517 = vmatpush1.xpose.msra.mxu0 0.0
    %1518 = vmatprep.subr.mxu0 0.0
    %1519 = vmatpush1.xpose.msra.mxu0 0.0
    %1520 = vmatprep.mubr.f32.mxu0 0.0
    %1521 = vmatmul.mubr.f32.gmra.mrb[0].mxu0 %v1444
    %v1522 = vpop.f32.mrb[0].mxu0
    %v1523 = vadd.f32 %v382, %v1522
    %v1524 = vpop.f32.mrb[0].mxu0
    %1525 = vmatprep.mubr.f32.mxu0 0.0
    %1526 = vmatmul.mubr.f32.gmra.mrb[0].mxu0 %v1446
    %v1527 = vpop.f32.mrb[0].mxu0
    %v1528 = vadd.f32 %v383, %v1527
    %v1529 = vpop.f32.mrb[0].mxu0
    %1530 = vmatprep.mubr.f32.mxu0 0.0
    %1531 = vmatmul.mubr.f32.gmra.mrb[0].mxu0 %v1448
    %v1532 = vpop.f32.mrb[0].mxu0
    %v1533 = vadd.f32 %v384, %v1532
    %v1534 = vpop.f32.mrb[0].mxu0
    %1535 = vdwg.mxu0
    %v1536 = vsel %vm831, %v1523, -inf
    %1537 = vmax.xlane.f32.xlu0 %v1536
    %v1538 = vpop.xlane.xlu0 %1537
    %v1539 = vsel %vm831, %v1528, -inf
    %1540 = vmax.xlane.f32.xlu0 %v1539
    %v1541 = vpop.xlane.xlu0 %1540
    %v1542 = vsel %vm838, %v1533, -inf
    %1543 = vmax.xlane.f32.xlu0 %v1542
    %v1544 = vpop.xlane.xlu0 %1543
    %v1545 = vsub.f32 %v1523, %v1538
    %v1546 = vsub.f32 %v1528, %v1541
    %v1547 = vsub.f32 %v1533, %v1544
    %v1548 = vmul.f32 %v1545, 1.442695
    %v1549 = vpow.pop %v1548
    %v1550 = vmul.f32 %v1546, 1.442695
    %v1551 = vpow.pop %v1550
    %v1552 = vmul.f32 %v1547, 1.442695
    %v1553 = vpow.pop %v1552
    %v1554 = vsel %vm831, %v1549, 0.0
    %1555 = vadd.xlane.f32.xlu0 %v1554
    %v1556 = vpop.xlane.xlu0 %1555
    %v1557 = vsel %vm831, %v1551, 0.0
    %1558 = vadd.xlane.f32.xlu0 %v1557
    %v1559 = vpop.xlane.xlu0 %1558
    %v1560 = vsel %vm838, %v1553, 0.0
    %1561 = vadd.xlane.f32.xlu0 %v1560
    %v1562 = vpop.xlane.xlu0 %1561
    %v1563 = vrcp.pop %v1556
    %v1564 = vmul.f32 %v1549, %v1563
    %v1565 = vrcp.pop %v1559
    %v1566 = vmul.f32 %v1551, %v1565
    %v1567 = vrcp.pop %v1562
    %v1568 = vmul.f32 %v1553, %v1567
    %1569 = vrot.lane.b32.xlu0 %v719, 104
    %v1570 = vpop.permute.xlu0 %1569
    %1571 = vrot.lane.b32.xlu0 %v724, 104
    %v1572 = vpop.permute.xlu0 %1571
    %1573 = vrot.lane.b32.xlu0 %v729, 104
    %v1574 = vpop.permute.xlu0 %1573
    %v1578 = vsel %vm831, %v1564, 0
    %v1581 = vsel %vm831, %v1566, 0
    %v1584 = vsel %vm831, %v1568, 0
    %v1586 = vsel %vm211, %v1574, 0
    %1588 = vmatprep.subr.mxu0 0.0
    %1589 = vmatpush1.msra.mxu0 %v1570
    %1590 = vmatprep.subr.mxu0 0.0
    %1591 = vmatpush1.msra.mxu0 %v1572
    %1592 = vmatprep.subr.mxu0 0.0
    %1593 = vmatpush1.msra.mxu0 %v1586
    %1594 = vmatprep.subr.mxu0 0.0
    %1595 = vmatpush1.msra.mxu0 0.0
    %1596 = vmatprep.subr.mxu0 0.0
    %1597 = vmatpush1.msra.mxu0 0.0
    %1598 = vmatprep.subr.mxu0 0.0
    %1599 = vmatpush1.msra.mxu0 0.0
    %1600 = vmatprep.subr.mxu0 0.0
    %1601 = vmatpush1.msra.mxu0 0.0
    %1602 = vmatprep.subr.mxu0 0.0
    %1603 = vmatpush1.msra.mxu0 0.0
    %1604 = vmatprep.subr.mxu0 0.0
    %1605 = vmatpush1.msra.mxu0 0.0
    %1606 = vmatprep.subr.mxu0 0.0
    %1607 = vmatpush1.msra.mxu0 0.0
    %1608 = vmatprep.subr.mxu0 0.0
    %1609 = vmatpush1.msra.mxu0 0.0
    %1610 = vmatprep.subr.mxu0 0.0
    %1611 = vmatpush1.msra.mxu0 0.0
    %1612 = vmatprep.subr.mxu0 0.0
    %1613 = vmatpush1.msra.mxu0 0.0
    %1614 = vmatprep.subr.mxu0 0.0
    %1615 = vmatpush1.msra.mxu0 0.0
    %1616 = vmatprep.subr.mxu0 0.0
    %1617 = vmatpush1.msra.mxu0 0.0
    %1618 = vmatprep.subr.mxu0 0.0
    %1619 = vmatpush1.msra.mxu0 0.0
    %1620 = vmatprep.subr.mxu0 0.0
    %1621 = vmatpush1.msra.mxu0 0.0
    %1622 = vmatprep.subr.mxu0 0.0
    %1623 = vmatpush1.msra.mxu0 0.0
    %1624 = vmatprep.subr.mxu0 0.0
    %1625 = vmatpush1.msra.mxu0 0.0
    %1626 = vmatprep.subr.mxu0 0.0
    %1627 = vmatpush1.msra.mxu0 0.0
    %1628 = vmatprep.subr.mxu0 0.0
    %1629 = vmatpush1.msra.mxu0 0.0
    %1630 = vmatprep.subr.mxu0 0.0
    %1631 = vmatpush1.msra.mxu0 0.0
    %1632 = vmatprep.subr.mxu0 0.0
    %1633 = vmatpush1.msra.mxu0 0.0
    %1634 = vmatprep.subr.mxu0 0.0
    %1635 = vmatpush1.msra.mxu0 0.0
    %1636 = vmatprep.subr.mxu0 0.0
    %1637 = vmatpush1.msra.mxu0 0.0
    %1638 = vmatprep.subr.mxu0 0.0
    %1639 = vmatpush1.msra.mxu0 0.0
    %1640 = vmatprep.subr.mxu0 0.0
    %1641 = vmatpush1.msra.mxu0 0.0
    %1642 = vmatprep.subr.mxu0 0.0
    %1643 = vmatpush1.msra.mxu0 0.0
    %1644 = vmatprep.subr.mxu0 0.0
    %1645 = vmatpush1.msra.mxu0 0.0
    %1646 = vmatprep.subr.mxu0 0.0
    %1647 = vmatpush1.msra.mxu0 0.0
    %1648 = vmatprep.subr.mxu0 0.0
    %1649 = vmatpush1.msra.mxu0 0.0
    %1650 = vmatprep.subr.mxu0 0.0
    %1651 = vmatpush1.msra.mxu0 0.0
    %1652 = vmatprep.mubr.f32.mxu0 0.0
    %1653 = vmatmul.mubr.f32.gmra.mrb[0].mxu0 %v1578
    %v1654 = vpop.f32.mrb[0].mxu0
    %v1655 = vadd.f32 0.0, %v1654
    %v1656 = vpop.f32.mrb[0].mxu0
    %1657 = vmatprep.mubr.f32.mxu0 0.0
    %1658 = vmatmul.mubr.f32.gmra.mrb[0].mxu0 %v1581
    %v1659 = vpop.f32.mrb[0].mxu0
    %v1660 = vadd.f32 0.0, %v1659
    %v1661 = vpop.f32.mrb[0].mxu0
    %1662 = vmatprep.mubr.f32.mxu0 0.0
    %1663 = vmatmul.mubr.f32.gmra.mrb[0].mxu0 %v1584
    %v1664 = vpop.f32.mrb[0].mxu0
    %v1665 = vadd.f32 0.0, %v1664
    %v1666 = vpop.f32.mrb[0].mxu0
    %1667 = vdwg.mxu0
    %1671 = vrot.lane.b32.xlu0 %v1183, 8
    %v1672 = vpop.permute.xlu0 %1671
    %1673 = vrot.lane.b32.xlu0 %v1188, 8
    %v1674 = vpop.permute.xlu0 %1673
    %1675 = vrot.lane.b32.xlu0 %v1193, 8
    %v1676 = vpop.permute.xlu0 %1675
    %1683 = vrot.lane.b32.xlu0 %v1419, 16
    %v1684 = vpop.permute.xlu0 %1683
    %1685 = vrot.lane.b32.xlu0 %v1424, 16
    %v1686 = vpop.permute.xlu0 %1685
    %1687 = vrot.lane.b32.xlu0 %v1429, 16
    %v1688 = vpop.permute.xlu0 %1687
    %1695 = vrot.lane.b32.xlu0 %v1655, 24
    %v1696 = vpop.permute.xlu0 %1695
    %1697 = vrot.lane.b32.xlu0 %v1660, 24
    %v1698 = vpop.permute.xlu0 %1697
    %1699 = vrot.lane.b32.xlu0 %v1665, 24
    %v1700 = vpop.permute.xlu0 %1699
    %v1704 = vsel %vm732, %v945, %v1672
    %v1705 = vsel %vm732, %v950, %v1674
    %v1706 = vsel %vm732, %v955, %v1676
    %vm1707 = vcmask 130048
    %v1708 = vsel %vm1707, %v1704, %v1684
    %v1709 = vsel %vm1707, %v1705, %v1686
    %v1710 = vsel %vm1707, %v1706, %v1688
    %vm1711 = vcmask 195584
    %v1712 = vsel %vm1711, %v1708, %v1696
    %v1713 = vsel %vm1711, %v1709, %v1698
    %v1714 = vsel %vm1711, %v1710, %v1700
    %v1715 = vld [vmem:[%s13] sm:$0xff]
    %v1716 = vld [vmem:[%s13 + $0x8] sm:$0xff]
    %v1717 = vld [vmem:[%s13 + $0x10] sm:$0xff]
    %v1718 = vld [vmem:[%s13 + $0x18] sm:$0xff]
    %v1720 = vsel %vm387, %v1712, 0
    %v1723 = vsel %vm387, %v1713, 0
    %v1726 = vsel %vm387, %v1714, 0
    %1728 = vmatprep.subr.mxu0 0.0
    %1729 = vmatpush1.msra.mxu0 %v1715
    %1730 = vmatprep.subr.mxu0 0.0
    %1731 = vmatpush1.msra.mxu0 %v1716
    %1732 = vmatprep.subr.mxu0 0.0
    %1733 = vmatpush1.msra.mxu0 %v1717
    %1734 = vmatprep.subr.mxu0 0.0
    %1735 = vmatpush1.msra.mxu0 %v1718
    %1736 = vmatprep.subr.mxu0 0.0
    %1737 = vmatpush1.msra.mxu0 0.0
    %1738 = vmatprep.subr.mxu0 0.0
    %1739 = vmatpush1.msra.mxu0 0.0
    %1740 = vmatprep.subr.mxu0 0.0
    %1741 = vmatpush1.msra.mxu0 0.0
    %1742 = vmatprep.subr.mxu0 0.0
    %1743 = vmatpush1.msra.mxu0 0.0
    %1744 = vmatprep.subr.mxu0 0.0
    %1745 = vmatpush1.msra.mxu0 0.0
    %1746 = vmatprep.subr.mxu0 0.0
    %1747 = vmatpush1.msra.mxu0 0.0
    %1748 = vmatprep.subr.mxu0 0.0
    %1749 = vmatpush1.msra.mxu0 0.0
    %1750 = vmatprep.subr.mxu0 0.0
    %1751 = vmatpush1.msra.mxu0 0.0
    %1752 = vmatprep.subr.mxu0 0.0
    %1753 = vmatpush1.msra.mxu0 0.0
    %1754 = vmatprep.subr.mxu0 0.0
    %1755 = vmatpush1.msra.mxu0 0.0
    %1756 = vmatprep.subr.mxu0 0.0
    %1757 = vmatpush1.msra.mxu0 0.0
    %1758 = vmatprep.subr.mxu0 0.0
    %1759 = vmatpush1.msra.mxu0 0.0
    %1760 = vmatprep.subr.mxu0 0.0
    %1761 = vmatpush1.msra.mxu0 0.0
    %1762 = vmatprep.subr.mxu0 0.0
    %1763 = vmatpush1.msra.mxu0 0.0
    %1764 = vmatprep.subr.mxu0 0.0
    %1765 = vmatpush1.msra.mxu0 0.0
    %1766 = vmatprep.subr.mxu0 0.0
    %1767 = vmatpush1.msra.mxu0 0.0
    %1768 = vmatprep.subr.mxu0 0.0
    %1769 = vmatpush1.msra.mxu0 0.0
    %1770 = vmatprep.subr.mxu0 0.0
    %1771 = vmatpush1.msra.mxu0 0.0
    %1772 = vmatprep.subr.mxu0 0.0
    %1773 = vmatpush1.msra.mxu0 0.0
    %1774 = vmatprep.subr.mxu0 0.0
    %1775 = vmatpush1.msra.mxu0 0.0
    %1776 = vmatprep.subr.mxu0 0.0
    %1777 = vmatpush1.msra.mxu0 0.0
    %1778 = vmatprep.subr.mxu0 0.0
    %1779 = vmatpush1.msra.mxu0 0.0
    %1780 = vmatprep.subr.mxu0 0.0
    %1781 = vmatpush1.msra.mxu0 0.0
    %1782 = vmatprep.subr.mxu0 0.0
    %1783 = vmatpush1.msra.mxu0 0.0
    %1784 = vmatprep.subr.mxu0 0.0
    %1785 = vmatpush1.msra.mxu0 0.0
    %1786 = vmatprep.subr.mxu0 0.0
    %1787 = vmatpush1.msra.mxu0 0.0
    %1788 = vmatprep.subr.mxu0 0.0
    %1789 = vmatpush1.msra.mxu0 0.0
    %1790 = vmatprep.subr.mxu0 0.0
    %1791 = vmatpush1.msra.mxu0 0.0
    %1792 = vmatprep.mubr.f32.mxu0 0.0
    %1793 = vmatmul.mubr.f32.gmra.mrb[0].mxu0 %v1720
    %v1794 = vpop.f32.mrb[0].mxu0
    %v1795 = vadd.f32 0.0, %v1794
    %v1796 = vpop.f32.mrb[0].mxu0
    %1797 = vmatprep.mubr.f32.mxu0 0.0
    %1798 = vmatmul.mubr.f32.gmra.mrb[0].mxu0 %v1723
    %v1799 = vpop.f32.mrb[0].mxu0
    %v1800 = vadd.f32 0.0, %v1799
    %v1801 = vpop.f32.mrb[0].mxu0
    %1802 = vmatprep.mubr.f32.mxu0 0.0
    %1803 = vmatmul.mubr.f32.gmra.mrb[0].mxu0 %v1726
    %v1804 = vpop.f32.mrb[0].mxu0
    %v1805 = vadd.f32 0.0, %v1804
    %v1806 = vpop.f32.mrb[0].mxu0
    %1807 = vdwg.mxu0
    %v1808 = vadd.f32 %v348, %v1795
    %v1809 = vadd.f32 %v349, %v1800
    %v1810 = vadd.f32 %v350, %v1805
    %v1811 = vld [vmem:[%s14] sm:$0x1]
    %v1813 = vlaneseq
    %v1814 = vshrl.u32 %v1813, 7
    %v1815 = vsub.s32 0, %v1814
    %v1816 = vrot.slane %v1811, %v1815
    %v1818 = vadd.f32 %v1808, %v1816
    %v1819 = vadd.f32 %v1809, %v1816
    %v1820 = vadd.f32 %v1810, %v1816
    %v1821 = vld [vmem:[%s15] sm:$0x1]
    %v1822 = vld [vmem:[%s16] sm:$0x1]
    %v1823 = vsel %vm387, %v1818, 0.0
    %1824 = vadd.xlane.f32.xlu0 %v1823
    %v1825 = vpop.xlane.xlu0 %1824
    %v1826 = vsel %vm387, %v1819, 0.0
    %1827 = vadd.xlane.f32.xlu0 %v1826
    %v1828 = vpop.xlane.xlu0 %1827
    %v1829 = vsel %vm394, %v1820, 0.0
    %1830 = vadd.xlane.f32.xlu0 %v1829
    %v1831 = vpop.xlane.xlu0 %1830
    %v1832 = vmul.f32 %v1825, %v398
    %v1833 = vmul.f32 %v1828, %v398
    %v1834 = vmul.f32 %v1831, %v398
    %v1835 = vsub.f32 %v1818, %v1832
    %v1836 = vsub.f32 %v1819, %v1833
    %v1837 = vsub.f32 %v1820, %v1834
    %v1838 = vmul.f32 %v1835, %v1835
    %v1839 = vmul.f32 %v1836, %v1836
    %v1840 = vmul.f32 %v1837, %v1837
    %v1841 = vsel %vm387, %v1838, 0.0
    %1842 = vadd.xlane.f32.xlu0 %v1841
    %v1843 = vpop.xlane.xlu0 %1842
    %v1844 = vsel %vm387, %v1839, 0.0
    %1845 = vadd.xlane.f32.xlu0 %v1844
    %v1846 = vpop.xlane.xlu0 %1845
    %v1847 = vsel %vm394, %v1840, 0.0
    %1848 = vadd.xlane.f32.xlu0 %v1847
    %v1849 = vpop.xlane.xlu0 %1848
    %v1850 = vmul.f32 %v1843, %v398
    %v1851 = vmul.f32 %v1846, %v398
    %v1852 = vmul.f32 %v1849, %v398
    %v1853 = vadd.f32 %v1850, 1e-05
    %v1854 = vadd.f32 %v1851, 1e-05
    %v1855 = vadd.f32 %v1852, 1e-05
    %v1856 = vrsqrt.pop %v1853
    %v1857 = vrsqrt.pop %v1854
    %v1858 = vrsqrt.pop %v1855
    %v1859 = vmul.f32 %v1835, %v1856
    %v1860 = vmul.f32 %v1836, %v1857
    %v1861 = vmul.f32 %v1837, %v1858
    %v1863 = vlaneseq
    %v1864 = vshrl.u32 %v1863, 7
    %v1865 = vsub.s32 0, %v1864
    %v1866 = vrot.slane %v1821, %v1865
    %v1868 = vmul.f32 %v1859, %v1866
    %v1869 = vmul.f32 %v1860, %v1866
    %v1870 = vmul.f32 %v1861, %v1866
    %v1872 = vlaneseq
    %v1873 = vshrl.u32 %v1872, 7
    %v1874 = vsub.s32 0, %v1873
    %v1875 = vrot.slane %v1822, %v1874
    %v1877 = vadd.f32 %v1868, %v1875
    %v1878 = vadd.f32 %v1869, %v1875
    %v1879 = vadd.f32 %v1870, %v1875
    %v1880 = vld [vmem:[#allocation10] sm:$0xff]
    %v1881 = vld [vmem:[#allocation10 + $0x8] sm:$0xff]
    %v1882 = vld [vmem:[#allocation10 + $0x10] sm:$0xff]
    %v1883 = vld [vmem:[#allocation10 + $0x18] sm:$0xff]
    %v1884 = vld [vmem:[%s18] sm:$0x1]
    %v1886 = vlaneseq
    %v1887 = vshrl.u32 %v1886, 7
    %v1888 = vsub.s32 0, %v1887
    %v1889 = vrot.slane %v1884, %v1888
    %v1892 = vsel %vm387, %v1877, 0
    %v1895 = vsel %vm387, %v1878, 0
    %v1898 = vsel %vm387, %v1879, 0
    %1900 = vmatprep.subr.mxu0 0.0
    %1901 = vmatpush1.msra.mxu0 %v1880
    %1902 = vmatprep.subr.mxu0 0.0
    %1903 = vmatpush1.msra.mxu0 %v1881
    %1904 = vmatprep.subr.mxu0 0.0
    %1905 = vmatpush1.msra.mxu0 %v1882
    %1906 = vmatprep.subr.mxu0 0.0
    %1907 = vmatpush1.msra.mxu0 %v1883
    %1908 = vmatprep.subr.mxu0 0.0
    %1909 = vmatpush1.msra.mxu0 0.0
    %1910 = vmatprep.subr.mxu0 0.0
    %1911 = vmatpush1.msra.mxu0 0.0
    %1912 = vmatprep.subr.mxu0 0.0
    %1913 = vmatpush1.msra.mxu0 0.0
    %1914 = vmatprep.subr.mxu0 0.0
    %1915 = vmatpush1.msra.mxu0 0.0
    %1916 = vmatprep.subr.mxu0 0.0
    %1917 = vmatpush1.msra.mxu0 0.0
    %1918 = vmatprep.subr.mxu0 0.0
    %1919 = vmatpush1.msra.mxu0 0.0
    %1920 = vmatprep.subr.mxu0 0.0
    %1921 = vmatpush1.msra.mxu0 0.0
    %1922 = vmatprep.subr.mxu0 0.0
    %1923 = vmatpush1.msra.mxu0 0.0
    %1924 = vmatprep.subr.mxu0 0.0
    %1925 = vmatpush1.msra.mxu0 0.0
    %1926 = vmatprep.subr.mxu0 0.0
    %1927 = vmatpush1.msra.mxu0 0.0
    %1928 = vmatprep.subr.mxu0 0.0
    %1929 = vmatpush1.msra.mxu0 0.0
    %1930 = vmatprep.subr.mxu0 0.0
    %1931 = vmatpush1.msra.mxu0 0.0
    %1932 = vmatprep.subr.mxu0 0.0
    %1933 = vmatpush1.msra.mxu0 0.0
    %1934 = vmatprep.subr.mxu0 0.0
    %1935 = vmatpush1.msra.mxu0 0.0
    %1936 = vmatprep.subr.mxu0 0.0
    %1937 = vmatpush1.msra.mxu0 0.0
    %1938 = vmatprep.subr.mxu0 0.0
    %1939 = vmatpush1.msra.mxu0 0.0
    %1940 = vmatprep.subr.mxu0 0.0
    %1941 = vmatpush1.msra.mxu0 0.0
    %1942 = vmatprep.subr.mxu0 0.0
    %1943 = vmatpush1.msra.mxu0 0.0
    %1944 = vmatprep.subr.mxu0 0.0
    %1945 = vmatpush1.msra.mxu0 0.0
    %1946 = vmatprep.subr.mxu0 0.0
    %1947 = vmatpush1.msra.mxu0 0.0
    %1948 = vmatprep.subr.mxu0 0.0
    %1949 = vmatpush1.msra.mxu0 0.0
    %1950 = vmatprep.subr.mxu0 0.0
    %1951 = vmatpush1.msra.mxu0 0.0
    %1952 = vmatprep.subr.mxu0 0.0
    %1953 = vmatpush1.msra.mxu0 0.0
    %1954 = vmatprep.subr.mxu0 0.0
    %1955 = vmatpush1.msra.mxu0 0.0
    %1956 = vmatprep.subr.mxu0 0.0
    %1957 = vmatpush1.msra.mxu0 0.0
    %1958 = vmatprep.subr.mxu0 0.0
    %1959 = vmatpush1.msra.mxu0 0.0
    %1960 = vmatprep.subr.mxu0 0.0
    %1961 = vmatpush1.msra.mxu0 0.0
    %1962 = vmatprep.subr.mxu0 0.0
    %1963 = vmatpush1.msra.mxu0 0.0
    %1964 = vmatprep.mubr.f32.mxu0 0.0
    %1965 = vmatmul.mubr.f32.gmra.mrb[0].mxu0 %v1892
    %v1966 = vpop.f32.mrb[0].mxu0
    %v1967 = vadd.f32 %v1889, %v1966
    %v1968 = vpop.f32.mrb[0].mxu0
    %1969 = vmatprep.mubr.f32.mxu0 0.0
    %1970 = vmatmul.mubr.f32.gmra.mrb[0].mxu0 %v1895
    %v1971 = vpop.f32.mrb[0].mxu0
    %v1972 = vadd.f32 %v1889, %v1971
    %v1973 = vpop.f32.mrb[0].mxu0
    %1974 = vmatprep.mubr.f32.mxu0 0.0
    %1975 = vmatmul.mubr.f32.gmra.mrb[0].mxu0 %v1898
    %v1976 = vpop.f32.mrb[0].mxu0
    %v1977 = vadd.f32 %v1889, %v1976
    %v1978 = vpop.f32.mrb[0].mxu0
    %1979 = vdwg.mxu0
    %v1980 = vmul.f32 %v1967, %v1967
    %v1981 = vmul.f32 %v1972, %v1972
    %v1982 = vmul.f32 %v1977, %v1977
    %v1983 = vmul.f32 %v1967, %v1980
    %v1984 = vmul.f32 %v1972, %v1981
    %v1985 = vmul.f32 %v1977, %v1982
    %v1986 = vmul.f32 %v1983, 0.044715
    %v1987 = vmul.f32 %v1984, 0.044715
    %v1988 = vmul.f32 %v1985, 0.044715
    %v1989 = vadd.f32 %v1967, %v1986
    %v1990 = vadd.f32 %v1972, %v1987
    %v1991 = vadd.f32 %v1977, %v1988
    %v1992 = vmul.f32 %v1989, 0.7978846
    %v1993 = vmul.f32 %v1990, 0.7978846
    %v1994 = vmul.f32 %v1991, 0.7978846
    %v1995 = vtanh.pop %v1992
    %v1996 = vtanh.pop %v1993
    %v1997 = vtanh.pop %v1994
    %v1998 = vadd.f32 %v1995, 1.0
    %v1999 = vadd.f32 %v1996, 1.0
    %v2000 = vadd.f32 %v1997, 1.0
    %v2001 = vmul.f32 %v1998, 0.5
    %v2002 = vmul.f32 %v1999, 0.5
    %v2003 = vmul.f32 %v2000, 0.5
    %v2004 = vmul.f32 %v1967, %v2001
    %v2005 = vmul.f32 %v1972, %v2002
    %v2006 = vmul.f32 %v1977, %v2003
    %v2007 = vld [vmem:[%s19] sm:$0xff]
    %v2008 = vld [vmem:[%s19 + $0x8] sm:$0xff]
    %v2009 = vld [vmem:[%s19 + $0x10] sm:$0xff]
    %v2010 = vld [vmem:[%s19 + $0x18] sm:$0xff]
    %v2011 = vld [vmem:[%s19 + $0x20] sm:$0xff]
    %v2012 = vld [vmem:[%s19 + $0x28] sm:$0xff]
    %v2013 = vld [vmem:[%s19 + $0x30] sm:$0xff]
    %v2014 = vld [vmem:[%s19 + $0x38] sm:$0xff]
    %vm2015 = vcmask 523264
    %v2017 = vsel %vm2015, %v2004, 0
    %v2020 = vsel %vm2015, %v2005, 0
    %v2023 = vsel %vm2015, %v2006, 0
    %2025 = vmatprep.subr.mxu0 0.0
    %2026 = vmatpush1.msra.mxu0 %v2007
    %2027 = vmatprep.subr.mxu0 0.0
    %2028 = vmatpush1.msra.mxu0 %v2008
    %2029 = vmatprep.subr.mxu0 0.0
    %2030 = vmatpush1.msra.mxu0 %v2009
    %2031 = vmatprep.subr.mxu0 0.0
    %2032 = vmatpush1.msra.mxu0 %v2010
    %2033 = vmatprep.subr.mxu0 0.0
    %2034 = vmatpush1.msra.mxu0 %v2011
    %2035 = vmatprep.subr.mxu0 0.0
    %2036 = vmatpush1.msra.mxu0 %v2012
    %2037 = vmatprep.subr.mxu0 0.0
    %2038 = vmatpush1.msra.mxu0 %v2013
    %2039 = vmatprep.subr.mxu0 0.0
    %2040 = vmatpush1.msra.mxu0 %v2014
    %2041 = vmatprep.subr.mxu0 0.0
    %2042 = vmatpush1.msra.mxu0 0.0
    %2043 = vmatprep.subr.mxu0 0.0
    %2044 = vmatpush1.msra.mxu0 0.0
    %2045 = vmatprep.subr.mxu0 0.0
    %2046 = vmatpush1.msra.mxu0 0.0
    %2047 = vmatprep.subr.mxu0 0.0
    %2048 = vmatpush1.msra.mxu0 0.0
    %2049 = vmatprep.subr.mxu0 0.0
    %2050 = vmatpush1.msra.mxu0 0.0
    %2051 = vmatprep.subr.mxu0 0.0
    %2052 = vmatpush1.msra.mxu0 0.0
    %2053 = vmatprep.subr.mxu0 0.0
    %2054 = vmatpush1.msra.mxu0 0.0
    %2055 = vmatprep.subr.mxu0 0.0
    %2056 = vmatpush1.msra.mxu0 0.0
    %2057 = vmatprep.subr.mxu0 0.0
    %2058 = vmatpush1.msra.mxu0 0.0
    %2059 = vmatprep.subr.mxu0 0.0
    %2060 = vmatpush1.msra.mxu0 0.0
    %2061 = vmatprep.subr.mxu0 0.0
    %2062 = vmatpush1.msra.mxu0 0.0
    %2063 = vmatprep.subr.mxu0 0.0
    %2064 = vmatpush1.msra.mxu0 0.0
    %2065 = vmatprep.subr.mxu0 0.0
    %2066 = vmatpush1.msra.mxu0 0.0
    %2067 = vmatprep.subr.mxu0 0.0
    %2068 = vmatpush1.msra.mxu0 0.0
    %2069 = vmatprep.subr.mxu0 0.0
    %2070 = vmatpush1.msra.mxu0 0.0
    %2071 = vmatprep.subr.mxu0 0.0
    %2072 = vmatpush1.msra.mxu0 0.0
    %2073 = vmatprep.subr.mxu0 0.0
    %2074 = vmatpush1.msra.mxu0 0.0
    %2075 = vmatprep.subr.mxu0 0.0
    %2076 = vmatpush1.msra.mxu0 0.0
    %2077 = vmatprep.subr.mxu0 0.0
    %2078 = vmatpush1.msra.mxu0 0.0
    %2079 = vmatprep.subr.mxu0 0.0
    %2080 = vmatpush1.msra.mxu0 0.0
    %2081 = vmatprep.subr.mxu0 0.0
    %2082 = vmatpush1.msra.mxu0 0.0
    %2083 = vmatprep.subr.mxu0 0.0
    %2084 = vmatpush1.msra.mxu0 0.0
    %2085 = vmatprep.subr.mxu0 0.0
    %2086 = vmatpush1.msra.mxu0 0.0
    %2087 = vmatprep.subr.mxu0 0.0
    %2088 = vmatpush1.msra.mxu0 0.0
    %2089 = vmatprep.mubr.f32.mxu0 0.0
    %2090 = vmatmul.mubr.f32.gmra.mrb[0].mxu0 %v2017
    %v2091 = vpop.f32.mrb[0].mxu0
    %v2092 = vadd.f32 0.0, %v2091
    %v2093 = vpop.f32.mrb[0].mxu0
    %2094 = vmatprep.mubr.f32.mxu0 0.0
    %2095 = vmatmul.mubr.f32.gmra.mrb[0].mxu0 %v2020
    %v2096 = vpop.f32.mrb[0].mxu0
    %v2097 = vadd.f32 0.0, %v2096
    %v2098 = vpop.f32.mrb[0].mxu0
    %2099 = vmatprep.mubr.f32.mxu0 0.0
    %2100 = vmatmul.mubr.f32.gmra.mrb[0].mxu0 %v2023
    %v2101 = vpop.f32.mrb[0].mxu0
    %v2102 = vadd.f32 0.0, %v2101
    %v2103 = vpop.f32.mrb[0].mxu0
    %2104 = vdwg.mxu0
    %v2105 = vadd.f32 %v1818, %v2092
    %v2106 = vadd.f32 %v1819, %v2097
    %v2107 = vadd.f32 %v1820, %v2102
    %v2108 = vld [vmem:[%s20] sm:$0x1]
    %v2110 = vlaneseq
    %v2111 = vshrl.u32 %v2110, 7
    %v2112 = vsub.s32 0, %v2111
    %v2113 = vrot.slane %v2108, %v2112
    %v2115 = vadd.f32 %v2105, %v2113
    %v2116 = vadd.f32 %v2106, %v2113
    %v2117 = vadd.f32 %v2107, %v2113
    %s2118 = scalar_lea.vmem %s5, 1
    %v2119 = vld [vmem:[%s2118] sm:$0x1]
    %s2120 = scalar_lea.vmem %s6, 1
    %v2121 = vld [vmem:[%s2120] sm:$0x1]
    %v2122 = vsel %vm387, %v2115, 0.0
    %2123 = vadd.xlane.f32.xlu0 %v2122
    %v2124 = vpop.xlane.xlu0 %2123
    %v2125 = vsel %vm387, %v2116, 0.0
    %2126 = vadd.xlane.f32.xlu0 %v2125
    %v2127 = vpop.xlane.xlu0 %2126
    %v2128 = vsel %vm394, %v2117, 0.0
    %2129 = vadd.xlane.f32.xlu0 %v2128
    %v2130 = vpop.xlane.xlu0 %2129
    %v2131 = vmul.f32 %v2124, %v398
    %v2132 = vmul.f32 %v2127, %v398
    %v2133 = vmul.f32 %v2130, %v398
    %v2134 = vsub.f32 %v2115, %v2131
    %v2135 = vsub.f32 %v2116, %v2132
    %v2136 = vsub.f32 %v2117, %v2133
    %v2137 = vmul.f32 %v2134, %v2134
    %v2138 = vmul.f32 %v2135, %v2135
    %v2139 = vmul.f32 %v2136, %v2136
    %v2140 = vsel %vm387, %v2137, 0.0
    %2141 = vadd.xlane.f32.xlu0 %v2140
    %v2142 = vpop.xlane.xlu0 %2141
    %v2143 = vsel %vm387, %v2138, 0.0
    %2144 = vadd.xlane.f32.xlu0 %v2143
    %v2145 = vpop.xlane.xlu0 %2144
    %v2146 = vsel %vm394, %v2139, 0.0
    %2147 = vadd.xlane.f32.xlu0 %v2146
    %v2148 = vpop.xlane.xlu0 %2147
    %v2149 = vmul.f32 %v2142, %v398
    %v2150 = vmul.f32 %v2145, %v398
    %v2151 = vmul.f32 %v2148, %v398
    %v2152 = vadd.f32 %v2149, 1e-05
    %v2153 = vadd.f32 %v2150, 1e-05
    %v2154 = vadd.f32 %v2151, 1e-05
    %v2155 = vrsqrt.pop %v2152
    %v2156 = vrsqrt.pop %v2153
    %v2157 = vrsqrt.pop %v2154
    %v2158 = vmul.f32 %v2134, %v2155
    %v2159 = vmul.f32 %v2135, %v2156
    %v2160 = vmul.f32 %v2136, %v2157
    %v2162 = vlaneseq
    %v2163 = vshrl.u32 %v2162, 7
    %v2164 = vsub.s32 0, %v2163
    %v2165 = vrot.slane %v2119, %v2164
    %v2167 = vmul.f32 %v2158, %v2165
    %v2168 = vmul.f32 %v2159, %v2165
    %v2169 = vmul.f32 %v2160, %v2165
    %v2171 = vlaneseq
    %v2172 = vshrl.u32 %v2171, 7
    %v2173 = vsub.s32 0, %v2172
    %v2174 = vrot.slane %v2121, %v2173
    %v2176 = vadd.f32 %v2167, %v2174
    %v2177 = vadd.f32 %v2168, %v2174
    %v2178 = vadd.f32 %v2169, %v2174
    %s2179 = scalar_lea.vmem %s7, 32
    %v2180 = vld [vmem:[%s2179] sm:$0xff]
    %v2181 = vld [vmem:[%s2179 + $0x8] sm:$0xff]
    %v2182 = vld [vmem:[%s2179 + $0x10] sm:$0xff]
    %v2183 = vld [vmem:[%s2179 + $0x18] sm:$0xff]
    %s2184 = scalar_lea.vmem %s10, 1
    %v2185 = vld [vmem:[%s2184] sm:$0x1]
    %v2187 = vlaneseq
    %v2188 = vshrl.u32 %v2187, 7
    %v2189 = vsub.s32 0, %v2188
    %v2190 = vrot.slane %v2185, %v2189
    %v2193 = vsel %vm387, %v2176, 0
    %v2196 = vsel %vm387, %v2177, 0
    %v2199 = vsel %vm387, %v2178, 0
    %2201 = vmatprep.subr.mxu0 0.0
    %2202 = vmatpush1.msra.mxu0 %v2180
    %2203 = vmatprep.subr.mxu0 0.0
    %2204 = vmatpush1.msra.mxu0 %v2181
    %2205 = vmatprep.subr.mxu0 0.0
    %2206 = vmatpush1.msra.mxu0 %v2182
    %2207 = vmatprep.subr.mxu0 0.0
    %2208 = vmatpush1.msra.mxu0 %v2183
    %2209 = vmatprep.subr.mxu0 0.0
    %2210 = vmatpush1.msra.mxu0 0.0
    %2211 = vmatprep.subr.mxu0 0.0
    %2212 = vmatpush1.msra.mxu0 0.0
    %2213 = vmatprep.subr.mxu0 0.0
    %2214 = vmatpush1.msra.mxu0 0.0
    %2215 = vmatprep.subr.mxu0 0.0
    %2216 = vmatpush1.msra.mxu0 0.0
    %2217 = vmatprep.subr.mxu0 0.0
    %2218 = vmatpush1.msra.mxu0 0.0
    %2219 = vmatprep.subr.mxu0 0.0
    %2220 = vmatpush1.msra.mxu0 0.0
    %2221 = vmatprep.subr.mxu0 0.0
    %2222 = vmatpush1.msra.mxu0 0.0
    %2223 = vmatprep.subr.mxu0 0.0
    %2224 = vmatpush1.msra.mxu0 0.0
    %2225 = vmatprep.subr.mxu0 0.0
    %2226 = vmatpush1.msra.mxu0 0.0
    %2227 = vmatprep.subr.mxu0 0.0
    %2228 = vmatpush1.msra.mxu0 0.0
    %2229 = vmatprep.subr.mxu0 0.0
    %2230 = vmatpush1.msra.mxu0 0.0
    %2231 = vmatprep.subr.mxu0 0.0
    %2232 = vmatpush1.msra.mxu0 0.0
    %2233 = vmatprep.subr.mxu0 0.0
    %2234 = vmatpush1.msra.mxu0 0.0
    %2235 = vmatprep.subr.mxu0 0.0
    %2236 = vmatpush1.msra.mxu0 0.0
    %2237 = vmatprep.subr.mxu0 0.0
    %2238 = vmatpush1.msra.mxu0 0.0
    %2239 = vmatprep.subr.mxu0 0.0
    %2240 = vmatpush1.msra.mxu0 0.0
    %2241 = vmatprep.subr.mxu0 0.0
    %2242 = vmatpush1.msra.mxu0 0.0
    %2243 = vmatprep.subr.mxu0 0.0
    %2244 = vmatpush1.msra.mxu0 0.0
    %2245 = vmatprep.subr.mxu0 0.0
    %2246 = vmatpush1.msra.mxu0 0.0
    %2247 = vmatprep.subr.mxu0 0.0
    %2248 = vmatpush1.msra.mxu0 0.0
    %2249 = vmatprep.subr.mxu0 0.0
    %2250 = vmatpush1.msra.mxu0 0.0
    %2251 = vmatprep.subr.mxu0 0.0
    %2252 = vmatpush1.msra.mxu0 0.0
    %2253 = vmatprep.subr.mxu0 0.0
    %2254 = vmatpush1.msra.mxu0 0.0
    %2255 = vmatprep.subr.mxu0 0.0
    %2256 = vmatpush1.msra.mxu0 0.0
    %2257 = vmatprep.subr.mxu0 0.0
    %2258 = vmatpush1.msra.mxu0 0.0
    %2259 = vmatprep.subr.mxu0 0.0
    %2260 = vmatpush1.msra.mxu0 0.0
    %2261 = vmatprep.subr.mxu0 0.0
    %2262 = vmatpush1.msra.mxu0 0.0
    %2263 = vmatprep.subr.mxu0 0.0
    %2264 = vmatpush1.msra.mxu0 0.0
    %2265 = vmatprep.mubr.f32.mxu0 0.0
    %2266 = vmatmul.mubr.f32.gmra.mrb[0].mxu0 %v2193
    %v2267 = vpop.f32.mrb[0].mxu0
    %v2268 = vadd.f32 %v2190, %v2267
    %v2269 = vpop.f32.mrb[0].mxu0
    %2270 = vmatprep.mubr.f32.mxu0 0.0
    %2271 = vmatmul.mubr.f32.gmra.mrb[0].mxu0 %v2196
    %v2272 = vpop.f32.mrb[0].mxu0
    %v2273 = vadd.f32 %v2190, %v2272
    %v2274 = vpop.f32.mrb[0].mxu0
    %2275 = vmatprep.mubr.f32.mxu0 0.0
    %2276 = vmatmul.mubr.f32.gmra.mrb[0].mxu0 %v2199
    %v2277 = vpop.f32.mrb[0].mxu0
    %v2278 = vadd.f32 %v2190, %v2277
    %v2279 = vpop.f32.mrb[0].mxu0
    %2280 = vdwg.mxu0
    %v2281 = vmul.f32 %v2268, 0.35355338
    %v2282 = vmul.f32 %v2273, 0.35355338
    %v2283 = vmul.f32 %v2278, 0.35355338
    %s2284 = scalar_lea.vmem %s8, 32
    %v2285 = vld [vmem:[%s2284] sm:$0xff]
    %v2286 = vld [vmem:[%s2284 + $0x8] sm:$0xff]
    %v2287 = vld [vmem:[%s2284 + $0x10] sm:$0xff]
    %v2288 = vld [vmem:[%s2284 + $0x18] sm:$0xff]
    %s2289 = scalar_lea.vmem %s11, 1
    %v2290 = vld [vmem:[%s2289] sm:$0x1]
    %v2292 = vlaneseq
    %v2293 = vshrl.u32 %v2292, 7
    %v2294 = vsub.s32 0, %v2293
    %v2295 = vrot.slane %v2290, %v2294
    %2297 = vmatprep.subr.mxu0 0.0
    %2298 = vmatpush1.msra.mxu0 %v2285
    %2299 = vmatprep.subr.mxu0 0.0
    %2300 = vmatpush1.msra.mxu0 %v2286
    %2301 = vmatprep.subr.mxu0 0.0
    %2302 = vmatpush1.msra.mxu0 %v2287
    %2303 = vmatprep.subr.mxu0 0.0
    %2304 = vmatpush1.msra.mxu0 %v2288
    %2305 = vmatprep.subr.mxu0 0.0
    %2306 = vmatpush1.msra.mxu0 0.0
    %2307 = vmatprep.subr.mxu0 0.0
    %2308 = vmatpush1.msra.mxu0 0.0
    %2309 = vmatprep.subr.mxu0 0.0
    %2310 = vmatpush1.msra.mxu0 0.0
    %2311 = vmatprep.subr.mxu0 0.0
    %2312 = vmatpush1.msra.mxu0 0.0
    %2313 = vmatprep.subr.mxu0 0.0
    %2314 = vmatpush1.msra.mxu0 0.0
    %2315 = vmatprep.subr.mxu0 0.0
    %2316 = vmatpush1.msra.mxu0 0.0
    %2317 = vmatprep.subr.mxu0 0.0
    %2318 = vmatpush1.msra.mxu0 0.0
    %2319 = vmatprep.subr.mxu0 0.0
    %2320 = vmatpush1.msra.mxu0 0.0
    %2321 = vmatprep.subr.mxu0 0.0
    %2322 = vmatpush1.msra.mxu0 0.0
    %2323 = vmatprep.subr.mxu0 0.0
    %2324 = vmatpush1.msra.mxu0 0.0
    %2325 = vmatprep.subr.mxu0 0.0
    %2326 = vmatpush1.msra.mxu0 0.0
    %2327 = vmatprep.subr.mxu0 0.0
    %2328 = vmatpush1.msra.mxu0 0.0
    %2329 = vmatprep.subr.mxu0 0.0
    %2330 = vmatpush1.msra.mxu0 0.0
    %2331 = vmatprep.subr.mxu0 0.0
    %2332 = vmatpush1.msra.mxu0 0.0
    %2333 = vmatprep.subr.mxu0 0.0
    %2334 = vmatpush1.msra.mxu0 0.0
    %2335 = vmatprep.subr.mxu0 0.0
    %2336 = vmatpush1.msra.mxu0 0.0
    %2337 = vmatprep.subr.mxu0 0.0
    %2338 = vmatpush1.msra.mxu0 0.0
    %2339 = vmatprep.subr.mxu0 0.0
    %2340 = vmatpush1.msra.mxu0 0.0
    %2341 = vmatprep.subr.mxu0 0.0
    %2342 = vmatpush1.msra.mxu0 0.0
    %2343 = vmatprep.subr.mxu0 0.0
    %2344 = vmatpush1.msra.mxu0 0.0
    %2345 = vmatprep.subr.mxu0 0.0
    %2346 = vmatpush1.msra.mxu0 0.0
    %2347 = vmatprep.subr.mxu0 0.0
    %2348 = vmatpush1.msra.mxu0 0.0
    %2349 = vmatprep.subr.mxu0 0.0
    %2350 = vmatpush1.msra.mxu0 0.0
    %2351 = vmatprep.subr.mxu0 0.0
    %2352 = vmatpush1.msra.mxu0 0.0
    %2353 = vmatprep.subr.mxu0 0.0
    %2354 = vmatpush1.msra.mxu0 0.0
    %2355 = vmatprep.subr.mxu0 0.0
    %2356 = vmatpush1.msra.mxu0 0.0
    %2357 = vmatprep.subr.mxu0 0.0
    %2358 = vmatpush1.msra.mxu0 0.0
    %2359 = vmatprep.subr.mxu0 0.0
    %2360 = vmatpush1.msra.mxu0 0.0
    %2361 = vmatprep.mubr.f32.mxu0 0.0
    %2362 = vmatmul.mubr.f32.gmra.mrb[0].mxu0 %v2193
    %v2363 = vpop.f32.mrb[0].mxu0
    %v2364 = vadd.f32 %v2295, %v2363
    %v2365 = vpop.f32.mrb[0].mxu0
    %2366 = vmatprep.mubr.f32.mxu0 0.0
    %2367 = vmatmul.mubr.f32.gmra.mrb[0].mxu0 %v2196
    %v2368 = vpop.f32.mrb[0].mxu0
    %v2369 = vadd.f32 %v2295, %v2368
    %v2370 = vpop.f32.mrb[0].mxu0
    %2371 = vmatprep.mubr.f32.mxu0 0.0
    %2372 = vmatmul.mubr.f32.gmra.mrb[0].mxu0 %v2199
    %v2373 = vpop.f32.mrb[0].mxu0
    %v2374 = vadd.f32 %v2295, %v2373
    %v2375 = vpop.f32.mrb[0].mxu0
    %2376 = vdwg.mxu0
    %s2377 = scalar_lea.vmem %s9, 32
    %v2378 = vld [vmem:[%s2377] sm:$0xff]
    %v2379 = vld [vmem:[%s2377 + $0x8] sm:$0xff]
    %v2380 = vld [vmem:[%s2377 + $0x10] sm:$0xff]
    %v2381 = vld [vmem:[%s2377 + $0x18] sm:$0xff]
    %s2382 = scalar_lea.vmem %s12, 1
    %v2383 = vld [vmem:[%s2382] sm:$0x1]
    %v2385 = vlaneseq
    %v2386 = vshrl.u32 %v2385, 7
    %v2387 = vsub.s32 0, %v2386
    %v2388 = vrot.slane %v2383, %v2387
    %2390 = vmatprep.subr.mxu0 0.0
    %2391 = vmatpush1.msra.mxu0 %v2378
    %2392 = vmatprep.subr.mxu0 0.0
    %2393 = vmatpush1.msra.mxu0 %v2379
    %2394 = vmatprep.subr.mxu0 0.0
    %2395 = vmatpush1.msra.mxu0 %v2380
    %2396 = vmatprep.subr.mxu0 0.0
    %2397 = vmatpush1.msra.mxu0 %v2381
    %2398 = vmatprep.subr.mxu0 0.0
    %2399 = vmatpush1.msra.mxu0 0.0
    %2400 = vmatprep.subr.mxu0 0.0
    %2401 = vmatpush1.msra.mxu0 0.0
    %2402 = vmatprep.subr.mxu0 0.0
    %2403 = vmatpush1.msra.mxu0 0.0
    %2404 = vmatprep.subr.mxu0 0.0
    %2405 = vmatpush1.msra.mxu0 0.0
    %2406 = vmatprep.subr.mxu0 0.0
    %2407 = vmatpush1.msra.mxu0 0.0
    %2408 = vmatprep.subr.mxu0 0.0
    %2409 = vmatpush1.msra.mxu0 0.0
    %2410 = vmatprep.subr.mxu0 0.0
    %2411 = vmatpush1.msra.mxu0 0.0
    %2412 = vmatprep.subr.mxu0 0.0
    %2413 = vmatpush1.msra.mxu0 0.0
    %2414 = vmatprep.subr.mxu0 0.0
    %2415 = vmatpush1.msra.mxu0 0.0
    %2416 = vmatprep.subr.mxu0 0.0
    %2417 = vmatpush1.msra.mxu0 0.0
    %2418 = vmatprep.subr.mxu0 0.0
    %2419 = vmatpush1.msra.mxu0 0.0
    %2420 = vmatprep.subr.mxu0 0.0
    %2421 = vmatpush1.msra.mxu0 0.0
    %2422 = vmatprep.subr.mxu0 0.0
    %2423 = vmatpush1.msra.mxu0 0.0
    %2424 = vmatprep.subr.mxu0 0.0
    %2425 = vmatpush1.msra.mxu0 0.0
    %2426 = vmatprep.subr.mxu0 0.0
    %2427 = vmatpush1.msra.mxu0 0.0
    %2428 = vmatprep.subr.mxu0 0.0
    %2429 = vmatpush1.msra.mxu0 0.0
    %2430 = vmatprep.subr.mxu0 0.0
    %2431 = vmatpush1.msra.mxu0 0.0
    %2432 = vmatprep.subr.mxu0 0.0
    %2433 = vmatpush1.msra.mxu0 0.0
    %2434 = vmatprep.subr.mxu0 0.0
    %2435 = vmatpush1.msra.mxu0 0.0
    %2436 = vmatprep.subr.mxu0 0.0
    %2437 = vmatpush1.msra.mxu0 0.0
    %2438 = vmatprep.subr.mxu0 0.0
    %2439 = vmatpush1.msra.mxu0 0.0
    %2440 = vmatprep.subr.mxu0 0.0
    %2441 = vmatpush1.msra.mxu0 0.0
    %2442 = vmatprep.subr.mxu0 0.0
    %2443 = vmatpush1.msra.mxu0 0.0
    %2444 = vmatprep.subr.mxu0 0.0
    %2445 = vmatpush1.msra.mxu0 0.0
    %2446 = vmatprep.subr.mxu0 0.0
    %2447 = vmatpush1.msra.mxu0 0.0
    %2448 = vmatprep.subr.mxu0 0.0
    %2449 = vmatpush1.msra.mxu0 0.0
    %2450 = vmatprep.subr.mxu0 0.0
    %2451 = vmatpush1.msra.mxu0 0.0
    %2452 = vmatprep.subr.mxu0 0.0
    %2453 = vmatpush1.msra.mxu0 0.0
    %2454 = vmatprep.mubr.f32.mxu0 0.0
    %2455 = vmatmul.mubr.f32.gmra.mrb[0].mxu0 %v2193
    %v2456 = vpop.f32.mrb[0].mxu0
    %v2457 = vadd.f32 %v2388, %v2456
    %v2458 = vpop.f32.mrb[0].mxu0
    %2459 = vmatprep.mubr.f32.mxu0 0.0
    %2460 = vmatmul.mubr.f32.gmra.mrb[0].mxu0 %v2196
    %v2461 = vpop.f32.mrb[0].mxu0
    %v2462 = vadd.f32 %v2388, %v2461
    %v2463 = vpop.f32.mrb[0].mxu0
    %2464 = vmatprep.mubr.f32.mxu0 0.0
    %2465 = vmatmul.mubr.f32.gmra.mrb[0].mxu0 %v2199
    %v2466 = vpop.f32.mrb[0].mxu0
    %v2467 = vadd.f32 %v2388, %v2466
    %v2468 = vpop.f32.mrb[0].mxu0
    %2469 = vdwg.mxu0
    %v2471 = vsel %vm732, %v2281, 0
    %v2474 = vsel %vm732, %v2282, 0
    %v2477 = vsel %vm732, %v2283, 0
    %v2480 = vsel %vm732, %v2364, 0
    %v2483 = vsel %vm732, %v2369, 0
    %v2486 = vsel %vm732, %v2374, 0
    %2488 = vmatprep.subr.mxu0 0.0
    %2489 = vmatpush1.xpose.msra.mxu0 %v2480
    %2490 = vmatprep.subr.mxu0 0.0
    %2491 = vmatpush1.xpose.msra.mxu0 %v2483
    %2492 = vmatprep.subr.mxu0 0.0
    %2493 = vmatpush1.xpose.msra.mxu0 %v2486
    %2494 = vmatprep.subr.mxu0 0.0
    %2495 = vmatpush1.xpose.msra.mxu0 0.0
    %2496 = vmatprep.subr.mxu0 0.0
    %2497 = vmatpush1.xpose.msra.mxu0 0.0
    %2498 = vmatprep.subr.mxu0 0.0
    %2499 = vmatpush1.xpose.msra.mxu0 0.0
    %2500 = vmatprep.subr.mxu0 0.0
    %2501 = vmatpush1.xpose.msra.mxu0 0.0
    %2502 = vmatprep.subr.mxu0 0.0
    %2503 = vmatpush1.xpose.msra.mxu0 0.0
    %2504 = vmatprep.subr.mxu0 0.0
    %2505 = vmatpush1.xpose.msra.mxu0 0.0
    %2506 = vmatprep.subr.mxu0 0.0
    %2507 = vmatpush1.xpose.msra.mxu0 0.0
    %2508 = vmatprep.subr.mxu0 0.0
    %2509 = vmatpush1.xpose.msra.mxu0 0.0
    %2510 = vmatprep.subr.mxu0 0.0
    %2511 = vmatpush1.xpose.msra.mxu0 0.0
    %2512 = vmatprep.subr.mxu0 0.0
    %2513 = vmatpush1.xpose.msra.mxu0 0.0
    %2514 = vmatprep.subr.mxu0 0.0
    %2515 = vmatpush1.xpose.msra.mxu0 0.0
    %2516 = vmatprep.subr.mxu0 0.0
    %2517 = vmatpush1.xpose.msra.mxu0 0.0
    %2518 = vmatprep.subr.mxu0 0.0
    %2519 = vmatpush1.xpose.msra.mxu0 0.0
    %2520 = vmatprep.subr.mxu0 0.0
    %2521 = vmatpush1.xpose.msra.mxu0 0.0
    %2522 = vmatprep.subr.mxu0 0.0
    %2523 = vmatpush1.xpose.msra.mxu0 0.0
    %2524 = vmatprep.subr.mxu0 0.0
    %2525 = vmatpush1.xpose.msra.mxu0 0.0
    %2526 = vmatprep.subr.mxu0 0.0
    %2527 = vmatpush1.xpose.msra.mxu0 0.0
    %2528 = vmatprep.subr.mxu0 0.0
    %2529 = vmatpush1.xpose.msra.mxu0 0.0
    %2530 = vmatprep.subr.mxu0 0.0
    %2531 = vmatpush1.xpose.msra.mxu0 0.0
    %2532 = vmatprep.subr.mxu0 0.0
    %2533 = vmatpush1.xpose.msra.mxu0 0.0
    %2534 = vmatprep.subr.mxu0 0.0
    %2535 = vmatpush1.xpose.msra.mxu0 0.0
    %2536 = vmatprep.subr.mxu0 0.0
    %2537 = vmatpush1.xpose.msra.mxu0 0.0
    %2538 = vmatprep.subr.mxu0 0.0
    %2539 = vmatpush1.xpose.msra.mxu0 0.0
    %2540 = vmatprep.subr.mxu0 0.0
    %2541 = vmatpush1.xpose.msra.mxu0 0.0
    %2542 = vmatprep.subr.mxu0 0.0
    %2543 = vmatpush1.xpose.msra.mxu0 0.0
    %2544 = vmatprep.subr.mxu0 0.0
    %2545 = vmatpush1.xpose.msra.mxu0 0.0
    %2546 = vmatprep.subr.mxu0 0.0
    %2547 = vmatpush1.xpose.msra.mxu0 0.0
    %2548 = vmatprep.subr.mxu0 0.0
    %2549 = vmatpush1.xpose.msra.mxu0 0.0
    %2550 = vmatprep.subr.mxu0 0.0
    %2551 = vmatpush1.xpose.msra.mxu0 0.0
    %2552 = vmatprep.mubr.f32.mxu0 0.0
    %2553 = vmatmul.mubr.f32.gmra.mrb[0].mxu0 %v2471
    %v2554 = vpop.f32.mrb[0].mxu0
    %v2555 = vadd.f32 %v382, %v2554
    %v2556 = vpop.f32.mrb[0].mxu0
    %2557 = vmatprep.mubr.f32.mxu0 0.0
    %2558 = vmatmul.mubr.f32.gmra.mrb[0].mxu0 %v2474
    %v2559 = vpop.f32.mrb[0].mxu0
    %v2560 = vadd.f32 %v383, %v2559
    %v2561 = vpop.f32.mrb[0].mxu0
    %2562 = vmatprep.mubr.f32.mxu0 0.0
    %2563 = vmatmul.mubr.f32.gmra.mrb[0].mxu0 %v2477
    %v2564 = vpop.f32.mrb[0].mxu0
    %v2565 = vadd.f32 %v384, %v2564
    %v2566 = vpop.f32.mrb[0].mxu0
    %2567 = vdwg.mxu0
    %v2568 = vsel %vm831, %v2555, -inf
    %2569 = vmax.xlane.f32.xlu0 %v2568
    %v2570 = vpop.xlane.xlu0 %2569
    %v2571 = vsel %vm831, %v2560, -inf
    %2572 = vmax.xlane.f32.xlu0 %v2571
    %v2573 = vpop.xlane.xlu0 %2572
    %v2574 = vsel %vm838, %v2565, -inf
    %2575 = vmax.xlane.f32.xlu0 %v2574
    %v2576 = vpop.xlane.xlu0 %2575
    %v2577 = vsub.f32 %v2555, %v2570
    %v2578 = vsub.f32 %v2560, %v2573
    %v2579 = vsub.f32 %v2565, %v2576
    %v2580 = vmul.f32 %v2577, 1.442695
    %v2581 = vpow.pop %v2580
    %v2582 = vmul.f32 %v2578, 1.442695
    %v2583 = vpow.pop %v2582
    %v2584 = vmul.f32 %v2579, 1.442695
    %v2585 = vpow.pop %v2584
    %v2586 = vsel %vm831, %v2581, 0.0
    %2587 = vadd.xlane.f32.xlu0 %v2586
    %v2588 = vpop.xlane.xlu0 %2587
    %v2589 = vsel %vm831, %v2583, 0.0
    %2590 = vadd.xlane.f32.xlu0 %v2589
    %v2591 = vpop.xlane.xlu0 %2590
    %v2592 = vsel %vm838, %v2585, 0.0
    %2593 = vadd.xlane.f32.xlu0 %v2592
    %v2594 = vpop.xlane.xlu0 %2593
    %v2595 = vrcp.pop %v2588
    %v2596 = vmul.f32 %v2581, %v2595
    %v2597 = vrcp.pop %v2591
    %v2598 = vmul.f32 %v2583, %v2597
    %v2599 = vrcp.pop %v2594
    %v2600 = vmul.f32 %v2585, %v2599
    %v2602 = vsel %vm831, %v2596, 0
    %v2605 = vsel %vm831, %v2598, 0
    %v2608 = vsel %vm831, %v2600, 0
    %v2611 = vsel %vm211, %v2467, 0
    %2613 = vmatprep.subr.mxu0 0.0
    %2614 = vmatpush1.msra.mxu0 %v2457
    %2615 = vmatprep.subr.mxu0 0.0
    %2616 = vmatpush1.msra.mxu0 %v2462
    %2617 = vmatprep.subr.mxu0 0.0
    %2618 = vmatpush1.msra.mxu0 %v2611
    %2619 = vmatprep.subr.mxu0 0.0
    %2620 = vmatpush1.msra.mxu0 0.0
    %2621 = vmatprep.subr.mxu0 0.0
    %2622 = vmatpush1.msra.mxu0 0.0
    %2623 = vmatprep.subr.mxu0 0.0
    %2624 = vmatpush1.msra.mxu0 0.0
    %2625 = vmatprep.subr.mxu0 0.0
    %2626 = vmatpush1.msra.mxu0 0.0
    %2627 = vmatprep.subr.mxu0 0.0
    %2628 = vmatpush1.msra.mxu0 0.0
    %2629 = vmatprep.subr.mxu0 0.0
    %2630 = vmatpush1.msra.mxu0 0.0
    %2631 = vmatprep.subr.mxu0 0.0
    %2632 = vmatpush1.msra.mxu0 0.0
    %2633 = vmatprep.subr.mxu0 0.0
    %2634 = vmatpush1.msra.mxu0 0.0
    %2635 = vmatprep.subr.mxu0 0.0
    %2636 = vmatpush1.msra.mxu0 0.0
    %2637 = vmatprep.subr.mxu0 0.0
    %2638 = vmatpush1.msra.mxu0 0.0
    %2639 = vmatprep.subr.mxu0 0.0
    %2640 = vmatpush1.msra.mxu0 0.0
    %2641 = vmatprep.subr.mxu0 0.0
    %2642 = vmatpush1.msra.mxu0 0.0
    %2643 = vmatprep.subr.mxu0 0.0
    %2644 = vmatpush1.msra.mxu0 0.0
    %2645 = vmatprep.subr.mxu0 0.0
    %2646 = vmatpush1.msra.mxu0 0.0
    %2647 = vmatprep.subr.mxu0 0.0
    %2648 = vmatpush1.msra.mxu0 0.0
    %2649 = vmatprep.subr.mxu0 0.0
    %2650 = vmatpush1.msra.mxu0 0.0
    %2651 = vmatprep.subr.mxu0 0.0
    %2652 = vmatpush1.msra.mxu0 0.0
    %2653 = vmatprep.subr.mxu0 0.0
    %2654 = vmatpush1.msra.mxu0 0.0
    %2655 = vmatprep.subr.mxu0 0.0
    %2656 = vmatpush1.msra.mxu0 0.0
    %2657 = vmatprep.subr.mxu0 0.0
    %2658 = vmatpush1.msra.mxu0 0.0
    %2659 = vmatprep.subr.mxu0 0.0
    %2660 = vmatpush1.msra.mxu0 0.0
    %2661 = vmatprep.subr.mxu0 0.0
    %2662 = vmatpush1.msra.mxu0 0.0
    %2663 = vmatprep.subr.mxu0 0.0
    %2664 = vmatpush1.msra.mxu0 0.0
    %2665 = vmatprep.subr.mxu0 0.0
    %2666 = vmatpush1.msra.mxu0 0.0
    %2667 = vmatprep.subr.mxu0 0.0
    %2668 = vmatpush1.msra.mxu0 0.0
    %2669 = vmatprep.subr.mxu0 0.0
    %2670 = vmatpush1.msra.mxu0 0.0
    %2671 = vmatprep.subr.mxu0 0.0
    %2672 = vmatpush1.msra.mxu0 0.0
    %2673 = vmatprep.subr.mxu0 0.0
    %2674 = vmatpush1.msra.mxu0 0.0
    %2675 = vmatprep.subr.mxu0 0.0
    %2676 = vmatpush1.msra.mxu0 0.0
    %2677 = vmatprep.mubr.f32.mxu0 0.0
    %2678 = vmatmul.mubr.f32.gmra.mrb[0].mxu0 %v2602
    %v2679 = vpop.f32.mrb[0].mxu0
    %v2680 = vadd.f32 0.0, %v2679
    %v2681 = vpop.f32.mrb[0].mxu0
    %2682 = vmatprep.mubr.f32.mxu0 0.0
    %2683 = vmatmul.mubr.f32.gmra.mrb[0].mxu0 %v2605
    %v2684 = vpop.f32.mrb[0].mxu0
    %v2685 = vadd.f32 0.0, %v2684
    %v2686 = vpop.f32.mrb[0].mxu0
    %2687 = vmatprep.mubr.f32.mxu0 0.0
    %2688 = vmatmul.mubr.f32.gmra.mrb[0].mxu0 %v2608
    %v2689 = vpop.f32.mrb[0].mxu0
    %v2690 = vadd.f32 0.0, %v2689
    %v2691 = vpop.f32.mrb[0].mxu0
    %2692 = vdwg.mxu0
    %2693 = vrot.lane.b32.xlu0 %v2281, 120
    %v2694 = vpop.permute.xlu0 %2693
    %2695 = vrot.lane.b32.xlu0 %v2282, 120
    %v2696 = vpop.permute.xlu0 %2695
    %2697 = vrot.lane.b32.xlu0 %v2283, 120
    %v2698 = vpop.permute.xlu0 %2697
    %2699 = vrot.lane.b32.xlu0 %v2364, 120
    %v2700 = vpop.permute.xlu0 %2699
    %2701 = vrot.lane.b32.xlu0 %v2369, 120
    %v2702 = vpop.permute.xlu0 %2701
    %2703 = vrot.lane.b32.xlu0 %v2374, 120
    %v2704 = vpop.permute.xlu0 %2703
    %v2705 = vsel %vm732, %v2694, 0
    %v2707 = vsel %vm732, %v2696, 0
    %v2709 = vsel %vm732, %v2698, 0
    %v2711 = vsel %vm732, %v2700, 0
    %v2713 = vsel %vm732, %v2702, 0
    %v2715 = vsel %vm732, %v2704, 0
    %2717 = vmatprep.subr.mxu0 0.0
    %2718 = vmatpush1.xpose.msra.mxu0 %v2711
    %2719 = vmatprep.subr.mxu0 0.0
    %2720 = vmatpush1.xpose.msra.mxu0 %v2713
    %2721 = vmatprep.subr.mxu0 0.0
    %2722 = vmatpush1.xpose.msra.mxu0 %v2715
    %2723 = vmatprep.subr.mxu0 0.0
    %2724 = vmatpush1.xpose.msra.mxu0 0.0
    %2725 = vmatprep.subr.mxu0 0.0
    %2726 = vmatpush1.xpose.msra.mxu0 0.0
    %2727 = vmatprep.subr.mxu0 0.0
    %2728 = vmatpush1.xpose.msra.mxu0 0.0
    %2729 = vmatprep.subr.mxu0 0.0
    %2730 = vmatpush1.xpose.msra.mxu0 0.0
    %2731 = vmatprep.subr.mxu0 0.0
    %2732 = vmatpush1.xpose.msra.mxu0 0.0
    %2733 = vmatprep.subr.mxu0 0.0
    %2734 = vmatpush1.xpose.msra.mxu0 0.0
    %2735 = vmatprep.subr.mxu0 0.0
    %2736 = vmatpush1.xpose.msra.mxu0 0.0
    %2737 = vmatprep.subr.mxu0 0.0
    %2738 = vmatpush1.xpose.msra.mxu0 0.0
    %2739 = vmatprep.subr.mxu0 0.0
    %2740 = vmatpush1.xpose.msra.mxu0 0.0
    %2741 = vmatprep.subr.mxu0 0.0
    %2742 = vmatpush1.xpose.msra.mxu0 0.0
    %2743 = vmatprep.subr.mxu0 0.0
    %2744 = vmatpush1.xpose.msra.mxu0 0.0
    %2745 = vmatprep.subr.mxu0 0.0
    %2746 = vmatpush1.xpose.msra.mxu0 0.0
    %2747 = vmatprep.subr.mxu0 0.0
    %2748 = vmatpush1.xpose.msra.mxu0 0.0
    %2749 = vmatprep.subr.mxu0 0.0
    %2750 = vmatpush1.xpose.msra.mxu0 0.0
    %2751 = vmatprep.subr.mxu0 0.0
    %2752 = vmatpush1.xpose.msra.mxu0 0.0
    %2753 = vmatprep.subr.mxu0 0.0
    %2754 = vmatpush1.xpose.msra.mxu0 0.0
    %2755 = vmatprep.subr.mxu0 0.0
    %2756 = vmatpush1.xpose.msra.mxu0 0.0
    %2757 = vmatprep.subr.mxu0 0.0
    %2758 = vmatpush1.xpose.msra.mxu0 0.0
    %2759 = vmatprep.subr.mxu0 0.0
    %2760 = vmatpush1.xpose.msra.mxu0 0.0
    %2761 = vmatprep.subr.mxu0 0.0
    %2762 = vmatpush1.xpose.msra.mxu0 0.0
    %2763 = vmatprep.subr.mxu0 0.0
    %2764 = vmatpush1.xpose.msra.mxu0 0.0
    %2765 = vmatprep.subr.mxu0 0.0
    %2766 = vmatpush1.xpose.msra.mxu0 0.0
    %2767 = vmatprep.subr.mxu0 0.0
    %2768 = vmatpush1.xpose.msra.mxu0 0.0
    %2769 = vmatprep.subr.mxu0 0.0
    %2770 = vmatpush1.xpose.msra.mxu0 0.0
    %2771 = vmatprep.subr.mxu0 0.0
    %2772 = vmatpush1.xpose.msra.mxu0 0.0
    %2773 = vmatprep.subr.mxu0 0.0
    %2774 = vmatpush1.xpose.msra.mxu0 0.0
    %2775 = vmatprep.subr.mxu0 0.0
    %2776 = vmatpush1.xpose.msra.mxu0 0.0
    %2777 = vmatprep.subr.mxu0 0.0
    %2778 = vmatpush1.xpose.msra.mxu0 0.0
    %2779 = vmatprep.subr.mxu0 0.0
    %2780 = vmatpush1.xpose.msra.mxu0 0.0
    %2781 = vmatprep.mubr.f32.mxu0 0.0
    %2782 = vmatmul.mubr.f32.gmra.mrb[0].mxu0 %v2705
    %v2783 = vpop.f32.mrb[0].mxu0
    %v2784 = vadd.f32 %v382, %v2783
    %v2785 = vpop.f32.mrb[0].mxu0
    %2786 = vmatprep.mubr.f32.mxu0 0.0
    %2787 = vmatmul.mubr.f32.gmra.mrb[0].mxu0 %v2707
    %v2788 = vpop.f32.mrb[0].mxu0
    %v2789 = vadd.f32 %v383, %v2788
    %v2790 = vpop.f32.mrb[0].mxu0
    %2791 = vmatprep.mubr.f32.mxu0 0.0
    %2792 = vmatmul.mubr.f32.gmra.mrb[0].mxu0 %v2709
    %v2793 = vpop.f32.mrb[0].mxu0
    %v2794 = vadd.f32 %v384, %v2793
    %v2795 = vpop.f32.mrb[0].mxu0
    %2796 = vdwg.mxu0
    %v2797 = vsel %vm831, %v2784, -inf
    %2798 = vmax.xlane.f32.xlu0 %v2797
    %v2799 = vpop.xlane.xlu0 %2798
    %v2800 = vsel %vm831, %v2789, -inf
    %2801 = vmax.xlane.f32.xlu0 %v2800
    %v2802 = vpop.xlane.xlu0 %2801
    %v2803 = vsel %vm838, %v2794, -inf
    %2804 = vmax.xlane.f32.xlu0 %v2803
    %v2805 = vpop.xlane.xlu0 %2804
    %v2806 = vsub.f32 %v2784, %v2799
    %v2807 = vsub.f32 %v2789, %v2802
    %v2808 = vsub.f32 %v2794, %v2805
    %v2809 = vmul.f32 %v2806, 1.442695
    %v2810 = vpow.pop %v2809
    %v2811 = vmul.f32 %v2807, 1.442695
    %v2812 = vpow.pop %v2811
    %v2813 = vmul.f32 %v2808, 1.442695
    %v2814 = vpow.pop %v2813
    %v2815 = vsel %vm831, %v2810, 0.0
    %2816 = vadd.xlane.f32.xlu0 %v2815
    %v2817 = vpop.xlane.xlu0 %2816
    %v2818 = vsel %vm831, %v2812, 0.0
    %2819 = vadd.xlane.f32.xlu0 %v2818
    %v2820 = vpop.xlane.xlu0 %2819
    %v2821 = vsel %vm838, %v2814, 0.0
    %2822 = vadd.xlane.f32.xlu0 %v2821
    %v2823 = vpop.xlane.xlu0 %2822
    %v2824 = vrcp.pop %v2817
    %v2825 = vmul.f32 %v2810, %v2824
    %v2826 = vrcp.pop %v2820
    %v2827 = vmul.f32 %v2812, %v2826
    %v2828 = vrcp.pop %v2823
    %v2829 = vmul.f32 %v2814, %v2828
    %2832 = vrot.lane.b32.xlu0 %v2457, 120
    %v2833 = vpop.permute.xlu0 %2832
    %2834 = vrot.lane.b32.xlu0 %v2462, 120
    %v2835 = vpop.permute.xlu0 %2834
    %2836 = vrot.lane.b32.xlu0 %v2467, 120
    %v2837 = vpop.permute.xlu0 %2836
    %v2841 = vsel %vm831, %v2825, 0
    %v2844 = vsel %vm831, %v2827, 0
    %v2847 = vsel %vm831, %v2829, 0
    %v2849 = vsel %vm211, %v2837, 0
    %2851 = vmatprep.subr.mxu0 0.0
    %2852 = vmatpush1.msra.mxu0 %v2833
    %2853 = vmatprep.subr.mxu0 0.0
    %2854 = vmatpush1.msra.mxu0 %v2835
    %2855 = vmatprep.subr.mxu0 0.0
    %2856 = vmatpush1.msra.mxu0 %v2849
    %2857 = vmatprep.subr.mxu0 0.0
    %2858 = vmatpush1.msra.mxu0 0.0
    %2859 = vmatprep.subr.mxu0 0.0
    %2860 = vmatpush1.msra.mxu0 0.0
    %2861 = vmatprep.subr.mxu0 0.0
    %2862 = vmatpush1.msra.mxu0 0.0
    %2863 = vmatprep.subr.mxu0 0.0
    %2864 = vmatpush1.msra.mxu0 0.0
    %2865 = vmatprep.subr.mxu0 0.0
    %2866 = vmatpush1.msra.mxu0 0.0
    %2867 = vmatprep.subr.mxu0 0.0
    %2868 = vmatpush1.msra.mxu0 0.0
    %2869 = vmatprep.subr.mxu0 0.0
    %2870 = vmatpush1.msra.mxu0 0.0
    %2871 = vmatprep.subr.mxu0 0.0
    %2872 = vmatpush1.msra.mxu0 0.0
    %2873 = vmatprep.subr.mxu0 0.0
    %2874 = vmatpush1.msra.mxu0 0.0
    %2875 = vmatprep.subr.mxu0 0.0
    %2876 = vmatpush1.msra.mxu0 0.0
    %2877 = vmatprep.subr.mxu0 0.0
    %2878 = vmatpush1.msra.mxu0 0.0
    %2879 = vmatprep.subr.mxu0 0.0
    %2880 = vmatpush1.msra.mxu0 0.0
    %2881 = vmatprep.subr.mxu0 0.0
    %2882 = vmatpush1.msra.mxu0 0.0
    %2883 = vmatprep.subr.mxu0 0.0
    %2884 = vmatpush1.msra.mxu0 0.0
    %2885 = vmatprep.subr.mxu0 0.0
    %2886 = vmatpush1.msra.mxu0 0.0
    %2887 = vmatprep.subr.mxu0 0.0
    %2888 = vmatpush1.msra.mxu0 0.0
    %2889 = vmatprep.subr.mxu0 0.0
    %2890 = vmatpush1.msra.mxu0 0.0
    %2891 = vmatprep.subr.mxu0 0.0
    %2892 = vmatpush1.msra.mxu0 0.0
    %2893 = vmatprep.subr.mxu0 0.0
    %2894 = vmatpush1.msra.mxu0 0.0
    %2895 = vmatprep.subr.mxu0 0.0
    %2896 = vmatpush1.msra.mxu0 0.0
    %2897 = vmatprep.subr.mxu0 0.0
    %2898 = vmatpush1.msra.mxu0 0.0
    %2899 = vmatprep.subr.mxu0 0.0
    %2900 = vmatpush1.msra.mxu0 0.0
    %2901 = vmatprep.subr.mxu0 0.0
    %2902 = vmatpush1.msra.mxu0 0.0
    %2903 = vmatprep.subr.mxu0 0.0
    %2904 = vmatpush1.msra.mxu0 0.0
    %2905 = vmatprep.subr.mxu0 0.0
    %2906 = vmatpush1.msra.mxu0 0.0
    %2907 = vmatprep.subr.mxu0 0.0
    %2908 = vmatpush1.msra.mxu0 0.0
    %2909 = vmatprep.subr.mxu0 0.0
    %2910 = vmatpush1.msra.mxu0 0.0
    %2911 = vmatprep.subr.mxu0 0.0
    %2912 = vmatpush1.msra.mxu0 0.0
    %2913 = vmatprep.subr.mxu0 0.0
    %2914 = vmatpush1.msra.mxu0 0.0
    %2915 = vmatprep.mubr.f32.mxu0 0.0
    %2916 = vmatmul.mubr.f32.gmra.mrb[0].mxu0 %v2841
    %v2917 = vpop.f32.mrb[0].mxu0
    %v2918 = vadd.f32 0.0, %v2917
    %v2919 = vpop.f32.mrb[0].mxu0
    %2920 = vmatprep.mubr.f32.mxu0 0.0
    %2921 = vmatmul.mubr.f32.gmra.mrb[0].mxu0 %v2844
    %v2922 = vpop.f32.mrb[0].mxu0
    %v2923 = vadd.f32 0.0, %v2922
    %v2924 = vpop.f32.mrb[0].mxu0
    %2925 = vmatprep.mubr.f32.mxu0 0.0
    %2926 = vmatmul.mubr.f32.gmra.mrb[0].mxu0 %v2847
    %v2927 = vpop.f32.mrb[0].mxu0
    %v2928 = vadd.f32 0.0, %v2927
    %v2929 = vpop.f32.mrb[0].mxu0
    %2930 = vdwg.mxu0
    %2931 = vrot.lane.b32.xlu0 %v2281, 112
    %v2932 = vpop.permute.xlu0 %2931
    %2933 = vrot.lane.b32.xlu0 %v2282, 112
    %v2934 = vpop.permute.xlu0 %2933
    %2935 = vrot.lane.b32.xlu0 %v2283, 112
    %v2936 = vpop.permute.xlu0 %2935
    %2937 = vrot.lane.b32.xlu0 %v2364, 112
    %v2938 = vpop.permute.xlu0 %2937
    %2939 = vrot.lane.b32.xlu0 %v2369, 112
    %v2940 = vpop.permute.xlu0 %2939
    %2941 = vrot.lane.b32.xlu0 %v2374, 112
    %v2942 = vpop.permute.xlu0 %2941
    %v2943 = vsel %vm732, %v2932, 0
    %v2945 = vsel %vm732, %v2934, 0
    %v2947 = vsel %vm732, %v2936, 0
    %v2949 = vsel %vm732, %v2938, 0
    %v2951 = vsel %vm732, %v2940, 0
    %v2953 = vsel %vm732, %v2942, 0
    %2955 = vmatprep.subr.mxu0 0.0
    %2956 = vmatpush1.xpose.msra.mxu0 %v2949
    %2957 = vmatprep.subr.mxu0 0.0
    %2958 = vmatpush1.xpose.msra.mxu0 %v2951
    %2959 = vmatprep.subr.mxu0 0.0
    %2960 = vmatpush1.xpose.msra.mxu0 %v2953
    %2961 = vmatprep.subr.mxu0 0.0
    %2962 = vmatpush1.xpose.msra.mxu0 0.0
    %2963 = vmatprep.subr.mxu0 0.0
    %2964 = vmatpush1.xpose.msra.mxu0 0.0
    %2965 = vmatprep.subr.mxu0 0.0
    %2966 = vmatpush1.xpose.msra.mxu0 0.0
    %2967 = vmatprep.subr.mxu0 0.0
    %2968 = vmatpush1.xpose.msra.mxu0 0.0
    %2969 = vmatprep.subr.mxu0 0.0
    %2970 = vmatpush1.xpose.msra.mxu0 0.0
    %2971 = vmatprep.subr.mxu0 0.0
    %2972 = vmatpush1.xpose.msra.mxu0 0.0
    %2973 = vmatprep.subr.mxu0 0.0
    %2974 = vmatpush1.xpose.msra.mxu0 0.0
    %2975 = vmatprep.subr.mxu0 0.0
    %2976 = vmatpush1.xpose.msra.mxu0 0.0
    %2977 = vmatprep.subr.mxu0 0.0
    %2978 = vmatpush1.xpose.msra.mxu0 0.0
    %2979 = vmatprep.subr.mxu0 0.0
    %2980 = vmatpush1.xpose.msra.mxu0 0.0
    %2981 = vmatprep.subr.mxu0 0.0
    %2982 = vmatpush1.xpose.msra.mxu0 0.0
    %2983 = vmatprep.subr.mxu0 0.0
    %2984 = vmatpush1.xpose.msra.mxu0 0.0
    %2985 = vmatprep.subr.mxu0 0.0
    %2986 = vmatpush1.xpose.msra.mxu0 0.0
    %2987 = vmatprep.subr.mxu0 0.0
    %2988 = vmatpush1.xpose.msra.mxu0 0.0
    %2989 = vmatprep.subr.mxu0 0.0
    %2990 = vmatpush1.xpose.msra.mxu0 0.0
    %2991 = vmatprep.subr.mxu0 0.0
    %2992 = vmatpush1.xpose.msra.mxu0 0.0
    %2993 = vmatprep.subr.mxu0 0.0
    %2994 = vmatpush1.xpose.msra.mxu0 0.0
    %2995 = vmatprep.subr.mxu0 0.0
    %2996 = vmatpush1.xpose.msra.mxu0 0.0
    %2997 = vmatprep.subr.mxu0 0.0
    %2998 = vmatpush1.xpose.msra.mxu0 0.0
    %2999 = vmatprep.subr.mxu0 0.0
    %3000 = vmatpush1.xpose.msra.mxu0 0.0
    %3001 = vmatprep.subr.mxu0 0.0
    %3002 = vmatpush1.xpose.msra.mxu0 0.0
    %3003 = vmatprep.subr.mxu0 0.0
    %3004 = vmatpush1.xpose.msra.mxu0 0.0
    %3005 = vmatprep.subr.mxu0 0.0
    %3006 = vmatpush1.xpose.msra.mxu0 0.0
    %3007 = vmatprep.subr.mxu0 0.0
    %3008 = vmatpush1.xpose.msra.mxu0 0.0
    %3009 = vmatprep.subr.mxu0 0.0
    %3010 = vmatpush1.xpose.msra.mxu0 0.0
    %3011 = vmatprep.subr.mxu0 0.0
    %3012 = vmatpush1.xpose.msra.mxu0 0.0
    %3013 = vmatprep.subr.mxu0 0.0
    %3014 = vmatpush1.xpose.msra.mxu0 0.0
    %3015 = vmatprep.subr.mxu0 0.0
    %3016 = vmatpush1.xpose.msra.mxu0 0.0
    %3017 = vmatprep.subr.mxu0 0.0
    %3018 = vmatpush1.xpose.msra.mxu0 0.0
    %3019 = vmatprep.mubr.f32.mxu0 0.0
    %3020 = vmatmul.mubr.f32.gmra.mrb[0].mxu0 %v2943
    %v3021 = vpop.f32.mrb[0].mxu0
    %v3022 = vadd.f32 %v382, %v3021
    %v3023 = vpop.f32.mrb[0].mxu0
    %3024 = vmatprep.mubr.f32.mxu0 0.0
    %3025 = vmatmul.mubr.f32.gmra.mrb[0].mxu0 %v2945
    %v3026 = vpop.f32.mrb[0].mxu0
    %v3027 = vadd.f32 %v383, %v3026
    %v3028 = vpop.f32.mrb[0].mxu0
    %3029 = vmatprep.mubr.f32.mxu0 0.0
    %3030 = vmatmul.mubr.f32.gmra.mrb[0].mxu0 %v2947
    %v3031 = vpop.f32.mrb[0].mxu0
    %v3032 = vadd.f32 %v384, %v3031
    %v3033 = vpop.f32.mrb[0].mxu0
    %3034 = vdwg.mxu0
    %v3035 = vsel %vm831, %v3022, -inf
    %3036 = vmax.xlane.f32.xlu0 %v3035
    %v3037 = vpop.xlane.xlu0 %3036
    %v3038 = vsel %vm831, %v3027, -inf
    %3039 = vmax.xlane.f32.xlu0 %v3038
    %v3040 = vpop.xlane.xlu0 %3039
    %v3041 = vsel %vm838, %v3032, -inf
    %3042 = vmax.xlane.f32.xlu0 %v3041
    %v3043 = vpop.xlane.xlu0 %3042
    %v3044 = vsub.f32 %v3022, %v3037
    %v3045 = vsub.f32 %v3027, %v3040
    %v3046 = vsub.f32 %v3032, %v3043
    %v3047 = vmul.f32 %v3044, 1.442695
    %v3048 = vpow.pop %v3047
    %v3049 = vmul.f32 %v3045, 1.442695
    %v3050 = vpow.pop %v3049
    %v3051 = vmul.f32 %v3046, 1.442695
    %v3052 = vpow.pop %v3051
    %v3053 = vsel %vm831, %v3048, 0.0
    %3054 = vadd.xlane.f32.xlu0 %v3053
    %v3055 = vpop.xlane.xlu0 %3054
    %v3056 = vsel %vm831, %v3050, 0.0
    %3057 = vadd.xlane.f32.xlu0 %v3056
    %v3058 = vpop.xlane.xlu0 %3057
    %v3059 = vsel %vm838, %v3052, 0.0
    %3060 = vadd.xlane.f32.xlu0 %v3059
    %v3061 = vpop.xlane.xlu0 %3060
    %v3062 = vrcp.pop %v3055
    %v3063 = vmul.f32 %v3048, %v3062
    %v3064 = vrcp.pop %v3058
    %v3065 = vmul.f32 %v3050, %v3064
    %v3066 = vrcp.pop %v3061
    %v3067 = vmul.f32 %v3052, %v3066
    %3068 = vrot.lane.b32.xlu0 %v2457, 112
    %v3069 = vpop.permute.xlu0 %3068
    %3070 = vrot.lane.b32.xlu0 %v2462, 112
    %v3071 = vpop.permute.xlu0 %3070
    %3072 = vrot.lane.b32.xlu0 %v2467, 112
    %v3073 = vpop.permute.xlu0 %3072
    %v3077 = vsel %vm831, %v3063, 0
    %v3080 = vsel %vm831, %v3065, 0
    %v3083 = vsel %vm831, %v3067, 0
    %v3085 = vsel %vm211, %v3073, 0
    %3087 = vmatprep.subr.mxu0 0.0
    %3088 = vmatpush1.msra.mxu0 %v3069
    %3089 = vmatprep.subr.mxu0 0.0
    %3090 = vmatpush1.msra.mxu0 %v3071
    %3091 = vmatprep.subr.mxu0 0.0
    %3092 = vmatpush1.msra.mxu0 %v3085
    %3093 = vmatprep.subr.mxu0 0.0
    %3094 = vmatpush1.msra.mxu0 0.0
    %3095 = vmatprep.subr.mxu0 0.0
    %3096 = vmatpush1.msra.mxu0 0.0
    %3097 = vmatprep.subr.mxu0 0.0
    %3098 = vmatpush1.msra.mxu0 0.0
    %3099 = vmatprep.subr.mxu0 0.0
    %3100 = vmatpush1.msra.mxu0 0.0
    %3101 = vmatprep.subr.mxu0 0.0
    %3102 = vmatpush1.msra.mxu0 0.0
    %3103 = vmatprep.subr.mxu0 0.0
    %3104 = vmatpush1.msra.mxu0 0.0
    %3105 = vmatprep.subr.mxu0 0.0
    %3106 = vmatpush1.msra.mxu0 0.0
    %3107 = vmatprep.subr.mxu0 0.0
    %3108 = vmatpush1.msra.mxu0 0.0
    %3109 = vmatprep.subr.mxu0 0.0
    %3110 = vmatpush1.msra.mxu0 0.0
    %3111 = vmatprep.subr.mxu0 0.0
    %3112 = vmatpush1.msra.mxu0 0.0
    %3113 = vmatprep.subr.mxu0 0.0
    %3114 = vmatpush1.msra.mxu0 0.0
    %3115 = vmatprep.subr.mxu0 0.0
    %3116 = vmatpush1.msra.mxu0 0.0
    %3117 = vmatprep.subr.mxu0 0.0
    %3118 = vmatpush1.msra.mxu0 0.0
    %3119 = vmatprep.subr.mxu0 0.0
    %3120 = vmatpush1.msra.mxu0 0.0
    %3121 = vmatprep.subr.mxu0 0.0
    %3122 = vmatpush1.msra.mxu0 0.0
    %3123 = vmatprep.subr.mxu0 0.0
    %3124 = vmatpush1.msra.mxu0 0.0
    %3125 = vmatprep.subr.mxu0 0.0
    %3126 = vmatpush1.msra.mxu0 0.0
    %3127 = vmatprep.subr.mxu0 0.0
    %3128 = vmatpush1.msra.mxu0 0.0
    %3129 = vmatprep.subr.mxu0 0.0
    %3130 = vmatpush1.msra.mxu0 0.0
    %3131 = vmatprep.subr.mxu0 0.0
    %3132 = vmatpush1.msra.mxu0 0.0
    %3133 = vmatprep.subr.mxu0 0.0
    %3134 = vmatpush1.msra.mxu0 0.0
    %3135 = vmatprep.subr.mxu0 0.0
    %3136 = vmatpush1.msra.mxu0 0.0
    %3137 = vmatprep.subr.mxu0 0.0
    %3138 = vmatpush1.msra.mxu0 0.0
    %3139 = vmatprep.subr.mxu0 0.0
    %3140 = vmatpush1.msra.mxu0 0.0
    %3141 = vmatprep.subr.mxu0 0.0
    %3142 = vmatpush1.msra.mxu0 0.0
    %3143 = vmatprep.subr.mxu0 0.0
    %3144 = vmatpush1.msra.mxu0 0.0
    %3145 = vmatprep.subr.mxu0 0.0
    %3146 = vmatpush1.msra.mxu0 0.0
    %3147 = vmatprep.subr.mxu0 0.0
    %3148 = vmatpush1.msra.mxu0 0.0
    %3149 = vmatprep.subr.mxu0 0.0
    %3150 = vmatpush1.msra.mxu0 0.0
    %3151 = vmatprep.mubr.f32.mxu0 0.0
    %3152 = vmatmul.mubr.f32.gmra.mrb[0].mxu0 %v3077
    %v3153 = vpop.f32.mrb[0].mxu0
    %v3154 = vadd.f32 0.0, %v3153
    %v3155 = vpop.f32.mrb[0].mxu0
    %3156 = vmatprep.mubr.f32.mxu0 0.0
    %3157 = vmatmul.mubr.f32.gmra.mrb[0].mxu0 %v3080
    %v3158 = vpop.f32.mrb[0].mxu0
    %v3159 = vadd.f32 0.0, %v3158
    %v3160 = vpop.f32.mrb[0].mxu0
    %3161 = vmatprep.mubr.f32.mxu0 0.0
    %3162 = vmatmul.mubr.f32.gmra.mrb[0].mxu0 %v3083
    %v3163 = vpop.f32.mrb[0].mxu0
    %v3164 = vadd.f32 0.0, %v3163
    %v3165 = vpop.f32.mrb[0].mxu0
    %3166 = vdwg.mxu0
    %3167 = vrot.lane.b32.xlu0 %v2281, 104
    %v3168 = vpop.permute.xlu0 %3167
    %3169 = vrot.lane.b32.xlu0 %v2282, 104
    %v3170 = vpop.permute.xlu0 %3169
    %3171 = vrot.lane.b32.xlu0 %v2283, 104
    %v3172 = vpop.permute.xlu0 %3171
    %3173 = vrot.lane.b32.xlu0 %v2364, 104
    %v3174 = vpop.permute.xlu0 %3173
    %3175 = vrot.lane.b32.xlu0 %v2369, 104
    %v3176 = vpop.permute.xlu0 %3175
    %3177 = vrot.lane.b32.xlu0 %v2374, 104
    %v3178 = vpop.permute.xlu0 %3177
    %v3179 = vsel %vm732, %v3168, 0
    %v3181 = vsel %vm732, %v3170, 0
    %v3183 = vsel %vm732, %v3172, 0
    %v3185 = vsel %vm732, %v3174, 0
    %v3187 = vsel %vm732, %v3176, 0
    %v3189 = vsel %vm732, %v3178, 0
    %3191 = vmatprep.subr.mxu0 0.0
    %3192 = vmatpush1.xpose.msra.mxu0 %v3185
    %3193 = vmatprep.subr.mxu0 0.0
    %3194 = vmatpush1.xpose.msra.mxu0 %v3187
    %3195 = vmatprep.subr.mxu0 0.0
    %3196 = vmatpush1.xpose.msra.mxu0 %v3189
    %3197 = vmatprep.subr.mxu0 0.0
    %3198 = vmatpush1.xpose.msra.mxu0 0.0
    %3199 = vmatprep.subr.mxu0 0.0
    %3200 = vmatpush1.xpose.msra.mxu0 0.0
    %3201 = vmatprep.subr.mxu0 0.0
    %3202 = vmatpush1.xpose.msra.mxu0 0.0
    %3203 = vmatprep.subr.mxu0 0.0
    %3204 = vmatpush1.xpose.msra.mxu0 0.0
    %3205 = vmatprep.subr.mxu0 0.0
    %3206 = vmatpush1.xpose.msra.mxu0 0.0
    %3207 = vmatprep.subr.mxu0 0.0
    %3208 = vmatpush1.xpose.msra.mxu0 0.0
    %3209 = vmatprep.subr.mxu0 0.0
    %3210 = vmatpush1.xpose.msra.mxu0 0.0
    %3211 = vmatprep.subr.mxu0 0.0
    %3212 = vmatpush1.xpose.msra.mxu0 0.0
    %3213 = vmatprep.subr.mxu0 0.0
    %3214 = vmatpush1.xpose.msra.mxu0 0.0
    %3215 = vmatprep.subr.mxu0 0.0
    %3216 = vmatpush1.xpose.msra.mxu0 0.0
    %3217 = vmatprep.subr.mxu0 0.0
    %3218 = vmatpush1.xpose.msra.mxu0 0.0
    %3219 = vmatprep.subr.mxu0 0.0
    %3220 = vmatpush1.xpose.msra.mxu0 0.0
    %3221 = vmatprep.subr.mxu0 0.0
    %3222 = vmatpush1.xpose.msra.mxu0 0.0
    %3223 = vmatprep.subr.mxu0 0.0
    %3224 = vmatpush1.xpose.msra.mxu0 0.0
    %3225 = vmatprep.subr.mxu0 0.0
    %3226 = vmatpush1.xpose.msra.mxu0 0.0
    %3227 = vmatprep.subr.mxu0 0.0
    %3228 = vmatpush1.xpose.msra.mxu0 0.0
    %3229 = vmatprep.subr.mxu0 0.0
    %3230 = vmatpush1.xpose.msra.mxu0 0.0
    %3231 = vmatprep.subr.mxu0 0.0
    %3232 = vmatpush1.xpose.msra.mxu0 0.0
    %3233 = vmatprep.subr.mxu0 0.0
    %3234 = vmatpush1.xpose.msra.mxu0 0.0
    %3235 = vmatprep.subr.mxu0 0.0
    %3236 = vmatpush1.xpose.msra.mxu0 0.0
    %3237 = vmatprep.subr.mxu0 0.0
    %3238 = vmatpush1.xpose.msra.mxu0 0.0
    %3239 = vmatprep.subr.mxu0 0.0
    %3240 = vmatpush1.xpose.msra.mxu0 0.0
    %3241 = vmatprep.subr.mxu0 0.0
    %3242 = vmatpush1.xpose.msra.mxu0 0.0
    %3243 = vmatprep.subr.mxu0 0.0
    %3244 = vmatpush1.xpose.msra.mxu0 0.0
    %3245 = vmatprep.subr.mxu0 0.0
    %3246 = vmatpush1.xpose.msra.mxu0 0.0
    %3247 = vmatprep.subr.mxu0 0.0
    %3248 = vmatpush1.xpose.msra.mxu0 0.0
    %3249 = vmatprep.subr.mxu0 0.0
    %3250 = vmatpush1.xpose.msra.mxu0 0.0
    %3251 = vmatprep.subr.mxu0 0.0
    %3252 = vmatpush1.xpose.msra.mxu0 0.0
    %3253 = vmatprep.subr.mxu0 0.0
    %3254 = vmatpush1.xpose.msra.mxu0 0.0
    %3255 = vmatprep.mubr.f32.mxu0 0.0
    %3256 = vmatmul.mubr.f32.gmra.mrb[0].mxu0 %v3179
    %v3257 = vpop.f32.mrb[0].mxu0
    %v3258 = vadd.f32 %v382, %v3257
    %v3259 = vpop.f32.mrb[0].mxu0
    %3260 = vmatprep.mubr.f32.mxu0 0.0
    %3261 = vmatmul.mubr.f32.gmra.mrb[0].mxu0 %v3181
    %v3262 = vpop.f32.mrb[0].mxu0
    %v3263 = vadd.f32 %v383, %v3262
    %v3264 = vpop.f32.mrb[0].mxu0
    %3265 = vmatprep.mubr.f32.mxu0 0.0
    %3266 = vmatmul.mubr.f32.gmra.mrb[0].mxu0 %v3183
    %v3267 = vpop.f32.mrb[0].mxu0
    %v3268 = vadd.f32 %v384, %v3267
    %v3269 = vpop.f32.mrb[0].mxu0
    %3270 = vdwg.mxu0
    %v3271 = vsel %vm831, %v3258, -inf
    %3272 = vmax.xlane.f32.xlu0 %v3271
    %v3273 = vpop.xlane.xlu0 %3272
    %v3274 = vsel %vm831, %v3263, -inf
    %3275 = vmax.xlane.f32.xlu0 %v3274
    %v3276 = vpop.xlane.xlu0 %3275
    %v3277 = vsel %vm838, %v3268, -inf
    %3278 = vmax.xlane.f32.xlu0 %v3277
    %v3279 = vpop.xlane.xlu0 %3278
    %v3280 = vsub.f32 %v3258, %v3273
    %v3281 = vsub.f32 %v3263, %v3276
    %v3282 = vsub.f32 %v3268, %v3279
    %v3283 = vmul.f32 %v3280, 1.442695
    %v3284 = vpow.pop %v3283
    %v3285 = vmul.f32 %v3281, 1.442695
    %v3286 = vpow.pop %v3285
    %v3287 = vmul.f32 %v3282, 1.442695
    %v3288 = vpow.pop %v3287
    %v3289 = vsel %vm831, %v3284, 0.0
    %3290 = vadd.xlane.f32.xlu0 %v3289
    %v3291 = vpop.xlane.xlu0 %3290
    %v3292 = vsel %vm831, %v3286, 0.0
    %3293 = vadd.xlane.f32.xlu0 %v3292
    %v3294 = vpop.xlane.xlu0 %3293
    %v3295 = vsel %vm838, %v3288, 0.0
    %3296 = vadd.xlane.f32.xlu0 %v3295
    %v3297 = vpop.xlane.xlu0 %3296
    %v3298 = vrcp.pop %v3291
    %v3299 = vmul.f32 %v3284, %v3298
    %v3300 = vrcp.pop %v3294
    %v3301 = vmul.f32 %v3286, %v3300
    %v3302 = vrcp.pop %v3297
    %v3303 = vmul.f32 %v3288, %v3302
    %3304 = vrot.lane.b32.xlu0 %v2457, 104
    %v3305 = vpop.permute.xlu0 %3304
    %3306 = vrot.lane.b32.xlu0 %v2462, 104
    %v3307 = vpop.permute.xlu0 %3306
    %3308 = vrot.lane.b32.xlu0 %v2467, 104
    %v3309 = vpop.permute.xlu0 %3308
    %v3313 = vsel %vm831, %v3299, 0
    %v3316 = vsel %vm831, %v3301, 0
    %v3319 = vsel %vm831, %v3303, 0
    %v3321 = vsel %vm211, %v3309, 0
    %3323 = vmatprep.subr.mxu0 0.0
    %3324 = vmatpush1.msra.mxu0 %v3305
    %3325 = vmatprep.subr.mxu0 0.0
    %3326 = vmatpush1.msra.mxu0 %v3307
    %3327 = vmatprep.subr.mxu0 0.0
    %3328 = vmatpush1.msra.mxu0 %v3321
    %3329 = vmatprep.subr.mxu0 0.0
    %3330 = vmatpush1.msra.mxu0 0.0
    %3331 = vmatprep.subr.mxu0 0.0
    %3332 = vmatpush1.msra.mxu0 0.0
    %3333 = vmatprep.subr.mxu0 0.0
    %3334 = vmatpush1.msra.mxu0 0.0
    %3335 = vmatprep.subr.mxu0 0.0
    %3336 = vmatpush1.msra.mxu0 0.0
    %3337 = vmatprep.subr.mxu0 0.0
    %3338 = vmatpush1.msra.mxu0 0.0
    %3339 = vmatprep.subr.mxu0 0.0
    %3340 = vmatpush1.msra.mxu0 0.0
    %3341 = vmatprep.subr.mxu0 0.0
    %3342 = vmatpush1.msra.mxu0 0.0
    %3343 = vmatprep.subr.mxu0 0.0
    %3344 = vmatpush1.msra.mxu0 0.0
    %3345 = vmatprep.subr.mxu0 0.0
    %3346 = vmatpush1.msra.mxu0 0.0
    %3347 = vmatprep.subr.mxu0 0.0
    %3348 = vmatpush1.msra.mxu0 0.0
    %3349 = vmatprep.subr.mxu0 0.0
    %3350 = vmatpush1.msra.mxu0 0.0
    %3351 = vmatprep.subr.mxu0 0.0
    %3352 = vmatpush1.msra.mxu0 0.0
    %3353 = vmatprep.subr.mxu0 0.0
    %3354 = vmatpush1.msra.mxu0 0.0
    %3355 = vmatprep.subr.mxu0 0.0
    %3356 = vmatpush1.msra.mxu0 0.0
    %3357 = vmatprep.subr.mxu0 0.0
    %3358 = vmatpush1.msra.mxu0 0.0
    %3359 = vmatprep.subr.mxu0 0.0
    %3360 = vmatpush1.msra.mxu0 0.0
    %3361 = vmatprep.subr.mxu0 0.0
    %3362 = vmatpush1.msra.mxu0 0.0
    %3363 = vmatprep.subr.mxu0 0.0
    %3364 = vmatpush1.msra.mxu0 0.0
    %3365 = vmatprep.subr.mxu0 0.0
    %3366 = vmatpush1.msra.mxu0 0.0
    %3367 = vmatprep.subr.mxu0 0.0
    %3368 = vmatpush1.msra.mxu0 0.0
    %3369 = vmatprep.subr.mxu0 0.0
    %3370 = vmatpush1.msra.mxu0 0.0
    %3371 = vmatprep.subr.mxu0 0.0
    %3372 = vmatpush1.msra.mxu0 0.0
    %3373 = vmatprep.subr.mxu0 0.0
    %3374 = vmatpush1.msra.mxu0 0.0
    %3375 = vmatprep.subr.mxu0 0.0
    %3376 = vmatpush1.msra.mxu0 0.0
    %3377 = vmatprep.subr.mxu0 0.0
    %3378 = vmatpush1.msra.mxu0 0.0
    %3379 = vmatprep.subr.mxu0 0.0
    %3380 = vmatpush1.msra.mxu0 0.0
    %3381 = vmatprep.subr.mxu0 0.0
    %3382 = vmatpush1.msra.mxu0 0.0
    %3383 = vmatprep.subr.mxu0 0.0
    %3384 = vmatpush1.msra.mxu0 0.0
    %3385 = vmatprep.subr.mxu0 0.0
    %3386 = vmatpush1.msra.mxu0 0.0
    %3387 = vmatprep.mubr.f32.mxu0 0.0
    %3388 = vmatmul.mubr.f32.gmra.mrb[0].mxu0 %v3313
    %v3389 = vpop.f32.mrb[0].mxu0
    %v3390 = vadd.f32 0.0, %v3389
    %v3391 = vpop.f32.mrb[0].mxu0
    %3392 = vmatprep.mubr.f32.mxu0 0.0
    %3393 = vmatmul.mubr.f32.gmra.mrb[0].mxu0 %v3316
    %v3394 = vpop.f32.mrb[0].mxu0
    %v3395 = vadd.f32 0.0, %v3394
    %v3396 = vpop.f32.mrb[0].mxu0
    %3397 = vmatprep.mubr.f32.mxu0 0.0
    %3398 = vmatmul.mubr.f32.gmra.mrb[0].mxu0 %v3319
    %v3399 = vpop.f32.mrb[0].mxu0
    %v3400 = vadd.f32 0.0, %v3399
    %v3401 = vpop.f32.mrb[0].mxu0
    %3402 = vdwg.mxu0
    %3406 = vrot.lane.b32.xlu0 %v2918, 8
    %v3407 = vpop.permute.xlu0 %3406
    %3408 = vrot.lane.b32.xlu0 %v2923, 8
    %v3409 = vpop.permute.xlu0 %3408
    %3410 = vrot.lane.b32.xlu0 %v2928, 8
    %v3411 = vpop.permute.xlu0 %3410
    %3418 = vrot.lane.b32.xlu0 %v3154, 16
    %v3419 = vpop.permute.xlu0 %3418
    %3420 = vrot.lane.b32.xlu0 %v3159, 16
    %v3421 = vpop.permute.xlu0 %3420
    %3422 = vrot.lane.b32.xlu0 %v3164, 16
    %v3423 = vpop.permute.xlu0 %3422
    %3430 = vrot.lane.b32.xlu0 %v3390, 24
    %v3431 = vpop.permute.xlu0 %3430
    %3432 = vrot.lane.b32.xlu0 %v3395, 24
    %v3433 = vpop.permute.xlu0 %3432
    %3434 = vrot.lane.b32.xlu0 %v3400, 24
    %v3435 = vpop.permute.xlu0 %3434
    %v3439 = vsel %vm732, %v2680, %v3407
    %v3440 = vsel %vm732, %v2685, %v3409
    %v3441 = vsel %vm732, %v2690, %v3411
    %v3442 = vsel %vm1707, %v3439, %v3419
    %v3443 = vsel %vm1707, %v3440, %v3421
    %v3444 = vsel %vm1707, %v3441, %v3423
    %v3445 = vsel %vm1711, %v3442, %v3431
    %v3446 = vsel %vm1711, %v3443, %v3433
    %v3447 = vsel %vm1711, %v3444, %v3435
    %s3448 = scalar_lea.vmem %s13, 32
    %v3449 = vld [vmem:[%s3448] sm:$0xff]
    %v3450 = vld [vmem:[%s3448 + $0x8] sm:$0xff]
    %v3451 = vld [vmem:[%s3448 + $0x10] sm:$0xff]
    %v3452 = vld [vmem:[%s3448 + $0x18] sm:$0xff]
    %v3454 = vsel %vm387, %v3445, 0
    %v3457 = vsel %vm387, %v3446, 0
    %v3460 = vsel %vm387, %v3447, 0
    %3462 = vmatprep.subr.mxu0 0.0
    %3463 = vmatpush1.msra.mxu0 %v3449
    %3464 = vmatprep.subr.mxu0 0.0
    %3465 = vmatpush1.msra.mxu0 %v3450
    %3466 = vmatprep.subr.mxu0 0.0
    %3467 = vmatpush1.msra.mxu0 %v3451
    %3468 = vmatprep.subr.mxu0 0.0
    %3469 = vmatpush1.msra.mxu0 %v3452
    %3470 = vmatprep.subr.mxu0 0.0
    %3471 = vmatpush1.msra.mxu0 0.0
    %3472 = vmatprep.subr.mxu0 0.0
    %3473 = vmatpush1.msra.mxu0 0.0
    %3474 = vmatprep.subr.mxu0 0.0
    %3475 = vmatpush1.msra.mxu0 0.0
    %3476 = vmatprep.subr.mxu0 0.0
    %3477 = vmatpush1.msra.mxu0 0.0
    %3478 = vmatprep.subr.mxu0 0.0
    %3479 = vmatpush1.msra.mxu0 0.0
    %3480 = vmatprep.subr.mxu0 0.0
    %3481 = vmatpush1.msra.mxu0 0.0
    %3482 = vmatprep.subr.mxu0 0.0
    %3483 = vmatpush1.msra.mxu0 0.0
    %3484 = vmatprep.subr.mxu0 0.0
    %3485 = vmatpush1.msra.mxu0 0.0
    %3486 = vmatprep.subr.mxu0 0.0
    %3487 = vmatpush1.msra.mxu0 0.0
    %3488 = vmatprep.subr.mxu0 0.0
    %3489 = vmatpush1.msra.mxu0 0.0
    %3490 = vmatprep.subr.mxu0 0.0
    %3491 = vmatpush1.msra.mxu0 0.0
    %3492 = vmatprep.subr.mxu0 0.0
    %3493 = vmatpush1.msra.mxu0 0.0
    %3494 = vmatprep.subr.mxu0 0.0
    %3495 = vmatpush1.msra.mxu0 0.0
    %3496 = vmatprep.subr.mxu0 0.0
    %3497 = vmatpush1.msra.mxu0 0.0
    %3498 = vmatprep.subr.mxu0 0.0
    %3499 = vmatpush1.msra.mxu0 0.0
    %3500 = vmatprep.subr.mxu0 0.0
    %3501 = vmatpush1.msra.mxu0 0.0
    %3502 = vmatprep.subr.mxu0 0.0
    %3503 = vmatpush1.msra.mxu0 0.0
    %3504 = vmatprep.subr.mxu0 0.0
    %3505 = vmatpush1.msra.mxu0 0.0
    %3506 = vmatprep.subr.mxu0 0.0
    %3507 = vmatpush1.msra.mxu0 0.0
    %3508 = vmatprep.subr.mxu0 0.0
    %3509 = vmatpush1.msra.mxu0 0.0
    %3510 = vmatprep.subr.mxu0 0.0
    %3511 = vmatpush1.msra.mxu0 0.0
    %3512 = vmatprep.subr.mxu0 0.0
    %3513 = vmatpush1.msra.mxu0 0.0
    %3514 = vmatprep.subr.mxu0 0.0
    %3515 = vmatpush1.msra.mxu0 0.0
    %3516 = vmatprep.subr.mxu0 0.0
    %3517 = vmatpush1.msra.mxu0 0.0
    %3518 = vmatprep.subr.mxu0 0.0
    %3519 = vmatpush1.msra.mxu0 0.0
    %3520 = vmatprep.subr.mxu0 0.0
    %3521 = vmatpush1.msra.mxu0 0.0
    %3522 = vmatprep.subr.mxu0 0.0
    %3523 = vmatpush1.msra.mxu0 0.0
    %3524 = vmatprep.subr.mxu0 0.0
    %3525 = vmatpush1.msra.mxu0 0.0
    %3526 = vmatprep.mubr.f32.mxu0 0.0
    %3527 = vmatmul.mubr.f32.gmra.mrb[0].mxu0 %v3454
    %v3528 = vpop.f32.mrb[0].mxu0
    %v3529 = vadd.f32 0.0, %v3528
    %v3530 = vpop.f32.mrb[0].mxu0
    %3531 = vmatprep.mubr.f32.mxu0 0.0
    %3532 = vmatmul.mubr.f32.gmra.mrb[0].mxu0 %v3457
    %v3533 = vpop.f32.mrb[0].mxu0
    %v3534 = vadd.f32 0.0, %v3533
    %v3535 = vpop.f32.mrb[0].mxu0
    %3536 = vmatprep.mubr.f32.mxu0 0.0
    %3537 = vmatmul.mubr.f32.gmra.mrb[0].mxu0 %v3460
    %v3538 = vpop.f32.mrb[0].mxu0
    %v3539 = vadd.f32 0.0, %v3538
    %v3540 = vpop.f32.mrb[0].mxu0
    %3541 = vdwg.mxu0
    %v3542 = vadd.f32 %v2115, %v3529
    %v3543 = vadd.f32 %v2116, %v3534
    %v3544 = vadd.f32 %v2117, %v3539
    %s3545 = scalar_lea.vmem %s14, 1
    %v3546 = vld [vmem:[%s3545] sm:$0x1]
    %v3548 = vlaneseq
    %v3549 = vshrl.u32 %v3548, 7
    %v3550 = vsub.s32 0, %v3549
    %v3551 = vrot.slane %v3546, %v3550
    %v3553 = vadd.f32 %v3542, %v3551
    %v3554 = vadd.f32 %v3543, %v3551
    %v3555 = vadd.f32 %v3544, %v3551
    %s3556 = scalar_lea.vmem %s15, 1
    %v3557 = vld [vmem:[%s3556] sm:$0x1]
    %s3558 = scalar_lea.vmem %s16, 1
    %v3559 = vld [vmem:[%s3558] sm:$0x1]
    %v3560 = vsel %vm387, %v3553, 0.0
    %3561 = vadd.xlane.f32.xlu0 %v3560
    %v3562 = vpop.xlane.xlu0 %3561
    %v3563 = vsel %vm387, %v3554, 0.0
    %3564 = vadd.xlane.f32.xlu0 %v3563
    %v3565 = vpop.xlane.xlu0 %3564
    %v3566 = vsel %vm394, %v3555, 0.0
    %3567 = vadd.xlane.f32.xlu0 %v3566
    %v3568 = vpop.xlane.xlu0 %3567
    %v3569 = vmul.f32 %v3562, %v398
    %v3570 = vmul.f32 %v3565, %v398
    %v3571 = vmul.f32 %v3568, %v398
    %v3572 = vsub.f32 %v3553, %v3569
    %v3573 = vsub.f32 %v3554, %v3570
    %v3574 = vsub.f32 %v3555, %v3571
    %v3575 = vmul.f32 %v3572, %v3572
    %v3576 = vmul.f32 %v3573, %v3573
    %v3577 = vmul.f32 %v3574, %v3574
    %v3578 = vsel %vm387, %v3575, 0.0
    %3579 = vadd.xlane.f32.xlu0 %v3578
    %v3580 = vpop.xlane.xlu0 %3579
    %v3581 = vsel %vm387, %v3576, 0.0
    %3582 = vadd.xlane.f32.xlu0 %v3581
    %v3583 = vpop.xlane.xlu0 %3582
    %v3584 = vsel %vm394, %v3577, 0.0
    %3585 = vadd.xlane.f32.xlu0 %v3584
    %v3586 = vpop.xlane.xlu0 %3585
    %v3587 = vmul.f32 %v3580, %v398
    %v3588 = vmul.f32 %v3583, %v398
    %v3589 = vmul.f32 %v3586, %v398
    %v3590 = vadd.f32 %v3587, 1e-05
    %v3591 = vadd.f32 %v3588, 1e-05
    %v3592 = vadd.f32 %v3589, 1e-05
    %v3593 = vrsqrt.pop %v3590
    %v3594 = vrsqrt.pop %v3591
    %v3595 = vrsqrt.pop %v3592
    %v3596 = vmul.f32 %v3572, %v3593
    %v3597 = vmul.f32 %v3573, %v3594
    %v3598 = vmul.f32 %v3574, %v3595
    %v3600 = vlaneseq
    %v3601 = vshrl.u32 %v3600, 7
    %v3602 = vsub.s32 0, %v3601
    %v3603 = vrot.slane %v3557, %v3602
    %v3605 = vmul.f32 %v3596, %v3603
    %v3606 = vmul.f32 %v3597, %v3603
    %v3607 = vmul.f32 %v3598, %v3603
    %v3609 = vlaneseq
    %v3610 = vshrl.u32 %v3609, 7
    %v3611 = vsub.s32 0, %v3610
    %v3612 = vrot.slane %v3559, %v3611
    %v3614 = vadd.f32 %v3605, %v3612
    %v3615 = vadd.f32 %v3606, %v3612
    %v3616 = vadd.f32 %v3607, %v3612
    %s3617 = scalar_lea.vmem [#allocation10], 32
    %v3618 = vld [vmem:[%s3617] sm:$0xff]
    %v3619 = vld [vmem:[%s3617 + $0x8] sm:$0xff]
    %v3620 = vld [vmem:[%s3617 + $0x10] sm:$0xff]
    %v3621 = vld [vmem:[%s3617 + $0x18] sm:$0xff]
    %s3622 = scalar_lea.vmem %s18, 1
    %v3623 = vld [vmem:[%s3622] sm:$0x1]
    %v3625 = vlaneseq
    %v3626 = vshrl.u32 %v3625, 7
    %v3627 = vsub.s32 0, %v3626
    %v3628 = vrot.slane %v3623, %v3627
    %v3631 = vsel %vm387, %v3614, 0
    %v3634 = vsel %vm387, %v3615, 0
    %v3637 = vsel %vm387, %v3616, 0
    %3639 = vmatprep.subr.mxu0 0.0
    %3640 = vmatpush1.msra.mxu0 %v3618
    %3641 = vmatprep.subr.mxu0 0.0
    %3642 = vmatpush1.msra.mxu0 %v3619
    %3643 = vmatprep.subr.mxu0 0.0
    %3644 = vmatpush1.msra.mxu0 %v3620
    %3645 = vmatprep.subr.mxu0 0.0
    %3646 = vmatpush1.msra.mxu0 %v3621
    %3647 = vmatprep.subr.mxu0 0.0
    %3648 = vmatpush1.msra.mxu0 0.0
    %3649 = vmatprep.subr.mxu0 0.0
    %3650 = vmatpush1.msra.mxu0 0.0
    %3651 = vmatprep.subr.mxu0 0.0
    %3652 = vmatpush1.msra.mxu0 0.0
    %3653 = vmatprep.subr.mxu0 0.0
    %3654 = vmatpush1.msra.mxu0 0.0
    %3655 = vmatprep.subr.mxu0 0.0
    %3656 = vmatpush1.msra.mxu0 0.0
    %3657 = vmatprep.subr.mxu0 0.0
    %3658 = vmatpush1.msra.mxu0 0.0
    %3659 = vmatprep.subr.mxu0 0.0
    %3660 = vmatpush1.msra.mxu0 0.0
    %3661 = vmatprep.subr.mxu0 0.0
    %3662 = vmatpush1.msra.mxu0 0.0
    %3663 = vmatprep.subr.mxu0 0.0
    %3664 = vmatpush1.msra.mxu0 0.0
    %3665 = vmatprep.subr.mxu0 0.0
    %3666 = vmatpush1.msra.mxu0 0.0
    %3667 = vmatprep.subr.mxu0 0.0
    %3668 = vmatpush1.msra.mxu0 0.0
    %3669 = vmatprep.subr.mxu0 0.0
    %3670 = vmatpush1.msra.mxu0 0.0
    %3671 = vmatprep.subr.mxu0 0.0
    %3672 = vmatpush1.msra.mxu0 0.0
    %3673 = vmatprep.subr.mxu0 0.0
    %3674 = vmatpush1.msra.mxu0 0.0
    %3675 = vmatprep.subr.mxu0 0.0
    %3676 = vmatpush1.msra.mxu0 0.0
    %3677 = vmatprep.subr.mxu0 0.0
    %3678 = vmatpush1.msra.mxu0 0.0
    %3679 = vmatprep.subr.mxu0 0.0
    %3680 = vmatpush1.msra.mxu0 0.0
    %3681 = vmatprep.subr.mxu0 0.0
    %3682 = vmatpush1.msra.mxu0 0.0
    %3683 = vmatprep.subr.mxu0 0.0
    %3684 = vmatpush1.msra.mxu0 0.0
    %3685 = vmatprep.subr.mxu0 0.0
    %3686 = vmatpush1.msra.mxu0 0.0
    %3687 = vmatprep.subr.mxu0 0.0
    %3688 = vmatpush1.msra.mxu0 0.0
    %3689 = vmatprep.subr.mxu0 0.0
    %3690 = vmatpush1.msra.mxu0 0.0
    %3691 = vmatprep.subr.mxu0 0.0
    %3692 = vmatpush1.msra.mxu0 0.0
    %3693 = vmatprep.subr.mxu0 0.0
    %3694 = vmatpush1.msra.mxu0 0.0
    %3695 = vmatprep.subr.mxu0 0.0
    %3696 = vmatpush1.msra.mxu0 0.0
    %3697 = vmatprep.subr.mxu0 0.0
    %3698 = vmatpush1.msra.mxu0 0.0
    %3699 = vmatprep.subr.mxu0 0.0
    %3700 = vmatpush1.msra.mxu0 0.0
    %3701 = vmatprep.subr.mxu0 0.0
    %3702 = vmatpush1.msra.mxu0 0.0
    %3703 = vmatprep.mubr.f32.mxu0 0.0
    %3704 = vmatmul.mubr.f32.gmra.mrb[0].mxu0 %v3631
    %v3705 = vpop.f32.mrb[0].mxu0
    %v3706 = vadd.f32 %v3628, %v3705
    %v3707 = vpop.f32.mrb[0].mxu0
    %3708 = vmatprep.mubr.f32.mxu0 0.0
    %3709 = vmatmul.mubr.f32.gmra.mrb[0].mxu0 %v3634
    %v3710 = vpop.f32.mrb[0].mxu0
    %v3711 = vadd.f32 %v3628, %v3710
    %v3712 = vpop.f32.mrb[0].mxu0
    %3713 = vmatprep.mubr.f32.mxu0 0.0
    %3714 = vmatmul.mubr.f32.gmra.mrb[0].mxu0 %v3637
    %v3715 = vpop.f32.mrb[0].mxu0
    %v3716 = vadd.f32 %v3628, %v3715
    %v3717 = vpop.f32.mrb[0].mxu0
    %3718 = vdwg.mxu0
    %v3719 = vmul.f32 %v3706, %v3706
    %v3720 = vmul.f32 %v3711, %v3711
    %v3721 = vmul.f32 %v3716, %v3716
    %v3722 = vmul.f32 %v3706, %v3719
    %v3723 = vmul.f32 %v3711, %v3720
    %v3724 = vmul.f32 %v3716, %v3721
    %v3725 = vmul.f32 %v3722, 0.044715
    %v3726 = vmul.f32 %v3723, 0.044715
    %v3727 = vmul.f32 %v3724, 0.044715
    %v3728 = vadd.f32 %v3706, %v3725
    %v3729 = vadd.f32 %v3711, %v3726
    %v3730 = vadd.f32 %v3716, %v3727
    %v3731 = vmul.f32 %v3728, 0.7978846
    %v3732 = vmul.f32 %v3729, 0.7978846
    %v3733 = vmul.f32 %v3730, 0.7978846
    %v3734 = vtanh.pop %v3731
    %v3735 = vtanh.pop %v3732
    %v3736 = vtanh.pop %v3733
    %v3737 = vadd.f32 %v3734, 1.0
    %v3738 = vadd.f32 %v3735, 1.0
    %v3739 = vadd.f32 %v3736, 1.0
    %v3740 = vmul.f32 %v3737, 0.5
    %v3741 = vmul.f32 %v3738, 0.5
    %v3742 = vmul.f32 %v3739, 0.5
    %v3743 = vmul.f32 %v3706, %v3740
    %v3744 = vmul.f32 %v3711, %v3741
    %v3745 = vmul.f32 %v3716, %v3742
    %s3746 = scalar_lea.vmem %s19, 64
    %v3747 = vld [vmem:[%s3746] sm:$0xff]
    %v3748 = vld [vmem:[%s3746 + $0x8] sm:$0xff]
    %v3749 = vld [vmem:[%s3746 + $0x10] sm:$0xff]
    %v3750 = vld [vmem:[%s3746 + $0x18] sm:$0xff]
    %v3751 = vld [vmem:[%s3746 + $0x20] sm:$0xff]
    %v3752 = vld [vmem:[%s3746 + $0x28] sm:$0xff]
    %v3753 = vld [vmem:[%s3746 + $0x30] sm:$0xff]
    %v3754 = vld [vmem:[%s3746 + $0x38] sm:$0xff]
    %v3756 = vsel %vm2015, %v3743, 0
    %v3759 = vsel %vm2015, %v3744, 0
    %v3762 = vsel %vm2015, %v3745, 0
    %3764 = vmatprep.subr.mxu0 0.0
    %3765 = vmatpush1.msra.mxu0 %v3747
    %3766 = vmatprep.subr.mxu0 0.0
    %3767 = vmatpush1.msra.mxu0 %v3748
    %3768 = vmatprep.subr.mxu0 0.0
    %3769 = vmatpush1.msra.mxu0 %v3749
    %3770 = vmatprep.subr.mxu0 0.0
    %3771 = vmatpush1.msra.mxu0 %v3750
    %3772 = vmatprep.subr.mxu0 0.0
    %3773 = vmatpush1.msra.mxu0 %v3751
    %3774 = vmatprep.subr.mxu0 0.0
    %3775 = vmatpush1.msra.mxu0 %v3752
    %3776 = vmatprep.subr.mxu0 0.0
    %3777 = vmatpush1.msra.mxu0 %v3753
    %3778 = vmatprep.subr.mxu0 0.0
    %3779 = vmatpush1.msra.mxu0 %v3754
    %3780 = vmatprep.subr.mxu0 0.0
    %3781 = vmatpush1.msra.mxu0 0.0
    %3782 = vmatprep.subr.mxu0 0.0
    %3783 = vmatpush1.msra.mxu0 0.0
    %3784 = vmatprep.subr.mxu0 0.0
    %3785 = vmatpush1.msra.mxu0 0.0
    %3786 = vmatprep.subr.mxu0 0.0
    %3787 = vmatpush1.msra.mxu0 0.0
    %3788 = vmatprep.subr.mxu0 0.0
    %3789 = vmatpush1.msra.mxu0 0.0
    %3790 = vmatprep.subr.mxu0 0.0
    %3791 = vmatpush1.msra.mxu0 0.0
    %3792 = vmatprep.subr.mxu0 0.0
    %3793 = vmatpush1.msra.mxu0 0.0
    %3794 = vmatprep.subr.mxu0 0.0
    %3795 = vmatpush1.msra.mxu0 0.0
    %3796 = vmatprep.subr.mxu0 0.0
    %3797 = vmatpush1.msra.mxu0 0.0
    %3798 = vmatprep.subr.mxu0 0.0
    %3799 = vmatpush1.msra.mxu0 0.0
    %3800 = vmatprep.subr.mxu0 0.0
    %3801 = vmatpush1.msra.mxu0 0.0
    %3802 = vmatprep.subr.mxu0 0.0
    %3803 = vmatpush1.msra.mxu0 0.0
    %3804 = vmatprep.subr.mxu0 0.0
    %3805 = vmatpush1.msra.mxu0 0.0
    %3806 = vmatprep.subr.mxu0 0.0
    %3807 = vmatpush1.msra.mxu0 0.0
    %3808 = vmatprep.subr.mxu0 0.0
    %3809 = vmatpush1.msra.mxu0 0.0
    %3810 = vmatprep.subr.mxu0 0.0
    %3811 = vmatpush1.msra.mxu0 0.0
    %3812 = vmatprep.subr.mxu0 0.0
    %3813 = vmatpush1.msra.mxu0 0.0
    %3814 = vmatprep.subr.mxu0 0.0
    %3815 = vmatpush1.msra.mxu0 0.0
    %3816 = vmatprep.subr.mxu0 0.0
    %3817 = vmatpush1.msra.mxu0 0.0
    %3818 = vmatprep.subr.mxu0 0.0
    %3819 = vmatpush1.msra.mxu0 0.0
    %3820 = vmatprep.subr.mxu0 0.0
    %3821 = vmatpush1.msra.mxu0 0.0
    %3822 = vmatprep.subr.mxu0 0.0
    %3823 = vmatpush1.msra.mxu0 0.0
    %3824 = vmatprep.subr.mxu0 0.0
    %3825 = vmatpush1.msra.mxu0 0.0
    %3826 = vmatprep.subr.mxu0 0.0
    %3827 = vmatpush1.msra.mxu0 0.0
    %3828 = vmatprep.mubr.f32.mxu0 0.0
    %3829 = vmatmul.mubr.f32.gmra.mrb[0].mxu0 %v3756
    %v3830 = vpop.f32.mrb[0].mxu0
    %v3831 = vadd.f32 0.0, %v3830
    %v3832 = vpop.f32.mrb[0].mxu0
    %3833 = vmatprep.mubr.f32.mxu0 0.0
    %3834 = vmatmul.mubr.f32.gmra.mrb[0].mxu0 %v3759
    %v3835 = vpop.f32.mrb[0].mxu0
    %v3836 = vadd.f32 0.0, %v3835
    %v3837 = vpop.f32.mrb[0].mxu0
    %3838 = vmatprep.mubr.f32.mxu0 0.0
    %3839 = vmatmul.mubr.f32.gmra.mrb[0].mxu0 %v3762
    %v3840 = vpop.f32.mrb[0].mxu0
    %v3841 = vpop.f32.mrb[0].mxu0
    %3842 = vdwg.mxu0
    %v3843 = vadd.f32 %v3553, %v3831
    %v3844 = vadd.f32 %v3554, %v3836
    %s3845 = scalar_lea.vmem %s20, 1
    %v3846 = vld [vmem:[%s3845] sm:$0x1]
    %v3848 = vlaneseq
    %v3849 = vshrl.u32 %v3848, 7
    %v3850 = vsub.s32 0, %v3849
    %v3851 = vrot.slane %v3846, %v3850
    %v3853 = vadd.f32 %v3843, %v3851
    %v3854 = vadd.f32 %v3844, %v3851
    %v3855 = vsel %vm209, %v3853, %v3854
    %v3856 = vld [vmem:[%s21] sm:$0x1]
    %v3857 = vld [vmem:[%s22] sm:$0x1]
    %v3858 = vsel %vm394, %v3855, 0.0
    %3859 = vadd.xlane.f32.xlu0 %v3858
    %v3860 = vpop.xlane.xlu0 %3859
    %v3861 = vmul.f32 %v3860, %v398
    %v3862 = vsub.f32 %v3855, %v3861
    %v3863 = vmul.f32 %v3862, %v3862
    %v3864 = vsel %vm394, %v3863, 0.0
    %3865 = vadd.xlane.f32.xlu0 %v3864
    %v3866 = vpop.xlane.xlu0 %3865
    %v3867 = vmul.f32 %v3866, %v398
    %v3868 = vadd.f32 %v3867, 1e-05
    %v3869 = vrsqrt.pop %v3868
    %v3870 = vmul.f32 %v3862, %v3869
    %v3872 = vlaneseq
    %v3873 = vshrl.u32 %v3872, 7
    %v3874 = vsub.s32 0, %v3873
    %v3875 = vrot.slane %v3856, %v3874
    %v3877 = vmul.f32 %v3870, %v3875
    %v3879 = vlaneseq
    %v3880 = vshrl.u32 %v3879, 7
    %v3881 = vsub.s32 0, %v3880
    %v3882 = vrot.slane %v3857, %v3881
    %v3884 = vadd.f32 %v3877, %v3882
    %v3885 = vld [vmem:[%s23] sm:$0xff]
    %v3886 = vld [vmem:[%s23 + $0x8] sm:$0xff]
    %v3887 = vld [vmem:[%s23 + $0x10] sm:$0xff]
    %v3888 = vld [vmem:[%s23 + $0x18] sm:$0xff]
    %v3889 = vld [vmem:[%s24] sm:$0x1]
    %v3891 = vlaneseq
    %v3892 = vshrl.u32 %v3891, 7
    %v3893 = vsub.s32 0, %v3892
    %v3894 = vrot.slane %v3889, %v3893
    %v3897 = vsel %vm387, %v3884, 0
    %3899 = vmatprep.subr.mxu0 0.0
    %3900 = vmatpush1.msra.mxu0 %v3885
    %3901 = vmatprep.subr.mxu0 0.0
    %3902 = vmatpush1.msra.mxu0 %v3886
    %3903 = vmatprep.subr.mxu0 0.0
    %3904 = vmatpush1.msra.mxu0 %v3887
    %3905 = vmatprep.subr.mxu0 0.0
    %3906 = vmatpush1.msra.mxu0 %v3888
    %3907 = vmatprep.subr.mxu0 0.0
    %3908 = vmatpush1.msra.mxu0 0.0
    %3909 = vmatprep.subr.mxu0 0.0
    %3910 = vmatpush1.msra.mxu0 0.0
    %3911 = vmatprep.subr.mxu0 0.0
    %3912 = vmatpush1.msra.mxu0 0.0
    %3913 = vmatprep.subr.mxu0 0.0
    %3914 = vmatpush1.msra.mxu0 0.0
    %3915 = vmatprep.subr.mxu0 0.0
    %3916 = vmatpush1.msra.mxu0 0.0
    %3917 = vmatprep.subr.mxu0 0.0
    %3918 = vmatpush1.msra.mxu0 0.0
    %3919 = vmatprep.subr.mxu0 0.0
    %3920 = vmatpush1.msra.mxu0 0.0
    %3921 = vmatprep.subr.mxu0 0.0
    %3922 = vmatpush1.msra.mxu0 0.0
    %3923 = vmatprep.subr.mxu0 0.0
    %3924 = vmatpush1.msra.mxu0 0.0
    %3925 = vmatprep.subr.mxu0 0.0
    %3926 = vmatpush1.msra.mxu0 0.0
    %3927 = vmatprep.subr.mxu0 0.0
    %3928 = vmatpush1.msra.mxu0 0.0
    %3929 = vmatprep.subr.mxu0 0.0
    %3930 = vmatpush1.msra.mxu0 0.0
    %3931 = vmatprep.subr.mxu0 0.0
    %3932 = vmatpush1.msra.mxu0 0.0
    %3933 = vmatprep.subr.mxu0 0.0
    %3934 = vmatpush1.msra.mxu0 0.0
    %3935 = vmatprep.subr.mxu0 0.0
    %3936 = vmatpush1.msra.mxu0 0.0
    %3937 = vmatprep.subr.mxu0 0.0
    %3938 = vmatpush1.msra.mxu0 0.0
    %3939 = vmatprep.subr.mxu0 0.0
    %3940 = vmatpush1.msra.mxu0 0.0
    %3941 = vmatprep.subr.mxu0 0.0
    %3942 = vmatpush1.msra.mxu0 0.0
    %3943 = vmatprep.subr.mxu0 0.0
    %3944 = vmatpush1.msra.mxu0 0.0
    %3945 = vmatprep.subr.mxu0 0.0
    %3946 = vmatpush1.msra.mxu0 0.0
    %3947 = vmatprep.subr.mxu0 0.0
    %3948 = vmatpush1.msra.mxu0 0.0
    %3949 = vmatprep.subr.mxu0 0.0
    %3950 = vmatpush1.msra.mxu0 0.0
    %3951 = vmatprep.subr.mxu0 0.0
    %3952 = vmatpush1.msra.mxu0 0.0
    %3953 = vmatprep.subr.mxu0 0.0
    %3954 = vmatpush1.msra.mxu0 0.0
    %3955 = vmatprep.subr.mxu0 0.0
    %3956 = vmatpush1.msra.mxu0 0.0
    %3957 = vmatprep.subr.mxu0 0.0
    %3958 = vmatpush1.msra.mxu0 0.0
    %3959 = vmatprep.subr.mxu0 0.0
    %3960 = vmatpush1.msra.mxu0 0.0
    %3961 = vmatprep.subr.mxu0 0.0
    %3962 = vmatpush1.msra.mxu0 0.0
    %3963 = vmatprep.mubr.f32.mxu0 0.0
    %3964 = vmatmul.mubr.f32.gmra.mrb[0].mxu0 %v3897
    %v3965 = vpop.f32.mrb[0].mxu0
    %v3966 = vadd.f32 %v3894, %v3965
    %v3967 = vpop.f32.mrb[0].mxu0
    %3968 = vdwg.mxu0
    %vm3969 = vcmask 9216
    %3970 = vst.msk [vmem:[#allocation12] sm:$0x3] %vm3969, %v3966
    // Predicated region
    $region122: #{tpu_custom_call.1} parent=1 // pred_check
      _
    $region123: #{tpu_custom_call.1} parent=1 // pred_check_branch
      %3972 = sbr.rel (0) target = $region125
    $region124: #{tpu_custom_call.1} parent=1 // pred_region
      %s3974 = ssub.s32 32, 32
      %3975 = vsyncadd [#allocation4], %s3974
      %s3977 = sshll.u32 [#allocation12], 4
      %s3978 = int_to_ptr.vmem [resolvable:$true] %s3977
      %3980 = dma.vmem_to_hbm [thread:$0]  %s3978, 32, %s25, [#allocation4]
    $region125: #{tpu_custom_call.1} parent=1 // pred_fallthru
      _
    // Predicated region
    $region126: #{tpu_custom_call.1} parent=1 // pred_check
      _
    $region127: #{tpu_custom_call.1} parent=1 // pred_check_branch
      %3982 = sbr.rel (0) target = $region129
    $region128: #{tpu_custom_call.1} parent=1 // pred_region
      %3983 = dma.done [#allocation4], 32
    $region129: #{tpu_custom_call.1} parent=1 // pred_fallthru
      _
    %3984 = vsyncpa [#allocation3], 1
    %3985 = vsyncpa [#allocation8], 1
    %3986 = vsyncpa [#allocation11], 1
    %3987 = vsyncpa [#allocation4], 1
    %3988 = vsyncpa [#allocation5], 1

</llo_original>
